<compile_context>
chip_gen: v7x
topology: tpu7x:2x2x1
jax: 0.10.0
libtpu: 0.0.40
codegen_flags: <defaults>
</compile_context>

<pallas_src>
import functools

import jax
import jax.numpy as jnp
from jax.experimental import pallas as pl
from jax.experimental.pallas import tpu as pltpu


def _round_up(x, m):
    return ((x + m - 1) // m) * m


# ----------------------------------------------------------------------------
# Fused kernel: full ConvLSTM recurrence for ONE batch image.  grid = (B,)
# ----------------------------------------------------------------------------
def _fused_convlstm_kernel(*refs, num_layers, step, cin, ch, cxp, cpad,
                           ksize, wp, pad):
    """Ref layout (positional):
      x_ref      : (1, cin0, Npad)        f32  external input (re-fed each step)
      mask_ref   : (1, Npad)              f32  interior-pixel 0/1 mask
      w_refs[l]  : (4*ch_l, K*K*cpad_l)   bf16 fused [x|h] conv weights
      b_refs[l]  : (4*ch_l, 1)            f32  bias
      hout_ref   : (1, step, ch_L, Npad)  f32  per-step last-layer h
      clast_ref  : (1, ch_L, Npad)        f32  final last-layer c
      tap_refs[l]: (K*K*cpad_l, Npad)     f32  scratch: rolled [x|h] tap slab
      c_refs[l]  : (ch_l, Npad)           f32  scratch: cell state
    """
    L = num_layers
    T = ksize * ksize
    x_ref = refs[0]
    mask_ref = refs[1]
    w_refs = refs[2:2 + L]
    b_refs = refs[2 + L:2 + 2 * L]
    hout_ref = refs[2 + 2 * L]
    clast_ref = refs[3 + 2 * L]
    tap_refs = refs[4 + 2 * L:4 + 3 * L]
    c_refs = refs[4 + 3 * L:4 + 4 * L]

    # Static flat-pixel offsets for the K*K taps (row-major (dy, dx) order,
    # matching the wrapper's weight reshape).
    offsets = [(dy - pad) * wp + (dx - pad)
               for dy in range(ksize) for dx in range(ksize)]

    def sigm(v):
        # sigmoid via a single tanh EUP push: sigmoid(v) = 0.5*tanh(0.5*v)+0.5
        return 0.5 * jnp.tanh(0.5 * v) + 0.5

    # ---- per-batch init: zero state, precompute layer-0 x tap rows once ----
    for l in range(L):
        tap_refs[l][...] = jnp.zeros_like(tap_refs[l])
        c_refs[l][...] = jnp.zeros_like(c_refs[l])
    x0 = x_ref[0]                                     # (cin0, Npad) f32
    for o, s in enumerate(offsets):
        xr = x0 if s == 0 else jnp.roll(x0, -s, axis=1)
        tap_refs[0][o * cpad[0]:o * cpad[0] + cin[0], :] = xr

    m = mask_ref[...]                                 # (1, Npad)

    # ---- full (step x layer) recurrence, statically unrolled ---------------
    for t in range(step):
        for l in range(L):
            chl, cxl, cpl = ch[l], cxp[l], cpad[l]

            # ONE fused MXU matmul over the concatenated 9-tap [x|h]
            # contraction; bf16 operands, f32 accumulation.
            slab = tap_refs[l][...].astype(jnp.bfloat16)
            gates = jnp.dot(w_refs[l][...], slab,
                            preferred_element_type=jnp.float32)
            gates = gates + b_refs[l][...]            # bias broadcast (lanes)

            c_prev = c_refs[l][...]
            gi = gates[0 * chl:1 * chl]
            gf = gates[1 * chl:2 * chl]
            gg = gates[2 * chl:3 * chl]
            go = gates[3 * chl:4 * chl]
            # TODO(synk): peephole weights Wci/Wcf/Wco are zero-initialized in
            # the reference (init_hidden) so their terms vanish exactly;
            # trained nonzero peepholes would need extra elementwise terms.
            ci = sigm(gi)
            cf = sigm(gf)
            cc = (cf * c_prev + ci * jnp.tanh(gg)) * m   # mask keeps halo zero
            co = sigm(go)
            hh = (co * jnp.tanh(cc)) * m

            c_refs[l][...] = cc

            last_step = (t == step - 1)
            last_layer = (l == L - 1)
            need_self = not last_step       # own h rows only needed at t+1
            need_next = not last_layer      # next layer's x rows needed now
            if need_self or need_next:
                for o, s in enumerate(offsets):
                    hr = hh if s == 0 else jnp.roll(hh, -s, axis=1)
                    if need_self:
                        tap_refs[l][o * cpl + cxl:o * cpl + cxl + chl, :] = hr
                    if need_next:
                        cpn = cpad[l + 1]
                        tap_refs[l + 1][o * cpn:o * cpn + chl, :] = hr

            if last_layer:
                hout_ref[0, t, :, :] = hh
                if last_step:
                    clast_ref[0, :, :] = cc


# ----------------------------------------------------------------------------
# Wrapper: layout plumbing (pad / flatten / fuse weights) + single pallas_call
# ----------------------------------------------------------------------------
def _conv_lstm_forward_impl(x, params, ksize, step):
    """x: (B, H, W, Cin0) NHWC f32.  params: list of (wx, wh, b) per layer with
    wx (K,K,Cin,4Ch) HWIO, wh (K,K,Ch,4Ch), b (1,4Ch).
    Returns (outputs list per step, (h_last, c_last)) in NHWC."""
    B, H, W, cin0 = x.shape
    K = ksize
    p = (K - 1) // 2
    Hp, Wp = H + 2 * p, W + 2 * p
    Nb = Hp * Wp
    Npad = _round_up(Nb, 128)              # lane-dense per-image pixel axis
    T = K * K

    L = len(params)
    cin_list, ch_list, cxp_list, cpad_list = [], [], [], []
    w_list, b_list = [], []
    prev = cin0
    for (wx, wh, bias) in params:
        cin_l, ch_l = wx.shape[2], wh.shape[2]
        assert cin_l == prev
        cxp_l = _round_up(cin_l, 8)                 # h rows sublane-aligned
        cpad_l = cxp_l + _round_up(ch_l, 8)         # per-tap block stride
        wx_t = jnp.transpose(wx, (0, 1, 3, 2)).reshape(T, 4 * ch_l, cin_l)
        wh_t = jnp.transpose(wh, (0, 1, 3, 2)).reshape(T, 4 * ch_l, ch_l)
        w_t = jnp.zeros((T, 4 * ch_l, cpad_l), jnp.float32)
        w_t = w_t.at[:, :, 0:cin_l].set(wx_t.astype(jnp.float32))
        w_t = w_t.at[:, :, cxp_l:cxp_l + ch_l].set(wh_t.astype(jnp.float32))
        w_fused = jnp.transpose(w_t, (1, 0, 2)).reshape(4 * ch_l, T * cpad_l)
        w_list.append(w_fused.astype(jnp.bfloat16))          # bf16 MXU feed
        b_list.append(bias.reshape(4 * ch_l, 1).astype(jnp.float32))
        cin_list.append(cin_l)
        ch_list.append(ch_l)
        cxp_list.append(cxp_l)
        cpad_list.append(cpad_l)
        prev = ch_l
    ch_last = ch_list[-1]

    # Per-image, spatially pre-padded, channel-major slab: (B, Cin0, Npad).
    xpad = jnp.pad(x.astype(jnp.float32), ((0, 0), (p, p), (p, p), (0, 0)))
    x_flat = jnp.transpose(xpad, (0, 3, 1, 2)).reshape(B, cin0, Nb)
    x_flat = jnp.pad(x_flat, ((0, 0), (0, 0), (0, Npad - Nb)))

    mask = jnp.pad(jnp.ones((H, W), jnp.float32), ((p, p), (p, p)))
    mask = jnp.pad(mask.reshape(1, Nb), ((0, 0), (0, Npad - Nb)))

    kernel = functools.partial(
        _fused_convlstm_kernel,
        num_layers=L, step=step, cin=tuple(cin_list), ch=tuple(ch_list),
        cxp=tuple(cxp_list), cpad=tuple(cpad_list), ksize=K, wp=Wp, pad=p)

    in_specs = ([pl.BlockSpec((1, cin0, Npad), lambda bi: (bi, 0, 0)),
                 pl.BlockSpec((1, Npad), lambda bi: (0, 0))]
                + [pl.BlockSpec(w.shape, lambda bi: (0, 0)) for w in w_list]
                + [pl.BlockSpec(bb.shape, lambda bi: (0, 0)) for bb in b_list])
    out_specs = (pl.BlockSpec((1, step, ch_last, Npad),
                              lambda bi: (bi, 0, 0, 0)),
                 pl.BlockSpec((1, ch_last, Npad), lambda bi: (bi, 0, 0)))
    out_shape = (jax.ShapeDtypeStruct((B, step, ch_last, Npad), jnp.float32),
                 jax.ShapeDtypeStruct((B, ch_last, Npad), jnp.float32))
    # NOTE: scratch grows with Hp*Wp and channel count; at production sizes the
    # flat-pixel axis would need tiling (halo'd grid dim) to fit v7x VMEM.
    scratch = ([pltpu.VMEM((T * cpad_list[l], Npad), jnp.float32)
                for l in range(L)]
               + [pltpu.VMEM((ch_list[l], Npad), jnp.float32)
                  for l in range(L)])

    h_seq, c_last_flat = pl.pallas_call(
        kernel,
        grid=(B,),
        in_specs=in_specs,
        out_specs=out_specs,
        out_shape=out_shape,
        scratch_shapes=scratch,
        compiler_params=pltpu.CompilerParams(
            dimension_semantics=("parallel",)),   # batch across TCs (v7x)
    )(x_flat, mask, *w_list, *b_list)

    # Batched unflatten: one reshape/slice/transpose for the whole sequence.
    h_all = h_seq[:, :, :, :Nb].reshape(B, step, ch_last, Hp, Wp)
    h_all = h_all[:, :, :, p:p + H, p:p + W]
    h_all = jnp.transpose(h_all, (1, 0, 3, 4, 2))        # (step, B, H, W, ch)
    c_last = c_last_flat[:, :, :Nb].reshape(B, ch_last, Hp, Wp)
    c_last = jnp.transpose(c_last[:, :, p:p + H, p:p + W], (0, 2, 3, 1))

    outputs = [h_all[s] for s in range(step)]
    return outputs, (outputs[-1], c_last)


conv_lstm_forward = jax.jit(_conv_lstm_forward_impl, static_argnums=(2, 3))


# ----------------------------------------------------------------------------
# Pure-JAX reference (lax.conv, NHWC) for correctness checking
# ----------------------------------------------------------------------------
def _ref_cell(x, h, c, wx, wh, b, ksize):
    p = (ksize - 1) // 2

    def conv(inp, w):
        dn = jax.lax.conv_dimension_numbers(inp.shape, w.shape,
                                            ('NHWC', 'HWIO', 'NHWC'))
        return jax.lax.conv_general_dilated(inp, w, (1, 1),
                                            [(p, p), (p, p)],
                                            dimension_numbers=dn)

    gates = conv(x, wx) + conv(h, wh) + b.reshape(1, 1, 1, -1)
    Ch = c.shape[-1]
    gi, gf, gg, go = (gates[..., k * Ch:(k + 1) * Ch] for k in range(4))
    ci = jax.nn.sigmoid(gi)
    cf = jax.nn.sigmoid(gf)
    cc = cf * c + ci * jnp.tanh(gg)
    co = jax.nn.sigmoid(go)
    return co * jnp.tanh(cc), cc


def _ref_forward(x, params, ksize, step):
    internal_state = []
    outputs = []
    new_c = None
    for s in range(step):
        xt = x
        for i, (wx, wh, b) in enumerate(params):
            if s == 0:
                B, H, W, _ = xt.shape
                Ch = wh.shape[-2]
                zeros = jnp.zeros((B, H, W, Ch), x.dtype)
                internal_state.append((zeros, zeros))
            h, c = internal_state[i]
            xt, new_c = _ref_cell(xt, h, c, wx, wh, b, ksize)
            internal_state[i] = (xt, new_c)
        outputs.append(xt)
    return outputs, (xt, new_c)


# ----------------------------------------------------------------------------
# Parameter init (deterministic, synthetic)
# ----------------------------------------------------------------------------
def init_params(key, input_channels, hidden_channels, ksize):
    in_chs = [input_channels] + hidden_channels
    params = []
    for i, ch in enumerate(hidden_channels):
        cin = in_chs[i]
        key, k1, k2, k3 = jax.random.split(key, 4)
        wx = 0.1 * jax.random.normal(k1, (ksize, ksize, cin, 4 * ch), jnp.float32)
        wh = 0.1 * jax.random.normal(k2, (ksize, ksize, ch, 4 * ch), jnp.float32)
        b = 0.1 * jax.random.normal(k3, (1, 4 * ch), jnp.float32)
        params.append((wx, wh, b))
    return params


if __name__ == "__main__":
    # ConvLSTM(input_channels=4, hidden_channels=[8, 8], kernel_size=3, step=2)
    input_channels = 4
    hidden_channels = [8, 8]
    kernel_size = 3
    step = 2
    B, H, W = 2, 16, 16

    key = jax.random.PRNGKey(0)
    kx, kp = jax.random.split(key)
    x = jax.random.normal(kx, (B, H, W, input_channels), jnp.float32)  # NHWC
    params = init_params(kp, input_channels, hidden_channels, kernel_size)

    outputs, (h_last, c_last) = conv_lstm_forward(x, params, kernel_size, step)
    jax.block_until_ready(h_last)
    jax.block_until_ready(c_last)

    # Correctness check against the pure-JAX f32 conv reference.
    # Tolerance loosened to 3e-2 because the kernel feeds the MXU bf16
    # operands (f32 accumulation); the f32 path agreed to 1e-4.
    ref_outputs, (ref_h, ref_c) = _ref_forward(x, params, kernel_size, step)
    TOL = 3e-2
    for o, ro in zip(outputs, ref_outputs):
        assert jnp.allclose(o, ro, atol=TOL, rtol=TOL), "output mismatch"
    assert jnp.allclose(h_last, ref_h, atol=TOL, rtol=TOL), "h mismatch"
    assert jnp.allclose(c_last, ref_c, atol=TOL, rtol=TOL), "c mismatch"

    print("KERNEL_OK")
</pallas_src>

<mosaic_0001>
module attributes {stable_mosaic.version = 11 : i64} {
  func.func @_fused_convlstm_kernel(%arg0: i32, %arg1: memref<1x4x384xf32, #tpu.memory_space<vmem>>, %arg2: memref<1x384xf32, #tpu.memory_space<vmem>>, %arg3: memref<32x144xbf16, #tpu.memory_space<vmem>>, %arg4: memref<32x144xbf16, #tpu.memory_space<vmem>>, %arg5: memref<32x1xf32, #tpu.memory_space<vmem>>, %arg6: memref<32x1xf32, #tpu.memory_space<vmem>>, %arg7: memref<1x2x8x384xf32, #tpu.memory_space<vmem>>, %arg8: memref<1x8x384xf32, #tpu.memory_space<vmem>>, %arg9: memref<144x384xf32, #tpu.memory_space<vmem>>, %arg10: memref<144x384xf32, #tpu.memory_space<vmem>>, %arg11: memref<8x384xf32, #tpu.memory_space<vmem>>, %arg12: memref<8x384xf32, #tpu.memory_space<vmem>>) attributes {dimension_semantics = [#tpu.dimension_semantics<parallel>], iteration_bounds = array<i64: 2>, scalar_prefetch = 0 : i64, scratch_operands = 4 : i64, tpu.core_type = #tpu.core_type<tc>, window_params = [{transform_indices = @transform_0, window_bounds = array<i64: 1, 4, 384>}, {pipeline_mode = #tpu.pipeline_mode<synchronous>, transform_indices = @transform_1, window_bounds = array<i64: 1, 384>}, {pipeline_mode = #tpu.pipeline_mode<synchronous>, transform_indices = @transform_2, window_bounds = array<i64: 32, 144>}, {pipeline_mode = #tpu.pipeline_mode<synchronous>, transform_indices = @transform_3, window_bounds = array<i64: 32, 144>}, {pipeline_mode = #tpu.pipeline_mode<synchronous>, transform_indices = @transform_4, window_bounds = array<i64: 32, 1>}, {pipeline_mode = #tpu.pipeline_mode<synchronous>, transform_indices = @transform_5, window_bounds = array<i64: 32, 1>}, {transform_indices = @transform_6, window_bounds = array<i64: 1, 2, 8, 384>}, {transform_indices = @transform_7, window_bounds = array<i64: 1, 8, 384>}]} {
    %cst = arith.constant 0.000000e+00 : f32
    %0 = vector.broadcast %cst : f32 to vector<144x384xf32>
    %c0 = arith.constant 0 : index
    %c0_0 = arith.constant 0 : index
    %1 = vector.load %arg9[%c0, %c0_0] : memref<144x384xf32, #tpu.memory_space<vmem>>, vector<144x384xf32>
    tpu.vector_store %arg9[%c0, %c0_0], %0 {strides = array<i32>} : memref<144x384xf32, #tpu.memory_space<vmem>>, vector<144x384xf32>,
    %cst_1 = arith.constant 0.000000e+00 : f32
    %2 = vector.broadcast %cst_1 : f32 to vector<8x384xf32>
    %c0_2 = arith.constant 0 : index
    %c0_3 = arith.constant 0 : index
    %3 = vector.load %arg11[%c0_2, %c0_3] : memref<8x384xf32, #tpu.memory_space<vmem>>, vector<8x384xf32>
    tpu.vector_store %arg11[%c0_2, %c0_3], %2 {strides = array<i32>} : memref<8x384xf32, #tpu.memory_space<vmem>>, vector<8x384xf32>,
    %cst_4 = arith.constant 0.000000e+00 : f32
    %4 = vector.broadcast %cst_4 : f32 to vector<144x384xf32>
    %c0_5 = arith.constant 0 : index
    %c0_6 = arith.constant 0 : index
    %5 = vector.load %arg10[%c0_5, %c0_6] : memref<144x384xf32, #tpu.memory_space<vmem>>, vector<144x384xf32>
    tpu.vector_store %arg10[%c0_5, %c0_6], %4 {strides = array<i32>} : memref<144x384xf32, #tpu.memory_space<vmem>>, vector<144x384xf32>,
    %cst_7 = arith.constant 0.000000e+00 : f32
    %6 = vector.broadcast %cst_7 : f32 to vector<8x384xf32>
    %c0_8 = arith.constant 0 : index
    %c0_9 = arith.constant 0 : index
    %7 = vector.load %arg12[%c0_8, %c0_9] : memref<8x384xf32, #tpu.memory_space<vmem>>, vector<8x384xf32>
    tpu.vector_store %arg12[%c0_8, %c0_9], %6 {strides = array<i32>} : memref<8x384xf32, #tpu.memory_space<vmem>>, vector<8x384xf32>,
    %c0_10 = arith.constant 0 : index
    %c0_11 = arith.constant 0 : index
    %c0_12 = arith.constant 0 : index
    %8 = vector.load %arg1[%c0_10, %c0_11, %c0_12] : memref<1x4x384xf32, #tpu.memory_space<vmem>>, vector<1x4x384xf32>
    %9 = vector.shape_cast %8 : vector<1x4x384xf32> to vector<4x384xf32>
    %10 = vector.extract_strided_slice %9 {offsets = [0, 365], sizes = [4, 19], strides = [1, 1]} : vector<4x384xf32> to vector<4x19xf32>
    %11 = vector.extract_strided_slice %9 {offsets = [0, 0], sizes = [4, 365], strides = [1, 1]} : vector<4x384xf32> to vector<4x365xf32>
    %12 = tpu.concatenate %10, %11 in 1 : vector<4x19xf32>, vector<4x365xf32> -> vector<4x384xf32>
    %c0_13 = arith.constant 0 : index
    %c0_14 = arith.constant 0 : index
    %13 = vector.load %arg9[%c0_13, %c0_14] : memref<144x384xf32, #tpu.memory_space<vmem>>, vector<4x384xf32>
    tpu.vector_store %arg9[%c0_13, %c0_14], %12 {strides = array<i32>} : memref<144x384xf32, #tpu.memory_space<vmem>>, vector<4x384xf32>,
    %14 = vector.extract_strided_slice %9 {offsets = [0, 366], sizes = [4, 18], strides = [1, 1]} : vector<4x384xf32> to vector<4x18xf32>
    %15 = vector.extract_strided_slice %9 {offsets = [0, 0], sizes = [4, 366], strides = [1, 1]} : vector<4x384xf32> to vector<4x366xf32>
    %16 = tpu.concatenate %14, %15 in 1 : vector<4x18xf32>, vector<4x366xf32> -> vector<4x384xf32>
    %c16 = arith.constant 16 : index
    %c0_15 = arith.constant 0 : index
    %17 = vector.load %arg9[%c16, %c0_15] : memref<144x384xf32, #tpu.memory_space<vmem>>, vector<4x384xf32>
    tpu.vector_store %arg9[%c16, %c0_15], %16 {strides = array<i32>} : memref<144x384xf32, #tpu.memory_space<vmem>>, vector<4x384xf32>,
    %18 = vector.extract_strided_slice %9 {offsets = [0, 367], sizes = [4, 17], strides = [1, 1]} : vector<4x384xf32> to vector<4x17xf32>
    %19 = vector.extract_strided_slice %9 {offsets = [0, 0], sizes = [4, 367], strides = [1, 1]} : vector<4x384xf32> to vector<4x367xf32>
    %20 = tpu.concatenate %18, %19 in 1 : vector<4x17xf32>, vector<4x367xf32> -> vector<4x384xf32>
    %c32 = arith.constant 32 : index
    %c0_16 = arith.constant 0 : index
    %21 = vector.load %arg9[%c32, %c0_16] : memref<144x384xf32, #tpu.memory_space<vmem>>, vector<4x384xf32>
    tpu.vector_store %arg9[%c32, %c0_16], %20 {strides = array<i32>} : memref<144x384xf32, #tpu.memory_space<vmem>>, vector<4x384xf32>,
    %22 = vector.extract_strided_slice %9 {offsets = [0, 383], sizes = [4, 1], strides = [1, 1]} : vector<4x384xf32> to vector<4x1xf32>
    %23 = vector.extract_strided_slice %9 {offsets = [0, 0], sizes = [4, 383], strides = [1, 1]} : vector<4x384xf32> to vector<4x383xf32>
    %24 = tpu.concatenate %22, %23 in 1 : vector<4x1xf32>, vector<4x383xf32> -> vector<4x384xf32>
    %c48 = arith.constant 48 : index
    %c0_17 = arith.constant 0 : index
    %25 = vector.load %arg9[%c48, %c0_17] : memref<144x384xf32, #tpu.memory_space<vmem>>, vector<4x384xf32>
    tpu.vector_store %arg9[%c48, %c0_17], %24 {strides = array<i32>} : memref<144x384xf32, #tpu.memory_space<vmem>>, vector<4x384xf32>,
    %c64 = arith.constant 64 : index
    %c0_18 = arith.constant 0 : index
    %26 = vector.load %arg9[%c64, %c0_18] : memref<144x384xf32, #tpu.memory_space<vmem>>, vector<4x384xf32>
    tpu.vector_store %arg9[%c64, %c0_18], %9 {strides = array<i32>} : memref<144x384xf32, #tpu.memory_space<vmem>>, vector<4x384xf32>,
    %27 = vector.extract_strided_slice %9 {offsets = [0, 1], sizes = [4, 383], strides = [1, 1]} : vector<4x384xf32> to vector<4x383xf32>
    %28 = vector.extract_strided_slice %9 {offsets = [0, 0], sizes = [4, 1], strides = [1, 1]} : vector<4x384xf32> to vector<4x1xf32>
    %29 = tpu.concatenate %27, %28 in 1 : vector<4x383xf32>, vector<4x1xf32> -> vector<4x384xf32>
    %c80 = arith.constant 80 : index
    %c0_19 = arith.constant 0 : index
    %30 = vector.load %arg9[%c80, %c0_19] : memref<144x384xf32, #tpu.memory_space<vmem>>, vector<4x384xf32>
    tpu.vector_store %arg9[%c80, %c0_19], %29 {strides = array<i32>} : memref<144x384xf32, #tpu.memory_space<vmem>>, vector<4x384xf32>,
    %31 = vector.extract_strided_slice %9 {offsets = [0, 17], sizes = [4, 367], strides = [1, 1]} : vector<4x384xf32> to vector<4x367xf32>
    %32 = vector.extract_strided_slice %9 {offsets = [0, 0], sizes = [4, 17], strides = [1, 1]} : vector<4x384xf32> to vector<4x17xf32>
    %33 = tpu.concatenate %31, %32 in 1 : vector<4x367xf32>, vector<4x17xf32> -> vector<4x384xf32>
    %c96 = arith.constant 96 : index
    %c0_20 = arith.constant 0 : index
    %34 = vector.load %arg9[%c96, %c0_20] : memref<144x384xf32, #tpu.memory_space<vmem>>, vector<4x384xf32>
    tpu.vector_store %arg9[%c96, %c0_20], %33 {strides = array<i32>} : memref<144x384xf32, #tpu.memory_space<vmem>>, vector<4x384xf32>,
    %35 = vector.extract_strided_slice %9 {offsets = [0, 18], sizes = [4, 366], strides = [1, 1]} : vector<4x384xf32> to vector<4x366xf32>
    %36 = vector.extract_strided_slice %9 {offsets = [0, 0], sizes = [4, 18], strides = [1, 1]} : vector<4x384xf32> to vector<4x18xf32>
    %37 = tpu.concatenate %35, %36 in 1 : vector<4x366xf32>, vector<4x18xf32> -> vector<4x384xf32>
    %c112 = arith.constant 112 : index
    %c0_21 = arith.constant 0 : index
    %38 = vector.load %arg9[%c112, %c0_21] : memref<144x384xf32, #tpu.memory_space<vmem>>, vector<4x384xf32>
    tpu.vector_store %arg9[%c112, %c0_21], %37 {strides = array<i32>} : memref<144x384xf32, #tpu.memory_space<vmem>>, vector<4x384xf32>,
    %39 = vector.extract_strided_slice %9 {offsets = [0, 19], sizes = [4, 365], strides = [1, 1]} : vector<4x384xf32> to vector<4x365xf32>
    %40 = vector.extract_strided_slice %9 {offsets = [0, 0], sizes = [4, 19], strides = [1, 1]} : vector<4x384xf32> to vector<4x19xf32>
    %41 = tpu.concatenate %39, %40 in 1 : vector<4x365xf32>, vector<4x19xf32> -> vector<4x384xf32>
    %c128 = arith.constant 128 : index
    %c0_22 = arith.constant 0 : index
    %42 = vector.load %arg9[%c128, %c0_22] : memref<144x384xf32, #tpu.memory_space<vmem>>, vector<4x384xf32>
    tpu.vector_store %arg9[%c128, %c0_22], %41 {strides = array<i32>} : memref<144x384xf32, #tpu.memory_space<vmem>>, vector<4x384xf32>,
    %c0_23 = arith.constant 0 : index
    %c0_24 = arith.constant 0 : index
    %43 = vector.load %arg2[%c0_23, %c0_24] : memref<1x384xf32, #tpu.memory_space<vmem>>, vector<1x384xf32>
    %c0_25 = arith.constant 0 : index
    %c0_26 = arith.constant 0 : index
    %44 = vector.load %arg9[%c0_25, %c0_26] : memref<144x384xf32, #tpu.memory_space<vmem>>, vector<144x384xf32>
    %45 = arith.truncf %44 : vector<144x384xf32> to vector<144x384xbf16>
    %c0_27 = arith.constant 0 : index
    %c0_28 = arith.constant 0 : index
    %46 = vector.load %arg3[%c0_27, %c0_28] : memref<32x144xbf16, #tpu.memory_space<vmem>>, vector<32x144xbf16>
    %cst_29 = arith.constant dense<0.000000e+00> : vector<32x384xf32>
    %47 = tpu.matmul %46, %45, %cst_29 {dimension_numbers = #tpu.dot_dimension_numbers<[1], [0], [0], [1], [0, 0, 1, 1], [], []>} : vector<32x144xbf16>, vector<144x384xbf16>, vector<32x384xf32> -> vector<32x384xf32>
    %c0_30 = arith.constant 0 : index
    %c0_31 = arith.constant 0 : index
    %48 = vector.load %arg5[%c0_30, %c0_31] : memref<32x1xf32, #tpu.memory_space<vmem>>, vector<32x1xf32>
    %49 = vector.broadcast %48 : vector<32x1xf32> to vector<32x384xf32>
    %50 = arith.addf %47, %49 : vector<32x384xf32>
    %c0_32 = arith.constant 0 : index
    %c0_33 = arith.constant 0 : index
    %51 = vector.load %arg11[%c0_32, %c0_33] : memref<8x384xf32, #tpu.memory_space<vmem>>, vector<8x384xf32>
    %52 = vector.extract_strided_slice %50 {offsets = [0, 0], sizes = [8, 384], strides = [1, 1]} : vector<32x384xf32> to vector<8x384xf32>
    %53 = vector.extract_strided_slice %50 {offsets = [8, 0], sizes = [8, 384], strides = [1, 1]} : vector<32x384xf32> to vector<8x384xf32>
    %54 = vector.extract_strided_slice %50 {offsets = [16, 0], sizes = [8, 384], strides = [1, 1]} : vector<32x384xf32> to vector<8x384xf32>
    %55 = vector.extract_strided_slice %50 {offsets = [24, 0], sizes = [8, 384], strides = [1, 1]} : vector<32x384xf32> to vector<8x384xf32>
    %cst_34 = arith.constant 5.000000e-01 : f32
    %56 = vector.broadcast %cst_34 : f32 to vector<8x384xf32>
    %57 = arith.mulf %56, %52 : vector<8x384xf32>
    %58 = math.tanh %57 : vector<8x384xf32>
    %cst_35 = arith.constant 5.000000e-01 : f32
    %59 = vector.broadcast %cst_35 : f32 to vector<8x384xf32>
    %60 = arith.mulf %59, %58 : vector<8x384xf32>
    %cst_36 = arith.constant 5.000000e-01 : f32
    %61 = vector.broadcast %cst_36 : f32 to vector<8x384xf32>
    %62 = arith.addf %60, %61 : vector<8x384xf32>
    %cst_37 = arith.constant 5.000000e-01 : f32
    %63 = vector.broadcast %cst_37 : f32 to vector<8x384xf32>
    %64 = arith.mulf %63, %53 : vector<8x384xf32>
    %65 = math.tanh %64 : vector<8x384xf32>
    %cst_38 = arith.constant 5.000000e-01 : f32
    %66 = vector.broadcast %cst_38 : f32 to vector<8x384xf32>
    %67 = arith.mulf %66, %65 : vector<8x384xf32>
    %cst_39 = arith.constant 5.000000e-01 : f32
    %68 = vector.broadcast %cst_39 : f32 to vector<8x384xf32>
    %69 = arith.addf %67, %68 : vector<8x384xf32>
    %70 = arith.mulf %69, %51 : vector<8x384xf32>
    %71 = math.tanh %54 : vector<8x384xf32>
    %72 = arith.mulf %62, %71 : vector<8x384xf32>
    %73 = arith.addf %70, %72 : vector<8x384xf32>
    %74 = vector.broadcast %43 : vector<1x384xf32> to vector<8x384xf32>
    %75 = arith.mulf %73, %74 : vector<8x384xf32>
    %cst_40 = arith.constant 5.000000e-01 : f32
    %76 = vector.broadcast %cst_40 : f32 to vector<8x384xf32>
    %77 = arith.mulf %76, %55 : vector<8x384xf32>
    %78 = math.tanh %77 : vector<8x384xf32>
    %cst_41 = arith.constant 5.000000e-01 : f32
    %79 = vector.broadcast %cst_41 : f32 to vector<8x384xf32>
    %80 = arith.mulf %79, %78 : vector<8x384xf32>
    %cst_42 = arith.constant 5.000000e-01 : f32
    %81 = vector.broadcast %cst_42 : f32 to vector<8x384xf32>
    %82 = arith.addf %80, %81 : vector<8x384xf32>
    %83 = math.tanh %75 : vector<8x384xf32>
    %84 = arith.mulf %82, %83 : vector<8x384xf32>
    %85 = vector.broadcast %43 : vector<1x384xf32> to vector<8x384xf32>
    %86 = arith.mulf %84, %85 : vector<8x384xf32>
    %c0_43 = arith.constant 0 : index
    %c0_44 = arith.constant 0 : index
    %87 = vector.load %arg11[%c0_43, %c0_44] : memref<8x384xf32, #tpu.memory_space<vmem>>, vector<8x384xf32>
    tpu.vector_store %arg11[%c0_43, %c0_44], %75 {strides = array<i32>} : memref<8x384xf32, #tpu.memory_space<vmem>>, vector<8x384xf32>,
    %88 = vector.extract_strided_slice %86 {offsets = [0, 365], sizes = [8, 19], strides = [1, 1]} : vector<8x384xf32> to vector<8x19xf32>
    %89 = vector.extract_strided_slice %86 {offsets = [0, 0], sizes = [8, 365], strides = [1, 1]} : vector<8x384xf32> to vector<8x365xf32>
    %90 = tpu.concatenate %88, %89 in 1 : vector<8x19xf32>, vector<8x365xf32> -> vector<8x384xf32>
    %c8 = arith.constant 8 : index
    %c0_45 = arith.constant 0 : index
    %91 = vector.load %arg9[%c8, %c0_45] : memref<144x384xf32, #tpu.memory_space<vmem>>, vector<8x384xf32>
    tpu.vector_store %arg9[%c8, %c0_45], %90 {strides = array<i32>} : memref<144x384xf32, #tpu.memory_space<vmem>>, vector<8x384xf32>,
    %c0_46 = arith.constant 0 : index
    %c0_47 = arith.constant 0 : index
    %92 = vector.load %arg10[%c0_46, %c0_47] : memref<144x384xf32, #tpu.memory_space<vmem>>, vector<8x384xf32>
    tpu.vector_store %arg10[%c0_46, %c0_47], %90 {strides = array<i32>} : memref<144x384xf32, #tpu.memory_space<vmem>>, vector<8x384xf32>,
    %93 = vector.extract_strided_slice %86 {offsets = [0, 366], sizes = [8, 18], strides = [1, 1]} : vector<8x384xf32> to vector<8x18xf32>
    %94 = vector.extract_strided_slice %86 {offsets = [0, 0], sizes = [8, 366], strides = [1, 1]} : vector<8x384xf32> to vector<8x366xf32>
    %95 = tpu.concatenate %93, %94 in 1 : vector<8x18xf32>, vector<8x366xf32> -> vector<8x384xf32>
    %c24 = arith.constant 24 : index
    %c0_48 = arith.constant 0 : index
    %96 = vector.load %arg9[%c24, %c0_48] : memref<144x384xf32, #tpu.memory_space<vmem>>, vector<8x384xf32>
    tpu.vector_store %arg9[%c24, %c0_48], %95 {strides = array<i32>} : memref<144x384xf32, #tpu.memory_space<vmem>>, vector<8x384xf32>,
    %c16_49 = arith.constant 16 : index
    %c0_50 = arith.constant 0 : index
    %97 = vector.load %arg10[%c16_49, %c0_50] : memref<144x384xf32, #tpu.memory_space<vmem>>, vector<8x384xf32>
    tpu.vector_store %arg10[%c16_49, %c0_50], %95 {strides = array<i32>} : memref<144x384xf32, #tpu.memory_space<vmem>>, vector<8x384xf32>,
    %98 = vector.extract_strided_slice %86 {offsets = [0, 367], sizes = [8, 17], strides = [1, 1]} : vector<8x384xf32> to vector<8x17xf32>
    %99 = vector.extract_strided_slice %86 {offsets = [0, 0], sizes = [8, 367], strides = [1, 1]} : vector<8x384xf32> to vector<8x367xf32>
    %100 = tpu.concatenate %98, %99 in 1 : vector<8x17xf32>, vector<8x367xf32> -> vector<8x384xf32>
    %c40 = arith.constant 40 : index
    %c0_51 = arith.constant 0 : index
    %101 = vector.load %arg9[%c40, %c0_51] : memref<144x384xf32, #tpu.memory_space<vmem>>, vector<8x384xf32>
    tpu.vector_store %arg9[%c40, %c0_51], %100 {strides = array<i32>} : memref<144x384xf32, #tpu.memory_space<vmem>>, vector<8x384xf32>,
    %c32_52 = arith.constant 32 : index
    %c0_53 = arith.constant 0 : index
    %102 = vector.load %arg10[%c32_52, %c0_53] : memref<144x384xf32, #tpu.memory_space<vmem>>, vector<8x384xf32>
    tpu.vector_store %arg10[%c32_52, %c0_53], %100 {strides = array<i32>} : memref<144x384xf32, #tpu.memory_space<vmem>>, vector<8x384xf32>,
    %103 = vector.extract_strided_slice %86 {offsets = [0, 383], sizes = [8, 1], strides = [1, 1]} : vector<8x384xf32> to vector<8x1xf32>
    %104 = vector.extract_strided_slice %86 {offsets = [0, 0], sizes = [8, 383], strides = [1, 1]} : vector<8x384xf32> to vector<8x383xf32>
    %105 = tpu.concatenate %103, %104 in 1 : vector<8x1xf32>, vector<8x383xf32> -> vector<8x384xf32>
    %c56 = arith.constant 56 : index
    %c0_54 = arith.constant 0 : index
    %106 = vector.load %arg9[%c56, %c0_54] : memref<144x384xf32, #tpu.memory_space<vmem>>, vector<8x384xf32>
    tpu.vector_store %arg9[%c56, %c0_54], %105 {strides = array<i32>} : memref<144x384xf32, #tpu.memory_space<vmem>>, vector<8x384xf32>,
    %c48_55 = arith.constant 48 : index
    %c0_56 = arith.constant 0 : index
    %107 = vector.load %arg10[%c48_55, %c0_56] : memref<144x384xf32, #tpu.memory_space<vmem>>, vector<8x384xf32>
    tpu.vector_store %arg10[%c48_55, %c0_56], %105 {strides = array<i32>} : memref<144x384xf32, #tpu.memory_space<vmem>>, vector<8x384xf32>,
    %c72 = arith.constant 72 : index
    %c0_57 = arith.constant 0 : index
    %108 = vector.load %arg9[%c72, %c0_57] : memref<144x384xf32, #tpu.memory_space<vmem>>, vector<8x384xf32>
    tpu.vector_store %arg9[%c72, %c0_57], %86 {strides = array<i32>} : memref<144x384xf32, #tpu.memory_space<vmem>>, vector<8x384xf32>,
    %c64_58 = arith.constant 64 : index
    %c0_59 = arith.constant 0 : index
    %109 = vector.load %arg10[%c64_58, %c0_59] : memref<144x384xf32, #tpu.memory_space<vmem>>, vector<8x384xf32>
    tpu.vector_store %arg10[%c64_58, %c0_59], %86 {strides = array<i32>} : memref<144x384xf32, #tpu.memory_space<vmem>>, vector<8x384xf32>,
    %110 = vector.extract_strided_slice %86 {offsets = [0, 1], sizes = [8, 383], strides = [1, 1]} : vector<8x384xf32> to vector<8x383xf32>
    %111 = vector.extract_strided_slice %86 {offsets = [0, 0], sizes = [8, 1], strides = [1, 1]} : vector<8x384xf32> to vector<8x1xf32>
    %112 = tpu.concatenate %110, %111 in 1 : vector<8x383xf32>, vector<8x1xf32> -> vector<8x384xf32>
    %c88 = arith.constant 88 : index
    %c0_60 = arith.constant 0 : index
    %113 = vector.load %arg9[%c88, %c0_60] : memref<144x384xf32, #tpu.memory_space<vmem>>, vector<8x384xf32>
    tpu.vector_store %arg9[%c88, %c0_60], %112 {strides = array<i32>} : memref<144x384xf32, #tpu.memory_space<vmem>>, vector<8x384xf32>,
    %c80_61 = arith.constant 80 : index
    %c0_62 = arith.constant 0 : index
    %114 = vector.load %arg10[%c80_61, %c0_62] : memref<144x384xf32, #tpu.memory_space<vmem>>, vector<8x384xf32>
    tpu.vector_store %arg10[%c80_61, %c0_62], %112 {strides = array<i32>} : memref<144x384xf32, #tpu.memory_space<vmem>>, vector<8x384xf32>,
    %115 = vector.extract_strided_slice %86 {offsets = [0, 17], sizes = [8, 367], strides = [1, 1]} : vector<8x384xf32> to vector<8x367xf32>
    %116 = vector.extract_strided_slice %86 {offsets = [0, 0], sizes = [8, 17], strides = [1, 1]} : vector<8x384xf32> to vector<8x17xf32>
    %117 = tpu.concatenate %115, %116 in 1 : vector<8x367xf32>, vector<8x17xf32> -> vector<8x384xf32>
    %c104 = arith.constant 104 : index
    %c0_63 = arith.constant 0 : index
    %118 = vector.load %arg9[%c104, %c0_63] : memref<144x384xf32, #tpu.memory_space<vmem>>, vector<8x384xf32>
    tpu.vector_store %arg9[%c104, %c0_63], %117 {strides = array<i32>} : memref<144x384xf32, #tpu.memory_space<vmem>>, vector<8x384xf32>,
    %c96_64 = arith.constant 96 : index
    %c0_65 = arith.constant 0 : index
    %119 = vector.load %arg10[%c96_64, %c0_65] : memref<144x384xf32, #tpu.memory_space<vmem>>, vector<8x384xf32>
    tpu.vector_store %arg10[%c96_64, %c0_65], %117 {strides = array<i32>} : memref<144x384xf32, #tpu.memory_space<vmem>>, vector<8x384xf32>,
    %120 = vector.extract_strided_slice %86 {offsets = [0, 18], sizes = [8, 366], strides = [1, 1]} : vector<8x384xf32> to vector<8x366xf32>
    %121 = vector.extract_strided_slice %86 {offsets = [0, 0], sizes = [8, 18], strides = [1, 1]} : vector<8x384xf32> to vector<8x18xf32>
    %122 = tpu.concatenate %120, %121 in 1 : vector<8x366xf32>, vector<8x18xf32> -> vector<8x384xf32>
    %c120 = arith.constant 120 : index
    %c0_66 = arith.constant 0 : index
    %123 = vector.load %arg9[%c120, %c0_66] : memref<144x384xf32, #tpu.memory_space<vmem>>, vector<8x384xf32>
    tpu.vector_store %arg9[%c120, %c0_66], %122 {strides = array<i32>} : memref<144x384xf32, #tpu.memory_space<vmem>>, vector<8x384xf32>,
    %c112_67 = arith.constant 112 : index
    %c0_68 = arith.constant 0 : index
    %124 = vector.load %arg10[%c112_67, %c0_68] : memref<144x384xf32, #tpu.memory_space<vmem>>, vector<8x384xf32>
    tpu.vector_store %arg10[%c112_67, %c0_68], %122 {strides = array<i32>} : memref<144x384xf32, #tpu.memory_space<vmem>>, vector<8x384xf32>,
    %125 = vector.extract_strided_slice %86 {offsets = [0, 19], sizes = [8, 365], strides = [1, 1]} : vector<8x384xf32> to vector<8x365xf32>
    %126 = vector.extract_strided_slice %86 {offsets = [0, 0], sizes = [8, 19], strides = [1, 1]} : vector<8x384xf32> to vector<8x19xf32>
    %127 = tpu.concatenate %125, %126 in 1 : vector<8x365xf32>, vector<8x19xf32> -> vector<8x384xf32>
    %c136 = arith.constant 136 : index
    %c0_69 = arith.constant 0 : index
    %128 = vector.load %arg9[%c136, %c0_69] : memref<144x384xf32, #tpu.memory_space<vmem>>, vector<8x384xf32>
    tpu.vector_store %arg9[%c136, %c0_69], %127 {strides = array<i32>} : memref<144x384xf32, #tpu.memory_space<vmem>>, vector<8x384xf32>,
    %c128_70 = arith.constant 128 : index
    %c0_71 = arith.constant 0 : index
    %129 = vector.load %arg10[%c128_70, %c0_71] : memref<144x384xf32, #tpu.memory_space<vmem>>, vector<8x384xf32>
    tpu.vector_store %arg10[%c128_70, %c0_71], %127 {strides = array<i32>} : memref<144x384xf32, #tpu.memory_space<vmem>>, vector<8x384xf32>,
    %c0_72 = arith.constant 0 : index
    %c0_73 = arith.constant 0 : index
    %130 = vector.load %arg10[%c0_72, %c0_73] : memref<144x384xf32, #tpu.memory_space<vmem>>, vector<144x384xf32>
    %131 = arith.truncf %130 : vector<144x384xf32> to vector<144x384xbf16>
    %c0_74 = arith.constant 0 : index
    %c0_75 = arith.constant 0 : index
    %132 = vector.load %arg4[%c0_74, %c0_75] : memref<32x144xbf16, #tpu.memory_space<vmem>>, vector<32x144xbf16>
    %cst_76 = arith.constant dense<0.000000e+00> : vector<32x384xf32>
    %133 = tpu.matmul %132, %131, %cst_76 {dimension_numbers = #tpu.dot_dimension_numbers<[1], [0], [0], [1], [0, 0, 1, 1], [], []>} : vector<32x144xbf16>, vector<144x384xbf16>, vector<32x384xf32> -> vector<32x384xf32>
    %c0_77 = arith.constant 0 : index
    %c0_78 = arith.constant 0 : index
    %134 = vector.load %arg6[%c0_77, %c0_78] : memref<32x1xf32, #tpu.memory_space<vmem>>, vector<32x1xf32>
    %135 = vector.broadcast %134 : vector<32x1xf32> to vector<32x384xf32>
    %136 = arith.addf %133, %135 : vector<32x384xf32>
    %c0_79 = arith.constant 0 : index
    %c0_80 = arith.constant 0 : index
    %137 = vector.load %arg12[%c0_79, %c0_80] : memref<8x384xf32, #tpu.memory_space<vmem>>, vector<8x384xf32>
    %138 = vector.extract_strided_slice %136 {offsets = [0, 0], sizes = [8, 384], strides = [1, 1]} : vector<32x384xf32> to vector<8x384xf32>
    %139 = vector.extract_strided_slice %136 {offsets = [8, 0], sizes = [8, 384], strides = [1, 1]} : vector<32x384xf32> to vector<8x384xf32>
    %140 = vector.extract_strided_slice %136 {offsets = [16, 0], sizes = [8, 384], strides = [1, 1]} : vector<32x384xf32> to vector<8x384xf32>
    %141 = vector.extract_strided_slice %136 {offsets = [24, 0], sizes = [8, 384], strides = [1, 1]} : vector<32x384xf32> to vector<8x384xf32>
    %cst_81 = arith.constant 5.000000e-01 : f32
    %142 = vector.broadcast %cst_81 : f32 to vector<8x384xf32>
    %143 = arith.mulf %142, %138 : vector<8x384xf32>
    %144 = math.tanh %143 : vector<8x384xf32>
    %cst_82 = arith.constant 5.000000e-01 : f32
    %145 = vector.broadcast %cst_82 : f32 to vector<8x384xf32>
    %146 = arith.mulf %145, %144 : vector<8x384xf32>
    %cst_83 = arith.constant 5.000000e-01 : f32
    %147 = vector.broadcast %cst_83 : f32 to vector<8x384xf32>
    %148 = arith.addf %146, %147 : vector<8x384xf32>
    %cst_84 = arith.constant 5.000000e-01 : f32
    %149 = vector.broadcast %cst_84 : f32 to vector<8x384xf32>
    %150 = arith.mulf %149, %139 : vector<8x384xf32>
    %151 = math.tanh %150 : vector<8x384xf32>
    %cst_85 = arith.constant 5.000000e-01 : f32
    %152 = vector.broadcast %cst_85 : f32 to vector<8x384xf32>
    %153 = arith.mulf %152, %151 : vector<8x384xf32>
    %cst_86 = arith.constant 5.000000e-01 : f32
    %154 = vector.broadcast %cst_86 : f32 to vector<8x384xf32>
    %155 = arith.addf %153, %154 : vector<8x384xf32>
    %156 = arith.mulf %155, %137 : vector<8x384xf32>
    %157 = math.tanh %140 : vector<8x384xf32>
    %158 = arith.mulf %148, %157 : vector<8x384xf32>
    %159 = arith.addf %156, %158 : vector<8x384xf32>
    %160 = vector.broadcast %43 : vector<1x384xf32> to vector<8x384xf32>
    %161 = arith.mulf %159, %160 : vector<8x384xf32>
    %cst_87 = arith.constant 5.000000e-01 : f32
    %162 = vector.broadcast %cst_87 : f32 to vector<8x384xf32>
    %163 = arith.mulf %162, %141 : vector<8x384xf32>
    %164 = math.tanh %163 : vector<8x384xf32>
    %cst_88 = arith.constant 5.000000e-01 : f32
    %165 = vector.broadcast %cst_88 : f32 to vector<8x384xf32>
    %166 = arith.mulf %165, %164 : vector<8x384xf32>
    %cst_89 = arith.constant 5.000000e-01 : f32
    %167 = vector.broadcast %cst_89 : f32 to vector<8x384xf32>
    %168 = arith.addf %166, %167 : vector<8x384xf32>
    %169 = math.tanh %161 : vector<8x384xf32>
    %170 = arith.mulf %168, %169 : vector<8x384xf32>
    %171 = vector.broadcast %43 : vector<1x384xf32> to vector<8x384xf32>
    %172 = arith.mulf %170, %171 : vector<8x384xf32>
    %c0_90 = arith.constant 0 : index
    %c0_91 = arith.constant 0 : index
    %173 = vector.load %arg12[%c0_90, %c0_91] : memref<8x384xf32, #tpu.memory_space<vmem>>, vector<8x384xf32>
    tpu.vector_store %arg12[%c0_90, %c0_91], %161 {strides = array<i32>} : memref<8x384xf32, #tpu.memory_space<vmem>>, vector<8x384xf32>,
    %174 = vector.extract_strided_slice %172 {offsets = [0, 365], sizes = [8, 19], strides = [1, 1]} : vector<8x384xf32> to vector<8x19xf32>
    %175 = vector.extract_strided_slice %172 {offsets = [0, 0], sizes = [8, 365], strides = [1, 1]} : vector<8x384xf32> to vector<8x365xf32>
    %176 = tpu.concatenate %174, %175 in 1 : vector<8x19xf32>, vector<8x365xf32> -> vector<8x384xf32>
    %c8_92 = arith.constant 8 : index
    %c0_93 = arith.constant 0 : index
    %177 = vector.load %arg10[%c8_92, %c0_93] : memref<144x384xf32, #tpu.memory_space<vmem>>, vector<8x384xf32>
    tpu.vector_store %arg10[%c8_92, %c0_93], %176 {strides = array<i32>} : memref<144x384xf32, #tpu.memory_space<vmem>>, vector<8x384xf32>,
    %178 = vector.extract_strided_slice %172 {offsets = [0, 366], sizes = [8, 18], strides = [1, 1]} : vector<8x384xf32> to vector<8x18xf32>
    %179 = vector.extract_strided_slice %172 {offsets = [0, 0], sizes = [8, 366], strides = [1, 1]} : vector<8x384xf32> to vector<8x366xf32>
    %180 = tpu.concatenate %178, %179 in 1 : vector<8x18xf32>, vector<8x366xf32> -> vector<8x384xf32>
    %c24_94 = arith.constant 24 : index
    %c0_95 = arith.constant 0 : index
    %181 = vector.load %arg10[%c24_94, %c0_95] : memref<144x384xf32, #tpu.memory_space<vmem>>, vector<8x384xf32>
    tpu.vector_store %arg10[%c24_94, %c0_95], %180 {strides = array<i32>} : memref<144x384xf32, #tpu.memory_space<vmem>>, vector<8x384xf32>,
    %182 = vector.extract_strided_slice %172 {offsets = [0, 367], sizes = [8, 17], strides = [1, 1]} : vector<8x384xf32> to vector<8x17xf32>
    %183 = vector.extract_strided_slice %172 {offsets = [0, 0], sizes = [8, 367], strides = [1, 1]} : vector<8x384xf32> to vector<8x367xf32>
    %184 = tpu.concatenate %182, %183 in 1 : vector<8x17xf32>, vector<8x367xf32> -> vector<8x384xf32>
    %c40_96 = arith.constant 40 : index
    %c0_97 = arith.constant 0 : index
    %185 = vector.load %arg10[%c40_96, %c0_97] : memref<144x384xf32, #tpu.memory_space<vmem>>, vector<8x384xf32>
    tpu.vector_store %arg10[%c40_96, %c0_97], %184 {strides = array<i32>} : memref<144x384xf32, #tpu.memory_space<vmem>>, vector<8x384xf32>,
    %186 = vector.extract_strided_slice %172 {offsets = [0, 383], sizes = [8, 1], strides = [1, 1]} : vector<8x384xf32> to vector<8x1xf32>
    %187 = vector.extract_strided_slice %172 {offsets = [0, 0], sizes = [8, 383], strides = [1, 1]} : vector<8x384xf32> to vector<8x383xf32>
    %188 = tpu.concatenate %186, %187 in 1 : vector<8x1xf32>, vector<8x383xf32> -> vector<8x384xf32>
    %c56_98 = arith.constant 56 : index
    %c0_99 = arith.constant 0 : index
    %189 = vector.load %arg10[%c56_98, %c0_99] : memref<144x384xf32, #tpu.memory_space<vmem>>, vector<8x384xf32>
    tpu.vector_store %arg10[%c56_98, %c0_99], %188 {strides = array<i32>} : memref<144x384xf32, #tpu.memory_space<vmem>>, vector<8x384xf32>,
    %c72_100 = arith.constant 72 : index
    %c0_101 = arith.constant 0 : index
    %190 = vector.load %arg10[%c72_100, %c0_101] : memref<144x384xf32, #tpu.memory_space<vmem>>, vector<8x384xf32>
    tpu.vector_store %arg10[%c72_100, %c0_101], %172 {strides = array<i32>} : memref<144x384xf32, #tpu.memory_space<vmem>>, vector<8x384xf32>,
    %191 = vector.extract_strided_slice %172 {offsets = [0, 1], sizes = [8, 383], strides = [1, 1]} : vector<8x384xf32> to vector<8x383xf32>
    %192 = vector.extract_strided_slice %172 {offsets = [0, 0], sizes = [8, 1], strides = [1, 1]} : vector<8x384xf32> to vector<8x1xf32>
    %193 = tpu.concatenate %191, %192 in 1 : vector<8x383xf32>, vector<8x1xf32> -> vector<8x384xf32>
    %c88_102 = arith.constant 88 : index
    %c0_103 = arith.constant 0 : index
    %194 = vector.load %arg10[%c88_102, %c0_103] : memref<144x384xf32, #tpu.memory_space<vmem>>, vector<8x384xf32>
    tpu.vector_store %arg10[%c88_102, %c0_103], %193 {strides = array<i32>} : memref<144x384xf32, #tpu.memory_space<vmem>>, vector<8x384xf32>,
    %195 = vector.extract_strided_slice %172 {offsets = [0, 17], sizes = [8, 367], strides = [1, 1]} : vector<8x384xf32> to vector<8x367xf32>
    %196 = vector.extract_strided_slice %172 {offsets = [0, 0], sizes = [8, 17], strides = [1, 1]} : vector<8x384xf32> to vector<8x17xf32>
    %197 = tpu.concatenate %195, %196 in 1 : vector<8x367xf32>, vector<8x17xf32> -> vector<8x384xf32>
    %c104_104 = arith.constant 104 : index
    %c0_105 = arith.constant 0 : index
    %198 = vector.load %arg10[%c104_104, %c0_105] : memref<144x384xf32, #tpu.memory_space<vmem>>, vector<8x384xf32>
    tpu.vector_store %arg10[%c104_104, %c0_105], %197 {strides = array<i32>} : memref<144x384xf32, #tpu.memory_space<vmem>>, vector<8x384xf32>,
    %199 = vector.extract_strided_slice %172 {offsets = [0, 18], sizes = [8, 366], strides = [1, 1]} : vector<8x384xf32> to vector<8x366xf32>
    %200 = vector.extract_strided_slice %172 {offsets = [0, 0], sizes = [8, 18], strides = [1, 1]} : vector<8x384xf32> to vector<8x18xf32>
    %201 = tpu.concatenate %199, %200 in 1 : vector<8x366xf32>, vector<8x18xf32> -> vector<8x384xf32>
    %c120_106 = arith.constant 120 : index
    %c0_107 = arith.constant 0 : index
    %202 = vector.load %arg10[%c120_106, %c0_107] : memref<144x384xf32, #tpu.memory_space<vmem>>, vector<8x384xf32>
    tpu.vector_store %arg10[%c120_106, %c0_107], %201 {strides = array<i32>} : memref<144x384xf32, #tpu.memory_space<vmem>>, vector<8x384xf32>,
    %203 = vector.extract_strided_slice %172 {offsets = [0, 19], sizes = [8, 365], strides = [1, 1]} : vector<8x384xf32> to vector<8x365xf32>
    %204 = vector.extract_strided_slice %172 {offsets = [0, 0], sizes = [8, 19], strides = [1, 1]} : vector<8x384xf32> to vector<8x19xf32>
    %205 = tpu.concatenate %203, %204 in 1 : vector<8x365xf32>, vector<8x19xf32> -> vector<8x384xf32>
    %c136_108 = arith.constant 136 : index
    %c0_109 = arith.constant 0 : index
    %206 = vector.load %arg10[%c136_108, %c0_109] : memref<144x384xf32, #tpu.memory_space<vmem>>, vector<8x384xf32>
    tpu.vector_store %arg10[%c136_108, %c0_109], %205 {strides = array<i32>} : memref<144x384xf32, #tpu.memory_space<vmem>>, vector<8x384xf32>,
    %c0_110 = arith.constant 0 : index
    %c0_111 = arith.constant 0 : index
    %c0_112 = arith.constant 0 : index
    %c0_113 = arith.constant 0 : index
    %207 = vector.load %arg7[%c0_110, %c0_111, %c0_112, %c0_113] : memref<1x2x8x384xf32, #tpu.memory_space<vmem>>, vector<1x1x8x384xf32>
    %208 = vector.shape_cast %207 : vector<1x1x8x384xf32> to vector<8x384xf32>
    %209 = vector.shape_cast %172 : vector<8x384xf32> to vector<1x1x8x384xf32>
    tpu.vector_store %arg7[%c0_110, %c0_111, %c0_112, %c0_113], %209 {strides = array<i32>} : memref<1x2x8x384xf32, #tpu.memory_space<vmem>>, vector<1x1x8x384xf32>,
    %c0_114 = arith.constant 0 : index
    %c0_115 = arith.constant 0 : index
    %210 = vector.load %arg9[%c0_114, %c0_115] : memref<144x384xf32, #tpu.memory_space<vmem>>, vector<144x384xf32>
    %211 = arith.truncf %210 : vector<144x384xf32> to vector<144x384xbf16>
    %c0_116 = arith.constant 0 : index
    %c0_117 = arith.constant 0 : index
    %212 = vector.load %arg3[%c0_116, %c0_117] : memref<32x144xbf16, #tpu.memory_space<vmem>>, vector<32x144xbf16>
    %cst_118 = arith.constant dense<0.000000e+00> : vector<32x384xf32>
    %213 = tpu.matmul %212, %211, %cst_118 {dimension_numbers = #tpu.dot_dimension_numbers<[1], [0], [0], [1], [0, 0, 1, 1], [], []>} : vector<32x144xbf16>, vector<144x384xbf16>, vector<32x384xf32> -> vector<32x384xf32>
    %c0_119 = arith.constant 0 : index
    %c0_120 = arith.constant 0 : index
    %214 = vector.load %arg5[%c0_119, %c0_120] : memref<32x1xf32, #tpu.memory_space<vmem>>, vector<32x1xf32>
    %215 = vector.broadcast %214 : vector<32x1xf32> to vector<32x384xf32>
    %216 = arith.addf %213, %215 : vector<32x384xf32>
    %c0_121 = arith.constant 0 : index
    %c0_122 = arith.constant 0 : index
    %217 = vector.load %arg11[%c0_121, %c0_122] : memref<8x384xf32, #tpu.memory_space<vmem>>, vector<8x384xf32>
    %218 = vector.extract_strided_slice %216 {offsets = [0, 0], sizes = [8, 384], strides = [1, 1]} : vector<32x384xf32> to vector<8x384xf32>
    %219 = vector.extract_strided_slice %216 {offsets = [8, 0], sizes = [8, 384], strides = [1, 1]} : vector<32x384xf32> to vector<8x384xf32>
    %220 = vector.extract_strided_slice %216 {offsets = [16, 0], sizes = [8, 384], strides = [1, 1]} : vector<32x384xf32> to vector<8x384xf32>
    %221 = vector.extract_strided_slice %216 {offsets = [24, 0], sizes = [8, 384], strides = [1, 1]} : vector<32x384xf32> to vector<8x384xf32>
    %cst_123 = arith.constant 5.000000e-01 : f32
    %222 = vector.broadcast %cst_123 : f32 to vector<8x384xf32>
    %223 = arith.mulf %222, %218 : vector<8x384xf32>
    %224 = math.tanh %223 : vector<8x384xf32>
    %cst_124 = arith.constant 5.000000e-01 : f32
    %225 = vector.broadcast %cst_124 : f32 to vector<8x384xf32>
    %226 = arith.mulf %225, %224 : vector<8x384xf32>
    %cst_125 = arith.constant 5.000000e-01 : f32
    %227 = vector.broadcast %cst_125 : f32 to vector<8x384xf32>
    %228 = arith.addf %226, %227 : vector<8x384xf32>
    %cst_126 = arith.constant 5.000000e-01 : f32
    %229 = vector.broadcast %cst_126 : f32 to vector<8x384xf32>
    %230 = arith.mulf %229, %219 : vector<8x384xf32>
    %231 = math.tanh %230 : vector<8x384xf32>
    %cst_127 = arith.constant 5.000000e-01 : f32
    %232 = vector.broadcast %cst_127 : f32 to vector<8x384xf32>
    %233 = arith.mulf %232, %231 : vector<8x384xf32>
    %cst_128 = arith.constant 5.000000e-01 : f32
    %234 = vector.broadcast %cst_128 : f32 to vector<8x384xf32>
    %235 = arith.addf %233, %234 : vector<8x384xf32>
    %236 = arith.mulf %235, %217 : vector<8x384xf32>
    %237 = math.tanh %220 : vector<8x384xf32>
    %238 = arith.mulf %228, %237 : vector<8x384xf32>
    %239 = arith.addf %236, %238 : vector<8x384xf32>
    %240 = vector.broadcast %43 : vector<1x384xf32> to vector<8x384xf32>
    %241 = arith.mulf %239, %240 : vector<8x384xf32>
    %cst_129 = arith.constant 5.000000e-01 : f32
    %242 = vector.broadcast %cst_129 : f32 to vector<8x384xf32>
    %243 = arith.mulf %242, %221 : vector<8x384xf32>
    %244 = math.tanh %243 : vector<8x384xf32>
    %cst_130 = arith.constant 5.000000e-01 : f32
    %245 = vector.broadcast %cst_130 : f32 to vector<8x384xf32>
    %246 = arith.mulf %245, %244 : vector<8x384xf32>
    %cst_131 = arith.constant 5.000000e-01 : f32
    %247 = vector.broadcast %cst_131 : f32 to vector<8x384xf32>
    %248 = arith.addf %246, %247 : vector<8x384xf32>
    %249 = math.tanh %241 : vector<8x384xf32>
    %250 = arith.mulf %248, %249 : vector<8x384xf32>
    %251 = vector.broadcast %43 : vector<1x384xf32> to vector<8x384xf32>
    %252 = arith.mulf %250, %251 : vector<8x384xf32>
    %c0_132 = arith.constant 0 : index
    %c0_133 = arith.constant 0 : index
    %253 = vector.load %arg11[%c0_132, %c0_133] : memref<8x384xf32, #tpu.memory_space<vmem>>, vector<8x384xf32>
    tpu.vector_store %arg11[%c0_132, %c0_133], %241 {strides = array<i32>} : memref<8x384xf32, #tpu.memory_space<vmem>>, vector<8x384xf32>,
    %254 = vector.extract_strided_slice %252 {offsets = [0, 365], sizes = [8, 19], strides = [1, 1]} : vector<8x384xf32> to vector<8x19xf32>
    %255 = vector.extract_strided_slice %252 {offsets = [0, 0], sizes = [8, 365], strides = [1, 1]} : vector<8x384xf32> to vector<8x365xf32>
    %256 = tpu.concatenate %254, %255 in 1 : vector<8x19xf32>, vector<8x365xf32> -> vector<8x384xf32>
    %c0_134 = arith.constant 0 : index
    %c0_135 = arith.constant 0 : index
    %257 = vector.load %arg10[%c0_134, %c0_135] : memref<144x384xf32, #tpu.memory_space<vmem>>, vector<8x384xf32>
    tpu.vector_store %arg10[%c0_134, %c0_135], %256 {strides = array<i32>} : memref<144x384xf32, #tpu.memory_space<vmem>>, vector<8x384xf32>,
    %258 = vector.extract_strided_slice %252 {offsets = [0, 366], sizes = [8, 18], strides = [1, 1]} : vector<8x384xf32> to vector<8x18xf32>
    %259 = vector.extract_strided_slice %252 {offsets = [0, 0], sizes = [8, 366], strides = [1, 1]} : vector<8x384xf32> to vector<8x366xf32>
    %260 = tpu.concatenate %258, %259 in 1 : vector<8x18xf32>, vector<8x366xf32> -> vector<8x384xf32>
    %c16_136 = arith.constant 16 : index
    %c0_137 = arith.constant 0 : index
    %261 = vector.load %arg10[%c16_136, %c0_137] : memref<144x384xf32, #tpu.memory_space<vmem>>, vector<8x384xf32>
    tpu.vector_store %arg10[%c16_136, %c0_137], %260 {strides = array<i32>} : memref<144x384xf32, #tpu.memory_space<vmem>>, vector<8x384xf32>,
    %262 = vector.extract_strided_slice %252 {offsets = [0, 367], sizes = [8, 17], strides = [1, 1]} : vector<8x384xf32> to vector<8x17xf32>
    %263 = vector.extract_strided_slice %252 {offsets = [0, 0], sizes = [8, 367], strides = [1, 1]} : vector<8x384xf32> to vector<8x367xf32>
    %264 = tpu.concatenate %262, %263 in 1 : vector<8x17xf32>, vector<8x367xf32> -> vector<8x384xf32>
    %c32_138 = arith.constant 32 : index
    %c0_139 = arith.constant 0 : index
    %265 = vector.load %arg10[%c32_138, %c0_139] : memref<144x384xf32, #tpu.memory_space<vmem>>, vector<8x384xf32>
    tpu.vector_store %arg10[%c32_138, %c0_139], %264 {strides = array<i32>} : memref<144x384xf32, #tpu.memory_space<vmem>>, vector<8x384xf32>,
    %266 = vector.extract_strided_slice %252 {offsets = [0, 383], sizes = [8, 1], strides = [1, 1]} : vector<8x384xf32> to vector<8x1xf32>
    %267 = vector.extract_strided_slice %252 {offsets = [0, 0], sizes = [8, 383], strides = [1, 1]} : vector<8x384xf32> to vector<8x383xf32>
    %268 = tpu.concatenate %266, %267 in 1 : vector<8x1xf32>, vector<8x383xf32> -> vector<8x384xf32>
    %c48_140 = arith.constant 48 : index
    %c0_141 = arith.constant 0 : index
    %269 = vector.load %arg10[%c48_140, %c0_141] : memref<144x384xf32, #tpu.memory_space<vmem>>, vector<8x384xf32>
    tpu.vector_store %arg10[%c48_140, %c0_141], %268 {strides = array<i32>} : memref<144x384xf32, #tpu.memory_space<vmem>>, vector<8x384xf32>,
    %c64_142 = arith.constant 64 : index
    %c0_143 = arith.constant 0 : index
    %270 = vector.load %arg10[%c64_142, %c0_143] : memref<144x384xf32, #tpu.memory_space<vmem>>, vector<8x384xf32>
    tpu.vector_store %arg10[%c64_142, %c0_143], %252 {strides = array<i32>} : memref<144x384xf32, #tpu.memory_space<vmem>>, vector<8x384xf32>,
    %271 = vector.extract_strided_slice %252 {offsets = [0, 1], sizes = [8, 383], strides = [1, 1]} : vector<8x384xf32> to vector<8x383xf32>
    %272 = vector.extract_strided_slice %252 {offsets = [0, 0], sizes = [8, 1], strides = [1, 1]} : vector<8x384xf32> to vector<8x1xf32>
    %273 = tpu.concatenate %271, %272 in 1 : vector<8x383xf32>, vector<8x1xf32> -> vector<8x384xf32>
    %c80_144 = arith.constant 80 : index
    %c0_145 = arith.constant 0 : index
    %274 = vector.load %arg10[%c80_144, %c0_145] : memref<144x384xf32, #tpu.memory_space<vmem>>, vector<8x384xf32>
    tpu.vector_store %arg10[%c80_144, %c0_145], %273 {strides = array<i32>} : memref<144x384xf32, #tpu.memory_space<vmem>>, vector<8x384xf32>,
    %275 = vector.extract_strided_slice %252 {offsets = [0, 17], sizes = [8, 367], strides = [1, 1]} : vector<8x384xf32> to vector<8x367xf32>
    %276 = vector.extract_strided_slice %252 {offsets = [0, 0], sizes = [8, 17], strides = [1, 1]} : vector<8x384xf32> to vector<8x17xf32>
    %277 = tpu.concatenate %275, %276 in 1 : vector<8x367xf32>, vector<8x17xf32> -> vector<8x384xf32>
    %c96_146 = arith.constant 96 : index
    %c0_147 = arith.constant 0 : index
    %278 = vector.load %arg10[%c96_146, %c0_147] : memref<144x384xf32, #tpu.memory_space<vmem>>, vector<8x384xf32>
    tpu.vector_store %arg10[%c96_146, %c0_147], %277 {strides = array<i32>} : memref<144x384xf32, #tpu.memory_space<vmem>>, vector<8x384xf32>,
    %279 = vector.extract_strided_slice %252 {offsets = [0, 18], sizes = [8, 366], strides = [1, 1]} : vector<8x384xf32> to vector<8x366xf32>
    %280 = vector.extract_strided_slice %252 {offsets = [0, 0], sizes = [8, 18], strides = [1, 1]} : vector<8x384xf32> to vector<8x18xf32>
    %281 = tpu.concatenate %279, %280 in 1 : vector<8x366xf32>, vector<8x18xf32> -> vector<8x384xf32>
    %c112_148 = arith.constant 112 : index
    %c0_149 = arith.constant 0 : index
    %282 = vector.load %arg10[%c112_148, %c0_149] : memref<144x384xf32, #tpu.memory_space<vmem>>, vector<8x384xf32>
    tpu.vector_store %arg10[%c112_148, %c0_149], %281 {strides = array<i32>} : memref<144x384xf32, #tpu.memory_space<vmem>>, vector<8x384xf32>,
    %283 = vector.extract_strided_slice %252 {offsets = [0, 19], sizes = [8, 365], strides = [1, 1]} : vector<8x384xf32> to vector<8x365xf32>
    %284 = vector.extract_strided_slice %252 {offsets = [0, 0], sizes = [8, 19], strides = [1, 1]} : vector<8x384xf32> to vector<8x19xf32>
    %285 = tpu.concatenate %283, %284 in 1 : vector<8x365xf32>, vector<8x19xf32> -> vector<8x384xf32>
    %c128_150 = arith.constant 128 : index
    %c0_151 = arith.constant 0 : index
    %286 = vector.load %arg10[%c128_150, %c0_151] : memref<144x384xf32, #tpu.memory_space<vmem>>, vector<8x384xf32>
    tpu.vector_store %arg10[%c128_150, %c0_151], %285 {strides = array<i32>} : memref<144x384xf32, #tpu.memory_space<vmem>>, vector<8x384xf32>,
    %c0_152 = arith.constant 0 : index
    %c0_153 = arith.constant 0 : index
    %287 = vector.load %arg10[%c0_152, %c0_153] : memref<144x384xf32, #tpu.memory_space<vmem>>, vector<144x384xf32>
    %288 = arith.truncf %287 : vector<144x384xf32> to vector<144x384xbf16>
    %c0_154 = arith.constant 0 : index
    %c0_155 = arith.constant 0 : index
    %289 = vector.load %arg4[%c0_154, %c0_155] : memref<32x144xbf16, #tpu.memory_space<vmem>>, vector<32x144xbf16>
    %cst_156 = arith.constant dense<0.000000e+00> : vector<32x384xf32>
    %290 = tpu.matmul %289, %288, %cst_156 {dimension_numbers = #tpu.dot_dimension_numbers<[1], [0], [0], [1], [0, 0, 1, 1], [], []>} : vector<32x144xbf16>, vector<144x384xbf16>, vector<32x384xf32> -> vector<32x384xf32>
    %c0_157 = arith.constant 0 : index
    %c0_158 = arith.constant 0 : index
    %291 = vector.load %arg6[%c0_157, %c0_158] : memref<32x1xf32, #tpu.memory_space<vmem>>, vector<32x1xf32>
    %292 = vector.broadcast %291 : vector<32x1xf32> to vector<32x384xf32>
    %293 = arith.addf %290, %292 : vector<32x384xf32>
    %c0_159 = arith.constant 0 : index
    %c0_160 = arith.constant 0 : index
    %294 = vector.load %arg12[%c0_159, %c0_160] : memref<8x384xf32, #tpu.memory_space<vmem>>, vector<8x384xf32>
    %295 = vector.extract_strided_slice %293 {offsets = [0, 0], sizes = [8, 384], strides = [1, 1]} : vector<32x384xf32> to vector<8x384xf32>
    %296 = vector.extract_strided_slice %293 {offsets = [8, 0], sizes = [8, 384], strides = [1, 1]} : vector<32x384xf32> to vector<8x384xf32>
    %297 = vector.extract_strided_slice %293 {offsets = [16, 0], sizes = [8, 384], strides = [1, 1]} : vector<32x384xf32> to vector<8x384xf32>
    %298 = vector.extract_strided_slice %293 {offsets = [24, 0], sizes = [8, 384], strides = [1, 1]} : vector<32x384xf32> to vector<8x384xf32>
    %cst_161 = arith.constant 5.000000e-01 : f32
    %299 = vector.broadcast %cst_161 : f32 to vector<8x384xf32>
    %300 = arith.mulf %299, %295 : vector<8x384xf32>
    %301 = math.tanh %300 : vector<8x384xf32>
    %cst_162 = arith.constant 5.000000e-01 : f32
    %302 = vector.broadcast %cst_162 : f32 to vector<8x384xf32>
    %303 = arith.mulf %302, %301 : vector<8x384xf32>
    %cst_163 = arith.constant 5.000000e-01 : f32
    %304 = vector.broadcast %cst_163 : f32 to vector<8x384xf32>
    %305 = arith.addf %303, %304 : vector<8x384xf32>
    %cst_164 = arith.constant 5.000000e-01 : f32
    %306 = vector.broadcast %cst_164 : f32 to vector<8x384xf32>
    %307 = arith.mulf %306, %296 : vector<8x384xf32>
    %308 = math.tanh %307 : vector<8x384xf32>
    %cst_165 = arith.constant 5.000000e-01 : f32
    %309 = vector.broadcast %cst_165 : f32 to vector<8x384xf32>
    %310 = arith.mulf %309, %308 : vector<8x384xf32>
    %cst_166 = arith.constant 5.000000e-01 : f32
    %311 = vector.broadcast %cst_166 : f32 to vector<8x384xf32>
    %312 = arith.addf %310, %311 : vector<8x384xf32>
    %313 = arith.mulf %312, %294 : vector<8x384xf32>
    %314 = math.tanh %297 : vector<8x384xf32>
    %315 = arith.mulf %305, %314 : vector<8x384xf32>
    %316 = arith.addf %313, %315 : vector<8x384xf32>
    %317 = vector.broadcast %43 : vector<1x384xf32> to vector<8x384xf32>
    %318 = arith.mulf %316, %317 : vector<8x384xf32>
    %cst_167 = arith.constant 5.000000e-01 : f32
    %319 = vector.broadcast %cst_167 : f32 to vector<8x384xf32>
    %320 = arith.mulf %319, %298 : vector<8x384xf32>
    %321 = math.tanh %320 : vector<8x384xf32>
    %cst_168 = arith.constant 5.000000e-01 : f32
    %322 = vector.broadcast %cst_168 : f32 to vector<8x384xf32>
    %323 = arith.mulf %322, %321 : vector<8x384xf32>
    %cst_169 = arith.constant 5.000000e-01 : f32
    %324 = vector.broadcast %cst_169 : f32 to vector<8x384xf32>
    %325 = arith.addf %323, %324 : vector<8x384xf32>
    %326 = math.tanh %318 : vector<8x384xf32>
    %327 = arith.mulf %325, %326 : vector<8x384xf32>
    %328 = vector.broadcast %43 : vector<1x384xf32> to vector<8x384xf32>
    %329 = arith.mulf %327, %328 : vector<8x384xf32>
    %c0_170 = arith.constant 0 : index
    %c0_171 = arith.constant 0 : index
    %330 = vector.load %arg12[%c0_170, %c0_171] : memref<8x384xf32, #tpu.memory_space<vmem>>, vector<8x384xf32>
    tpu.vector_store %arg12[%c0_170, %c0_171], %318 {strides = array<i32>} : memref<8x384xf32, #tpu.memory_space<vmem>>, vector<8x384xf32>,
    %c0_172 = arith.constant 0 : index
    %c1 = arith.constant 1 : index
    %c0_173 = arith.constant 0 : index
    %c0_174 = arith.constant 0 : index
    %331 = vector.load %arg7[%c0_172, %c1, %c0_173, %c0_174] : memref<1x2x8x384xf32, #tpu.memory_space<vmem>>, vector<1x1x8x384xf32>
    %332 = vector.shape_cast %331 : vector<1x1x8x384xf32> to vector<8x384xf32>
    %333 = vector.shape_cast %329 : vector<8x384xf32> to vector<1x1x8x384xf32>
    tpu.vector_store %arg7[%c0_172, %c1, %c0_173, %c0_174], %333 {strides = array<i32>} : memref<1x2x8x384xf32, #tpu.memory_space<vmem>>, vector<1x1x8x384xf32>,
    %c0_175 = arith.constant 0 : index
    %c0_176 = arith.constant 0 : index
    %c0_177 = arith.constant 0 : index
    %334 = vector.load %arg8[%c0_175, %c0_176, %c0_177] : memref<1x8x384xf32, #tpu.memory_space<vmem>>, vector<1x8x384xf32>
    %335 = vector.shape_cast %334 : vector<1x8x384xf32> to vector<8x384xf32>
    %336 = vector.shape_cast %318 : vector<8x384xf32> to vector<1x8x384xf32>
    tpu.vector_store %arg8[%c0_175, %c0_176, %c0_177], %336 {strides = array<i32>} : memref<1x8x384xf32, #tpu.memory_space<vmem>>, vector<1x8x384xf32>,
    return
  }
  func.func @transform_0(%arg0: i32) -> (i32, i32, i32) {
    %c0_i32 = arith.constant 0 : i32
    %c0_i32_0 = arith.constant 0 : i32
    %c0_i32_1 = arith.constant 0 : i32
    return %arg0, %c0_i32, %c0_i32_0 : i32, i32, i32
  }
  func.func @transform_1(%arg0: i32) -> (i32, i32) {
    %c0_i32 = arith.constant 0 : i32
    %c0_i32_0 = arith.constant 0 : i32
    %c0_i32_1 = arith.constant 0 : i32
    return %c0_i32, %c0_i32_0 : i32, i32
  }
  func.func @transform_2(%arg0: i32) -> (i32, i32) {
    %c0_i32 = arith.constant 0 : i32
    %c0_i32_0 = arith.constant 0 : i32
    %c0_i32_1 = arith.constant 0 : i32
    return %c0_i32, %c0_i32_0 : i32, i32
  }
  func.func @transform_3(%arg0: i32) -> (i32, i32) {
    %c0_i32 = arith.constant 0 : i32
    %c0_i32_0 = arith.constant 0 : i32
    %c0_i32_1 = arith.constant 0 : i32
    return %c0_i32, %c0_i32_0 : i32, i32
  }
  func.func @transform_4(%arg0: i32) -> (i32, i32) {
    %c0_i32 = arith.constant 0 : i32
    %c0_i32_0 = arith.constant 0 : i32
    %c0_i32_1 = arith.constant 0 : i32
    return %c0_i32, %c0_i32_0 : i32, i32
  }
  func.func @transform_5(%arg0: i32) -> (i32, i32) {
    %c0_i32 = arith.constant 0 : i32
    %c0_i32_0 = arith.constant 0 : i32
    %c0_i32_1 = arith.constant 0 : i32
    return %c0_i32, %c0_i32_0 : i32, i32
  }
  func.func @transform_6(%arg0: i32) -> (i32, i32, i32, i32) {
    %c0_i32 = arith.constant 0 : i32
    %c0_i32_0 = arith.constant 0 : i32
    %c0_i32_1 = arith.constant 0 : i32
    %c0_i32_2 = arith.constant 0 : i32
    return %arg0, %c0_i32, %c0_i32_0, %c0_i32_1 : i32, i32, i32, i32
  }
  func.func @transform_7(%arg0: i32) -> (i32, i32, i32) {
    %c0_i32 = arith.constant 0 : i32
    %c0_i32_0 = arith.constant 0 : i32
    %c0_i32_1 = arith.constant 0 : i32
    return %arg0, %c0_i32, %c0_i32_0 : i32, i32, i32
  }
}

</mosaic_0001>

<llo_original>
// kernel: _conv_lstm_forward_impl.1
$region0: #{_conv_lstm_forward_impl.1}
  #allocation0 [shape = 'u32[]', space=smem, size = 0x4, offset = 0x4, fixed_abs, tag = 'smem constant byte address 0x4 - core index']
  #allocation1 [shape = 'u32[144,128]{1,0:T(1,128)}', space=vmem, size = 0x12000, scoped, tag = 'internal scratch']
  #allocation2 [shape = 'f32[144,384]{1,0:T(8,128)}', space=vmem, size = 0x36000, scoped, tag = 'scratch operand']
  #allocation3 [shape = 'f32[144,384]{1,0:T(8,128)}', space=vmem, size = 0x36000, scoped, tag = 'scratch operand']
  #allocation4 [shape = 'f32[8,384]{1,0:T(8,128)}', space=vmem, size = 0x3000, scoped, tag = 'scratch operand']
  #allocation5 [shape = 'f32[8,384]{1,0:T(8,128)}', space=vmem, size = 0x3000, scoped, tag = 'scratch operand']
  %s0 = inlined_call_operand.vmem [shape: f32[2,4,384], index: 0, kind: input, shape index: {}]
  %s1 = inlined_call_operand.vmem [shape: f32[1,384], index: 1, kind: input, shape index: {}]
  %s2 = inlined_call_operand.vmem [shape: bf16[32,144], index: 2, kind: input, shape index: {}]
  %s3 = inlined_call_operand.vmem [shape: bf16[32,144], index: 3, kind: input, shape index: {}]
  %s4 = inlined_call_operand.vmem [shape: f32[32,1], index: 4, kind: input, shape index: {}]
  %s5 = inlined_call_operand.vmem [shape: f32[32,1], index: 5, kind: input, shape index: {}]
  %s6 = inlined_call_operand.vmem [shape: f32[2,2,8,384], index: 6, kind: output, shape index: {0}]
  %s7 = inlined_call_operand.vmem [shape: f32[2,8,384], index: 7, kind: output, shape index: {1}]
  %8 = xla_tuple %s6, %s7
  %s9 = sld [smem:[#allocation0]]
  $region65: #{_conv_lstm_forward_impl.1} parent=0
    _
  %s11 = ssub.s32 1, %s9
  %s12 = scalar_select 0, %s11, %s9
  loop: start=0, step=1, limit=4
  $region2: #{_conv_lstm_forward_impl.1} parent=0 // loop_pre_header
    _
  $region3: #{_conv_lstm_forward_impl.1} parent=0 // loop_header
    %s14 = sphi 0, %s18
    %p15 = scmp.ge.s32.totalorder %s14, 4
    %s24 = sphi 0, %s26
    %s27 = sphi 0, %s24
    %s28 = sphi 0, %s27
    %s44 = sphi 0, %s28
    %s48 = sphi 0, %s48
    %s50 = sphi 0, %s48
    %s51 = sphi 0, %s50
    %s65 = sphi 0, %s51
    %s69 = sphi 0, %s69
    %s71 = sphi 0, %s69
    %s72 = sphi 0, %s71
    %s86 = sphi 0, %s72
    %s90 = sphi 0, %s90
    %s92 = sphi 0, %s90
    %s93 = sphi 0, %s92
    %s107 = sphi 0, %s93
    %s111 = sphi 0, %s111
    %s113 = sphi 0, %s111
    %s114 = sphi 0, %s113
    %s128 = sphi 0, %s114
    %s132 = sphi 0, %s132
    %s134 = sphi 0, %s132
    %s135 = sphi 0, %s134
    %s149 = sphi 0, %s135
    %s155 = sphi 0, %s157
    %s158 = sphi 0, %s155
    %s159 = sphi 0, %s158
    %s175 = sphi 0, %s159
    %s181 = sphi 0, %s183
    %s184 = sphi 0, %s181
    %s185 = sphi 0, %s184
    %s201 = sphi 0, %s185
  $region4: #{_conv_lstm_forward_impl.1} parent=0 // loop_header_branch
    %17 = sbr.rel (%p15) target = $region8
  $region5: #{_conv_lstm_forward_impl.1} parent=0 // loop_body
    %s19 = ssub.s32 %s14, 1
    %s20 = ssub.s32 %s14, 2
    %s21 = sadd.s32 %s14, 1
    %s22 = ssub.s32 %s14, %s21
    %p23 = scmp.eq.s32.totalorder %s22, 0
    %s25 = sadd.s32 %s24, 1
    %s26 = scalar_select %p23, %s24, %s25
    %p29 = pneg %p23
    %p30 = scmp.eq.s32.totalorder %s14, 1
    %p31 = por %p29, %p30
    %p32 = scmp.ne.s32.totalorder %s24, %s27
    %p33 = scmp.eq.s32.totalorder %s14, 0
    %p34 = por %p32, %p33
    %p35 = scmp.ne.s32.totalorder %s24, %s27
    %p36 = scmp.eq.s32.totalorder %s19, 1
    %p37 = por %p35, %p36
    %p38 = scmp.ne.s32.totalorder %s27, %s28
    %p39 = scmp.eq.s32.totalorder %s19, 0
    %p40 = por %p38, %p39
    %p41 = scmp.ne.s32.totalorder %s27, %s28
    %p42 = scmp.eq.s32.totalorder %s20, 1
    %p43 = por %p41, %p42
    %p45 = scmp.ne.s32.totalorder %s28, %s44
    %p46 = scmp.eq.s32.totalorder %s20, 0
    %p47 = por %p45, %p46
    %s49 = sadd.s32 %s48, 1
    %p52 = scmp.eq.s32.totalorder %s14, 1
    %p53 = scmp.ne.s32.totalorder %s48, %s50
    %p54 = scmp.eq.s32.totalorder %s14, 0
    %p55 = por %p53, %p54
    %p56 = scmp.ne.s32.totalorder %s48, %s50
    %p57 = scmp.eq.s32.totalorder %s19, 1
    %p58 = por %p56, %p57
    %p59 = scmp.ne.s32.totalorder %s50, %s51
    %p60 = scmp.eq.s32.totalorder %s19, 0
    %p61 = por %p59, %p60
    %p62 = scmp.ne.s32.totalorder %s50, %s51
    %p63 = scmp.eq.s32.totalorder %s20, 1
    %p64 = por %p62, %p63
    %p66 = scmp.ne.s32.totalorder %s51, %s65
    %p67 = scmp.eq.s32.totalorder %s20, 0
    %p68 = por %p66, %p67
    %s70 = sadd.s32 %s69, 1
    %p73 = scmp.eq.s32.totalorder %s14, 1
    %p74 = scmp.ne.s32.totalorder %s69, %s71
    %p75 = scmp.eq.s32.totalorder %s14, 0
    %p76 = por %p74, %p75
    %p77 = scmp.ne.s32.totalorder %s69, %s71
    %p78 = scmp.eq.s32.totalorder %s19, 1
    %p79 = por %p77, %p78
    %p80 = scmp.ne.s32.totalorder %s71, %s72
    %p81 = scmp.eq.s32.totalorder %s19, 0
    %p82 = por %p80, %p81
    %p83 = scmp.ne.s32.totalorder %s71, %s72
    %p84 = scmp.eq.s32.totalorder %s20, 1
    %p85 = por %p83, %p84
    %p87 = scmp.ne.s32.totalorder %s72, %s86
    %p88 = scmp.eq.s32.totalorder %s20, 0
    %p89 = por %p87, %p88
    %s91 = sadd.s32 %s90, 1
    %p94 = scmp.eq.s32.totalorder %s14, 1
    %p95 = scmp.ne.s32.totalorder %s90, %s92
    %p96 = scmp.eq.s32.totalorder %s14, 0
    %p97 = por %p95, %p96
    %p98 = scmp.ne.s32.totalorder %s90, %s92
    %p99 = scmp.eq.s32.totalorder %s19, 1
    %p100 = por %p98, %p99
    %p101 = scmp.ne.s32.totalorder %s92, %s93
    %p102 = scmp.eq.s32.totalorder %s19, 0
    %p103 = por %p101, %p102
    %p104 = scmp.ne.s32.totalorder %s92, %s93
    %p105 = scmp.eq.s32.totalorder %s20, 1
    %p106 = por %p104, %p105
    %p108 = scmp.ne.s32.totalorder %s93, %s107
    %p109 = scmp.eq.s32.totalorder %s20, 0
    %p110 = por %p108, %p109
    %s112 = sadd.s32 %s111, 1
    %p115 = scmp.eq.s32.totalorder %s14, 1
    %p116 = scmp.ne.s32.totalorder %s111, %s113
    %p117 = scmp.eq.s32.totalorder %s14, 0
    %p118 = por %p116, %p117
    %p119 = scmp.ne.s32.totalorder %s111, %s113
    %p120 = scmp.eq.s32.totalorder %s19, 1
    %p121 = por %p119, %p120
    %p122 = scmp.ne.s32.totalorder %s113, %s114
    %p123 = scmp.eq.s32.totalorder %s19, 0
    %p124 = por %p122, %p123
    %p125 = scmp.ne.s32.totalorder %s113, %s114
    %p126 = scmp.eq.s32.totalorder %s20, 1
    %p127 = por %p125, %p126
    %p129 = scmp.ne.s32.totalorder %s114, %s128
    %p130 = scmp.eq.s32.totalorder %s20, 0
    %p131 = por %p129, %p130
    %s133 = sadd.s32 %s132, 1
    %p136 = scmp.eq.s32.totalorder %s14, 1
    %p137 = scmp.ne.s32.totalorder %s132, %s134
    %p138 = scmp.eq.s32.totalorder %s14, 0
    %p139 = por %p137, %p138
    %p140 = scmp.ne.s32.totalorder %s132, %s134
    %p141 = scmp.eq.s32.totalorder %s19, 1
    %p142 = por %p140, %p141
    %p143 = scmp.ne.s32.totalorder %s134, %s135
    %p144 = scmp.eq.s32.totalorder %s19, 0
    %p145 = por %p143, %p144
    %p146 = scmp.ne.s32.totalorder %s134, %s135
    %p147 = scmp.eq.s32.totalorder %s20, 1
    %p148 = por %p146, %p147
    %p150 = scmp.ne.s32.totalorder %s135, %s149
    %p151 = scmp.eq.s32.totalorder %s20, 0
    %p152 = por %p150, %p151
    %s153 = ssub.s32 %s14, %s21
    %p154 = scmp.eq.s32.totalorder %s153, 0
    %s156 = sadd.s32 %s155, 1
    %s157 = scalar_select %p154, %s155, %s156
    %p160 = pneg %p154
    %p161 = scmp.eq.s32.totalorder %s14, 1
    %p162 = por %p160, %p161
    %p163 = scmp.ne.s32.totalorder %s155, %s158
    %p164 = scmp.eq.s32.totalorder %s14, 0
    %p165 = por %p163, %p164
    %p166 = scmp.ne.s32.totalorder %s155, %s158
    %p167 = scmp.eq.s32.totalorder %s19, 1
    %p168 = por %p166, %p167
    %p169 = scmp.ne.s32.totalorder %s158, %s159
    %p170 = scmp.eq.s32.totalorder %s19, 0
    %p171 = por %p169, %p170
    %p172 = scmp.ne.s32.totalorder %s158, %s159
    %p173 = scmp.eq.s32.totalorder %s20, 1
    %p174 = por %p172, %p173
    %p176 = scmp.ne.s32.totalorder %s159, %s175
    %p177 = scmp.eq.s32.totalorder %s20, 0
    %p178 = por %p176, %p177
    %s179 = ssub.s32 %s14, %s21
    %p180 = scmp.eq.s32.totalorder %s179, 0
    %s182 = sadd.s32 %s181, 1
    %s183 = scalar_select %p180, %s181, %s182
    %p186 = pneg %p180
    %p187 = scmp.eq.s32.totalorder %s14, 1
    %p188 = por %p186, %p187
    %p189 = scmp.ne.s32.totalorder %s181, %s184
    %p190 = scmp.eq.s32.totalorder %s14, 0
    %p191 = por %p189, %p190
    %p192 = scmp.ne.s32.totalorder %s181, %s184
    %p193 = scmp.eq.s32.totalorder %s19, 1
    %p194 = por %p192, %p193
    %p195 = scmp.ne.s32.totalorder %s184, %s185
    %p196 = scmp.eq.s32.totalorder %s19, 0
    %p197 = por %p195, %p196
    %p198 = scmp.ne.s32.totalorder %s184, %s185
    %p199 = scmp.eq.s32.totalorder %s20, 1
    %p200 = por %p198, %p199
    %p202 = scmp.ne.s32.totalorder %s185, %s201
    %p203 = scmp.eq.s32.totalorder %s20, 0
    %p204 = por %p202, %p203
    %p205 = scmp.le.s32.totalorder 1, %s14
    %p206 = scmp.lt.s32.totalorder %s14, 3
    %p207 = pnand %p205, %p206
    %p208 = pneg %p207
    // Predicated region
    $region9: #{_conv_lstm_forward_impl.1} parent=5 // pred_check
      _
    $region10: #{_conv_lstm_forward_impl.1} parent=5 // pred_check_branch
      %210 = sbr.rel (%p207) target = $region12
    $region11: #{_conv_lstm_forward_impl.1} parent=5 // pred_region
      %s211 = ssub.s32 %s14, 1
      // Predicated region
      $region13: #{_conv_lstm_forward_impl.1} parent=11 // pred_check
        %p212 = pneg %p61
      $region14: #{_conv_lstm_forward_impl.1} parent=11 // pred_check_branch
        %214 = sbr.rel (%p212) target = $region16
      $region15: #{_conv_lstm_forward_impl.1} parent=11 // pred_region
        _
      $region16: #{_conv_lstm_forward_impl.1} parent=11 // pred_fallthru
        _
      // Predicated region
      $region17: #{_conv_lstm_forward_impl.1} parent=11 // pred_check
        %p215 = pneg %p82
      $region18: #{_conv_lstm_forward_impl.1} parent=11 // pred_check_branch
        %217 = sbr.rel (%p215) target = $region20
      $region19: #{_conv_lstm_forward_impl.1} parent=11 // pred_region
        _
      $region20: #{_conv_lstm_forward_impl.1} parent=11 // pred_fallthru
        _
      // Predicated region
      $region21: #{_conv_lstm_forward_impl.1} parent=11 // pred_check
        %p218 = pneg %p103
      $region22: #{_conv_lstm_forward_impl.1} parent=11 // pred_check_branch
        %220 = sbr.rel (%p218) target = $region24
      $region23: #{_conv_lstm_forward_impl.1} parent=11 // pred_region
        _
      $region24: #{_conv_lstm_forward_impl.1} parent=11 // pred_fallthru
        _
      // Predicated region
      $region25: #{_conv_lstm_forward_impl.1} parent=11 // pred_check
        %p221 = pneg %p124
      $region26: #{_conv_lstm_forward_impl.1} parent=11 // pred_check_branch
        %223 = sbr.rel (%p221) target = $region28
      $region27: #{_conv_lstm_forward_impl.1} parent=11 // pred_region
        _
      $region28: #{_conv_lstm_forward_impl.1} parent=11 // pred_fallthru
        _
      // Predicated region
      $region29: #{_conv_lstm_forward_impl.1} parent=11 // pred_check
        %p224 = pneg %p145
      $region30: #{_conv_lstm_forward_impl.1} parent=11 // pred_check_branch
        %226 = sbr.rel (%p224) target = $region32
      $region31: #{_conv_lstm_forward_impl.1} parent=11 // pred_region
        _
      $region32: #{_conv_lstm_forward_impl.1} parent=11 // pred_fallthru
        _
    $region12: #{_conv_lstm_forward_impl.1} parent=5 // pred_fallthru
      _
    %p227 = scmp.lt.s32.totalorder %s14, 2
    // Predicated region
    $region33: #{_conv_lstm_forward_impl.1} parent=5 // pred_check
      %p228 = pneg %p227
    $region34: #{_conv_lstm_forward_impl.1} parent=5 // pred_check_branch
      %230 = sbr.rel (%p228) target = $region36
    $region35: #{_conv_lstm_forward_impl.1} parent=5 // pred_region
      // Predicated region
      $region37: #{_conv_lstm_forward_impl.1} parent=35 // pred_check
        %p231 = pneg %p34
      $region38: #{_conv_lstm_forward_impl.1} parent=35 // pred_check_branch
        %233 = sbr.rel (%p231) target = $region40
      $region39: #{_conv_lstm_forward_impl.1} parent=35 // pred_region
        %p234 = scmp.lt.s32.totalorder %s14, 1
        %s235 = scalar_select %p234, %s14, 1
        %s236 = smul.addr %s235, 3
        %s237 = smul.addr %s236, 4
        %s238 = scalar_lea.vmem %s0, %s237
      $region40: #{_conv_lstm_forward_impl.1} parent=35 // pred_fallthru
        _
    $region36: #{_conv_lstm_forward_impl.1} parent=5 // pred_fallthru
      _
    %p239 = scmp.le.s32.totalorder 1, %s14
    %p240 = scmp.lt.s32.totalorder %s14, 3
    %p241 = pnand %p239, %p240
    %p242 = pneg %p241
    // Predicated region
    $region41: #{_conv_lstm_forward_impl.1} parent=5 // pred_check
      _
    $region42: #{_conv_lstm_forward_impl.1} parent=5 // pred_check_branch
      %244 = sbr.rel (%p241) target = $region44
    $region43: #{_conv_lstm_forward_impl.1} parent=5 // pred_region
      %s245 = ssub.s32 %s14, 1
      %p246 = scmp.lt.s32.totalorder %s19, 1
      %s247 = scalar_select %p246, %s19, 1
      %s248 = smul.addr %s247, 3
      %s249 = smul.addr %s248, 4
      %s250 = scalar_lea.vmem %s0, %s249
      %p251 = pneg %p40
      %p252 = pneg %p37
      %p253 = pneg %p61
      %p254 = pneg %p58
      %p255 = pneg %p82
      %p256 = pneg %p79
      %p257 = pneg %p103
      %p258 = pneg %p100
      %p259 = pneg %p124
      %p260 = pneg %p121
      %p261 = pneg %p145
      %p262 = pneg %p142
      %p263 = pneg %p171
      %p264 = pneg %p168
      %p265 = scmp.lt.s32.totalorder %s19, 1
      %s266 = scalar_select %p265, %s19, 1
      %s267 = smul.addr %s266, 6
      %s268 = smul.addr %s267, 8
      %s269 = scalar_lea.vmem %s6, %s268
      %p270 = pneg %p197
      %p271 = pneg %p194
      %p272 = scmp.lt.s32.totalorder %s19, 1
      %s273 = scalar_select %p272, %s19, 1
      %s274 = smul.addr %s273, 3
      %s275 = smul.addr %s274, 8
      %s276 = scalar_lea.vmem %s7, %s275
      %p277 = scmp.lt.s32.totalorder %s19, 1
      %s278 = scalar_select %p277, %s19, 1
      %s279 = smul.addr %s278, 3
      %s280 = smul.addr %s279, 4
      %s281 = scalar_lea.vmem %s0, %s280
      %p282 = scmp.lt.s32.totalorder %s19, 1
      %s283 = scalar_select %p282, %s19, 1
      %s284 = smul.addr %s283, 6
      %s285 = smul.addr %s284, 8
      %s286 = scalar_lea.vmem %s6, %s285
      %p287 = scmp.lt.s32.totalorder %s19, 1
      %s288 = scalar_select %p287, %s19, 1
      %s289 = smul.addr %s288, 3
      %s290 = smul.addr %s289, 8
      %s291 = scalar_lea.vmem %s7, %s290
      %293 = vst [vmem:[#allocation2] sm:$0xff] 0.0
      %294 = vst [vmem:[#allocation2 + $0x8] sm:$0xff] 0.0
      %295 = vst [vmem:[#allocation2 + $0x10] sm:$0xff] 0.0
      %296 = vst [vmem:[#allocation2 + $0x18] sm:$0xff] 0.0
      %297 = vst [vmem:[#allocation2 + $0x20] sm:$0xff] 0.0
      %298 = vst [vmem:[#allocation2 + $0x28] sm:$0xff] 0.0
      %299 = vst [vmem:[#allocation2 + $0x30] sm:$0xff] 0.0
      %300 = vst [vmem:[#allocation2 + $0x38] sm:$0xff] 0.0
      %301 = vst [vmem:[#allocation2 + $0x40] sm:$0xff] 0.0
      %302 = vst [vmem:[#allocation2 + $0x48] sm:$0xff] 0.0
      %303 = vst [vmem:[#allocation2 + $0x50] sm:$0xff] 0.0
      %304 = vst [vmem:[#allocation2 + $0x58] sm:$0xff] 0.0
      %305 = vst [vmem:[#allocation2 + $0x60] sm:$0xff] 0.0
      %306 = vst [vmem:[#allocation2 + $0x68] sm:$0xff] 0.0
      %307 = vst [vmem:[#allocation2 + $0x70] sm:$0xff] 0.0
      %308 = vst [vmem:[#allocation2 + $0x78] sm:$0xff] 0.0
      %309 = vst [vmem:[#allocation2 + $0x80] sm:$0xff] 0.0
      %310 = vst [vmem:[#allocation2 + $0x88] sm:$0xff] 0.0
      %311 = vst [vmem:[#allocation2 + $0x90] sm:$0xff] 0.0
      %312 = vst [vmem:[#allocation2 + $0x98] sm:$0xff] 0.0
      %313 = vst [vmem:[#allocation2 + $0xa0] sm:$0xff] 0.0
      %314 = vst [vmem:[#allocation2 + $0xa8] sm:$0xff] 0.0
      %315 = vst [vmem:[#allocation2 + $0xb0] sm:$0xff] 0.0
      %316 = vst [vmem:[#allocation2 + $0xb8] sm:$0xff] 0.0
      %317 = vst [vmem:[#allocation2 + $0xc0] sm:$0xff] 0.0
      %318 = vst [vmem:[#allocation2 + $0xc8] sm:$0xff] 0.0
      %319 = vst [vmem:[#allocation2 + $0xd0] sm:$0xff] 0.0
      %320 = vst [vmem:[#allocation2 + $0xd8] sm:$0xff] 0.0
      %321 = vst [vmem:[#allocation2 + $0xe0] sm:$0xff] 0.0
      %322 = vst [vmem:[#allocation2 + $0xe8] sm:$0xff] 0.0
      %323 = vst [vmem:[#allocation2 + $0xf0] sm:$0xff] 0.0
      %324 = vst [vmem:[#allocation2 + $0xf8] sm:$0xff] 0.0
      %325 = vst [vmem:[#allocation2 + $0x100] sm:$0xff] 0.0
      %326 = vst [vmem:[#allocation2 + $0x108] sm:$0xff] 0.0
      %327 = vst [vmem:[#allocation2 + $0x110] sm:$0xff] 0.0
      %328 = vst [vmem:[#allocation2 + $0x118] sm:$0xff] 0.0
      %329 = vst [vmem:[#allocation2 + $0x120] sm:$0xff] 0.0
      %330 = vst [vmem:[#allocation2 + $0x128] sm:$0xff] 0.0
      %331 = vst [vmem:[#allocation2 + $0x130] sm:$0xff] 0.0
      %332 = vst [vmem:[#allocation2 + $0x138] sm:$0xff] 0.0
      %333 = vst [vmem:[#allocation2 + $0x140] sm:$0xff] 0.0
      %334 = vst [vmem:[#allocation2 + $0x148] sm:$0xff] 0.0
      %335 = vst [vmem:[#allocation2 + $0x150] sm:$0xff] 0.0
      %336 = vst [vmem:[#allocation2 + $0x158] sm:$0xff] 0.0
      %337 = vst [vmem:[#allocation2 + $0x160] sm:$0xff] 0.0
      %338 = vst [vmem:[#allocation2 + $0x168] sm:$0xff] 0.0
      %339 = vst [vmem:[#allocation2 + $0x170] sm:$0xff] 0.0
      %340 = vst [vmem:[#allocation2 + $0x178] sm:$0xff] 0.0
      %341 = vst [vmem:[#allocation2 + $0x180] sm:$0xff] 0.0
      %342 = vst [vmem:[#allocation2 + $0x188] sm:$0xff] 0.0
      %343 = vst [vmem:[#allocation2 + $0x190] sm:$0xff] 0.0
      %344 = vst [vmem:[#allocation2 + $0x198] sm:$0xff] 0.0
      %345 = vst [vmem:[#allocation2 + $0x1a0] sm:$0xff] 0.0
      %346 = vst [vmem:[#allocation2 + $0x1a8] sm:$0xff] 0.0
      %347 = vst [vmem:[#allocation4] sm:$0xff] 0.0
      %348 = vst [vmem:[#allocation4 + $0x8] sm:$0xff] 0.0
      %349 = vst [vmem:[#allocation4 + $0x10] sm:$0xff] 0.0
      %350 = vst [vmem:[#allocation3] sm:$0xff] 0.0
      %351 = vst [vmem:[#allocation3 + $0x8] sm:$0xff] 0.0
      %352 = vst [vmem:[#allocation3 + $0x10] sm:$0xff] 0.0
      %353 = vst [vmem:[#allocation3 + $0x18] sm:$0xff] 0.0
      %354 = vst [vmem:[#allocation3 + $0x20] sm:$0xff] 0.0
      %355 = vst [vmem:[#allocation3 + $0x28] sm:$0xff] 0.0
      %356 = vst [vmem:[#allocation3 + $0x30] sm:$0xff] 0.0
      %357 = vst [vmem:[#allocation3 + $0x38] sm:$0xff] 0.0
      %358 = vst [vmem:[#allocation3 + $0x40] sm:$0xff] 0.0
      %359 = vst [vmem:[#allocation3 + $0x48] sm:$0xff] 0.0
      %360 = vst [vmem:[#allocation3 + $0x50] sm:$0xff] 0.0
      %361 = vst [vmem:[#allocation3 + $0x58] sm:$0xff] 0.0
      %362 = vst [vmem:[#allocation3 + $0x60] sm:$0xff] 0.0
      %363 = vst [vmem:[#allocation3 + $0x68] sm:$0xff] 0.0
      %364 = vst [vmem:[#allocation3 + $0x70] sm:$0xff] 0.0
      %365 = vst [vmem:[#allocation3 + $0x78] sm:$0xff] 0.0
      %366 = vst [vmem:[#allocation3 + $0x80] sm:$0xff] 0.0
      %367 = vst [vmem:[#allocation3 + $0x88] sm:$0xff] 0.0
      %368 = vst [vmem:[#allocation3 + $0x90] sm:$0xff] 0.0
      %369 = vst [vmem:[#allocation3 + $0x98] sm:$0xff] 0.0
      %370 = vst [vmem:[#allocation3 + $0xa0] sm:$0xff] 0.0
      %371 = vst [vmem:[#allocation3 + $0xa8] sm:$0xff] 0.0
      %372 = vst [vmem:[#allocation3 + $0xb0] sm:$0xff] 0.0
      %373 = vst [vmem:[#allocation3 + $0xb8] sm:$0xff] 0.0
      %374 = vst [vmem:[#allocation3 + $0xc0] sm:$0xff] 0.0
      %375 = vst [vmem:[#allocation3 + $0xc8] sm:$0xff] 0.0
      %376 = vst [vmem:[#allocation3 + $0xd0] sm:$0xff] 0.0
      %377 = vst [vmem:[#allocation3 + $0xd8] sm:$0xff] 0.0
      %378 = vst [vmem:[#allocation3 + $0xe0] sm:$0xff] 0.0
      %379 = vst [vmem:[#allocation3 + $0xe8] sm:$0xff] 0.0
      %380 = vst [vmem:[#allocation3 + $0xf0] sm:$0xff] 0.0
      %381 = vst [vmem:[#allocation3 + $0xf8] sm:$0xff] 0.0
      %382 = vst [vmem:[#allocation3 + $0x100] sm:$0xff] 0.0
      %383 = vst [vmem:[#allocation3 + $0x108] sm:$0xff] 0.0
      %384 = vst [vmem:[#allocation3 + $0x110] sm:$0xff] 0.0
      %385 = vst [vmem:[#allocation3 + $0x118] sm:$0xff] 0.0
      %386 = vst [vmem:[#allocation3 + $0x120] sm:$0xff] 0.0
      %387 = vst [vmem:[#allocation3 + $0x128] sm:$0xff] 0.0
      %388 = vst [vmem:[#allocation3 + $0x130] sm:$0xff] 0.0
      %389 = vst [vmem:[#allocation3 + $0x138] sm:$0xff] 0.0
      %390 = vst [vmem:[#allocation3 + $0x140] sm:$0xff] 0.0
      %391 = vst [vmem:[#allocation3 + $0x148] sm:$0xff] 0.0
      %392 = vst [vmem:[#allocation3 + $0x150] sm:$0xff] 0.0
      %393 = vst [vmem:[#allocation3 + $0x158] sm:$0xff] 0.0
      %394 = vst [vmem:[#allocation3 + $0x160] sm:$0xff] 0.0
      %395 = vst [vmem:[#allocation3 + $0x168] sm:$0xff] 0.0
      %396 = vst [vmem:[#allocation3 + $0x170] sm:$0xff] 0.0
      %397 = vst [vmem:[#allocation3 + $0x178] sm:$0xff] 0.0
      %398 = vst [vmem:[#allocation3 + $0x180] sm:$0xff] 0.0
      %399 = vst [vmem:[#allocation3 + $0x188] sm:$0xff] 0.0
      %400 = vst [vmem:[#allocation3 + $0x190] sm:$0xff] 0.0
      %401 = vst [vmem:[#allocation3 + $0x198] sm:$0xff] 0.0
      %402 = vst [vmem:[#allocation3 + $0x1a0] sm:$0xff] 0.0
      %403 = vst [vmem:[#allocation3 + $0x1a8] sm:$0xff] 0.0
      %404 = vst [vmem:[#allocation5] sm:$0xff] 0.0
      %405 = vst [vmem:[#allocation5 + $0x8] sm:$0xff] 0.0
      %406 = vst [vmem:[#allocation5 + $0x10] sm:$0xff] 0.0
      %v407 = vld [vmem:[%s281] sm:$0xff]
      %v408 = vld [vmem:[%s281 + $0x8] sm:$0xf]
      %410 = vrot.lane.b32.xlu0 %v408, 19
      %v411 = vpop.permute.xlu0 %410
      %v414 = vcombine.high %v407, %v407
      %415 = vrot.lane.b32.xlu0 %v407, 19
      %v416 = vpop.permute.xlu0 %415
      %417 = vrot.lane.b32.xlu0 %v414, 19
      %v418 = vpop.permute.xlu0 %417
      %vm419 = vcmask 154624
      %v420 = vsel %vm419, %v416, %v418
      %v421 = vsel %vm419, %v418, %v411
      %v425 = vsel %vm419, %v411, %v416
      %426 = vst [vmem:[#allocation2] sm:$0xf] %v425
      %427 = vst [vmem:[#allocation2 + $0x8] sm:$0xf] %v420
      %428 = vst [vmem:[#allocation2 + $0x10] sm:$0xf] %v421
      %429 = vrot.lane.b32.xlu0 %v408, 18
      %v430 = vpop.permute.xlu0 %429
      %432 = vrot.lane.b32.xlu0 %v407, 18
      %v433 = vpop.permute.xlu0 %432
      %434 = vrot.lane.b32.xlu0 %v414, 18
      %v435 = vpop.permute.xlu0 %434
      %vm436 = vcmask 146432
      %v437 = vsel %vm436, %v433, %v435
      %v438 = vsel %vm436, %v435, %v430
      %v442 = vsel %vm436, %v430, %v433
      %443 = vst [vmem:[#allocation2 + $0x30] sm:$0xf] %v442
      %444 = vst [vmem:[#allocation2 + $0x38] sm:$0xf] %v437
      %445 = vst [vmem:[#allocation2 + $0x40] sm:$0xf] %v438
      %446 = vrot.lane.b32.xlu0 %v408, 17
      %v447 = vpop.permute.xlu0 %446
      %449 = vrot.lane.b32.xlu0 %v407, 17
      %v450 = vpop.permute.xlu0 %449
      %451 = vrot.lane.b32.xlu0 %v414, 17
      %v452 = vpop.permute.xlu0 %451
      %vm453 = vcmask 138240
      %v454 = vsel %vm453, %v450, %v452
      %v455 = vsel %vm453, %v452, %v447
      %v459 = vsel %vm453, %v447, %v450
      %460 = vst [vmem:[#allocation2 + $0x60] sm:$0xf] %v459
      %461 = vst [vmem:[#allocation2 + $0x68] sm:$0xf] %v454
      %462 = vst [vmem:[#allocation2 + $0x70] sm:$0xf] %v455
      %463 = vrot.lane.b32.xlu0 %v408, 1
      %v464 = vpop.permute.xlu0 %463
      %466 = vrot.lane.b32.xlu0 %v407, 1
      %v467 = vpop.permute.xlu0 %466
      %468 = vrot.lane.b32.xlu0 %v414, 1
      %v469 = vpop.permute.xlu0 %468
      %vm470 = vcmask 7168
      %v471 = vsel %vm470, %v467, %v469
      %v472 = vsel %vm470, %v469, %v464
      %v476 = vsel %vm470, %v464, %v467
      %477 = vst [vmem:[#allocation2 + $0x90] sm:$0xf] %v476
      %478 = vst [vmem:[#allocation2 + $0x98] sm:$0xf] %v471
      %479 = vst [vmem:[#allocation2 + $0xa0] sm:$0xf] %v472
      %481 = vst [vmem:[#allocation2 + $0xc0] sm:$0xf] %v407
      %482 = vst [vmem:[#allocation2 + $0xc8] sm:$0xf] %v414
      %483 = vst [vmem:[#allocation2 + $0xd0] sm:$0xf] %v408
      %484 = vrot.lane.b32.xlu0 %v407, 127
      %v485 = vpop.permute.xlu0 %484
      %486 = vrot.lane.b32.xlu0 %v414, 127
      %v487 = vpop.permute.xlu0 %486
      %488 = vrot.lane.b32.xlu0 %v408, 127
      %v489 = vpop.permute.xlu0 %488
      %vm490 = vcmask 1039360
      %v491 = vsel %vm490, %v485, %v487
      %v492 = vsel %vm490, %v487, %v489
      %v497 = vsel %vm490, %v489, %v485
      %498 = vst [vmem:[#allocation2 + $0xf0] sm:$0xf] %v491
      %499 = vst [vmem:[#allocation2 + $0xf8] sm:$0xf] %v492
      %500 = vst [vmem:[#allocation2 + $0x100] sm:$0xf] %v497
      %501 = vrot.lane.b32.xlu0 %v407, 111
      %v502 = vpop.permute.xlu0 %501
      %503 = vrot.lane.b32.xlu0 %v414, 111
      %v504 = vpop.permute.xlu0 %503
      %505 = vrot.lane.b32.xlu0 %v408, 111
      %v506 = vpop.permute.xlu0 %505
      %vm507 = vcmask 908288
      %v508 = vsel %vm507, %v502, %v504
      %v509 = vsel %vm507, %v504, %v506
      %v514 = vsel %vm507, %v506, %v502
      %515 = vst [vmem:[#allocation2 + $0x120] sm:$0xf] %v508
      %516 = vst [vmem:[#allocation2 + $0x128] sm:$0xf] %v509
      %517 = vst [vmem:[#allocation2 + $0x130] sm:$0xf] %v514
      %518 = vrot.lane.b32.xlu0 %v407, 110
      %v519 = vpop.permute.xlu0 %518
      %520 = vrot.lane.b32.xlu0 %v414, 110
      %v521 = vpop.permute.xlu0 %520
      %522 = vrot.lane.b32.xlu0 %v408, 110
      %v523 = vpop.permute.xlu0 %522
      %vm524 = vcmask 900096
      %v525 = vsel %vm524, %v519, %v521
      %v526 = vsel %vm524, %v521, %v523
      %v531 = vsel %vm524, %v523, %v519
      %532 = vst [vmem:[#allocation2 + $0x150] sm:$0xf] %v525
      %533 = vst [vmem:[#allocation2 + $0x158] sm:$0xf] %v526
      %534 = vst [vmem:[#allocation2 + $0x160] sm:$0xf] %v531
      %535 = vrot.lane.b32.xlu0 %v407, 109
      %v536 = vpop.permute.xlu0 %535
      %537 = vrot.lane.b32.xlu0 %v414, 109
      %v538 = vpop.permute.xlu0 %537
      %539 = vrot.lane.b32.xlu0 %v408, 109
      %v540 = vpop.permute.xlu0 %539
      %vm541 = vcmask 891904
      %v542 = vsel %vm541, %v536, %v538
      %v543 = vsel %vm541, %v538, %v540
      %v548 = vsel %vm541, %v540, %v536
      %549 = vst [vmem:[#allocation2 + $0x180] sm:$0xf] %v542
      %550 = vst [vmem:[#allocation2 + $0x188] sm:$0xf] %v543
      %551 = vst [vmem:[#allocation2 + $0x190] sm:$0xf] %v548
      %v552 = vld [vmem:[%s1] sm:$0x7]
      %v553 = vld [vmem:[#allocation2] sm:$0xff]
      %v554 = vld [vmem:[#allocation2 + $0x8] sm:$0xff]
      %v555 = vld [vmem:[#allocation2 + $0x10] sm:$0xff]
      %v556 = vld [vmem:[#allocation2 + $0x18] sm:$0xff]
      %v557 = vld [vmem:[#allocation2 + $0x20] sm:$0xff]
      %v558 = vld [vmem:[#allocation2 + $0x28] sm:$0xff]
      %v559 = vld [vmem:[#allocation2 + $0x30] sm:$0xff]
      %v560 = vld [vmem:[#allocation2 + $0x38] sm:$0xff]
      %v561 = vld [vmem:[#allocation2 + $0x40] sm:$0xff]
      %v562 = vld [vmem:[#allocation2 + $0x48] sm:$0xff]
      %v563 = vld [vmem:[#allocation2 + $0x50] sm:$0xff]
      %v564 = vld [vmem:[#allocation2 + $0x58] sm:$0xff]
      %v565 = vld [vmem:[#allocation2 + $0x60] sm:$0xff]
      %v566 = vld [vmem:[#allocation2 + $0x68] sm:$0xff]
      %v567 = vld [vmem:[#allocation2 + $0x70] sm:$0xff]
      %v568 = vld [vmem:[#allocation2 + $0x78] sm:$0xff]
      %v569 = vld [vmem:[#allocation2 + $0x80] sm:$0xff]
      %v570 = vld [vmem:[#allocation2 + $0x88] sm:$0xff]
      %v571 = vld [vmem:[#allocation2 + $0x90] sm:$0xff]
      %v572 = vld [vmem:[#allocation2 + $0x98] sm:$0xff]
      %v573 = vld [vmem:[#allocation2 + $0xa0] sm:$0xff]
      %v574 = vld [vmem:[#allocation2 + $0xa8] sm:$0xff]
      %v575 = vld [vmem:[#allocation2 + $0xb0] sm:$0xff]
      %v576 = vld [vmem:[#allocation2 + $0xb8] sm:$0xff]
      %v577 = vld [vmem:[#allocation2 + $0xc0] sm:$0xff]
      %v578 = vld [vmem:[#allocation2 + $0xc8] sm:$0xff]
      %v579 = vld [vmem:[#allocation2 + $0xd0] sm:$0xff]
      %v580 = vld [vmem:[#allocation2 + $0xd8] sm:$0xff]
      %v581 = vld [vmem:[#allocation2 + $0xe0] sm:$0xff]
      %v582 = vld [vmem:[#allocation2 + $0xe8] sm:$0xff]
      %v583 = vld [vmem:[#allocation2 + $0xf0] sm:$0xff]
      %v584 = vld [vmem:[#allocation2 + $0xf8] sm:$0xff]
      %v585 = vld [vmem:[#allocation2 + $0x100] sm:$0xff]
      %v586 = vld [vmem:[#allocation2 + $0x108] sm:$0xff]
      %v587 = vld [vmem:[#allocation2 + $0x110] sm:$0xff]
      %v588 = vld [vmem:[#allocation2 + $0x118] sm:$0xff]
      %v589 = vld [vmem:[#allocation2 + $0x120] sm:$0xff]
      %v590 = vld [vmem:[#allocation2 + $0x128] sm:$0xff]
      %v591 = vld [vmem:[#allocation2 + $0x130] sm:$0xff]
      %v592 = vld [vmem:[#allocation2 + $0x138] sm:$0xff]
      %v593 = vld [vmem:[#allocation2 + $0x140] sm:$0xff]
      %v594 = vld [vmem:[#allocation2 + $0x148] sm:$0xff]
      %v595 = vld [vmem:[#allocation2 + $0x150] sm:$0xff]
      %v596 = vld [vmem:[#allocation2 + $0x158] sm:$0xff]
      %v597 = vld [vmem:[#allocation2 + $0x160] sm:$0xff]
      %v598 = vld [vmem:[#allocation2 + $0x168] sm:$0xff]
      %v599 = vld [vmem:[#allocation2 + $0x170] sm:$0xff]
      %v600 = vld [vmem:[#allocation2 + $0x178] sm:$0xff]
      %v601 = vld [vmem:[#allocation2 + $0x180] sm:$0xff]
      %v602 = vld [vmem:[#allocation2 + $0x188] sm:$0xff]
      %v603 = vld [vmem:[#allocation2 + $0x190] sm:$0xff]
      %v604 = vld [vmem:[#allocation2 + $0x198] sm:$0xff]
      %v605 = vld [vmem:[#allocation2 + $0x1a0] sm:$0xff]
      %v606 = vld [vmem:[#allocation2 + $0x1a8] sm:$0xff]
      %v607 = vpack.c.bf16 %v556, %v553
      %v608 = vpack.c.bf16 %v557, %v554
      %v609 = vpack.c.bf16 %v558, %v555
      %v610 = vpack.c.bf16 %v562, %v559
      %v611 = vpack.c.bf16 %v563, %v560
      %v612 = vpack.c.bf16 %v564, %v561
      %v613 = vpack.c.bf16 %v568, %v565
      %v614 = vpack.c.bf16 %v569, %v566
      %v615 = vpack.c.bf16 %v570, %v567
      %v616 = vpack.c.bf16 %v574, %v571
      %v617 = vpack.c.bf16 %v575, %v572
      %v618 = vpack.c.bf16 %v576, %v573
      %v619 = vpack.c.bf16 %v580, %v577
      %v620 = vpack.c.bf16 %v581, %v578
      %v621 = vpack.c.bf16 %v582, %v579
      %v622 = vpack.c.bf16 %v586, %v583
      %v623 = vpack.c.bf16 %v587, %v584
      %v624 = vpack.c.bf16 %v588, %v585
      %v625 = vpack.c.bf16 %v592, %v589
      %v626 = vpack.c.bf16 %v593, %v590
      %v627 = vpack.c.bf16 %v594, %v591
      %v628 = vpack.c.bf16 %v598, %v595
      %v629 = vpack.c.bf16 %v599, %v596
      %v630 = vpack.c.bf16 %v600, %v597
      %v631 = vpack.c.bf16 %v604, %v601
      %v632 = vpack.c.bf16 %v605, %v602
      %v633 = vpack.c.bf16 %v606, %v603
      %v634 = vld [vmem:[%s2] sm:$0xff]
      %v635 = vld [vmem:[%s2 + $0x8] sm:$0xff]
      %v636 = vld [vmem:[%s2 + $0x10] sm:$0xff]
      %v637 = vld [vmem:[%s2 + $0x18] sm:$0xff]
      %v638 = vld [vmem:[%s4] sm:$0xff]
      %v639 = vld [vmem:[%s4 + $0x8] sm:$0xff]
      %v640 = vld [vmem:[%s4 + $0x10] sm:$0xff]
      %v641 = vld [vmem:[%s4 + $0x18] sm:$0xff]
      %643 = vset.pattern.permute.xlu0 0
      %644 = vperm.xlu0 %643, %v638
      %v645 = vpop.permute.xlu0 %644
      %648 = vset.pattern.permute.xlu0 0
      %649 = vperm.xlu0 %648, %v639
      %v650 = vpop.permute.xlu0 %649
      %653 = vset.pattern.permute.xlu0 0
      %654 = vperm.xlu0 %653, %v640
      %v655 = vpop.permute.xlu0 %654
      %658 = vset.pattern.permute.xlu0 0
      %659 = vperm.xlu0 %658, %v641
      %v660 = vpop.permute.xlu0 %659
      %v666 = vunpack.c.l.b16 %v634
      %v667 = vunpack.c.h.b16 %v634
      %v668 = vunpack.c.l.b16 %v635
      %v669 = vunpack.c.h.b16 %v635
      %v670 = vunpack.c.l.b16 %v636
      %v671 = vunpack.c.h.b16 %v636
      %v672 = vunpack.c.l.b16 %v637
      %v673 = vunpack.c.h.b16 %v637
      %v674 = vpack.c.b16 %v668, %v666
      %v675 = vpack.c.b16 %v669, %v667
      %v676 = vpack.c.b16 %v672, %v670
      %v677 = vpack.c.b16 %v673, %v671
      %vm680 = vcmask 130048
      %v682 = vsel %vm680, %v675, 0
      %v685 = vsel %vm680, %v677, 0
      %687 = vmatprep.subr.bf16.mxu0 %v608
      %688 = vmatpush1.bf16.msra.mxu0 %v607
      %689 = vmatprep.subr.bf16.mxu0 %v611
      %690 = vmatpush1.bf16.msra.mxu0 %v610
      %691 = vmatprep.subr.bf16.mxu0 %v614
      %692 = vmatpush1.bf16.msra.mxu0 %v613
      %693 = vmatprep.subr.bf16.mxu0 %v617
      %694 = vmatpush1.bf16.msra.mxu0 %v616
      %695 = vmatprep.subr.bf16.mxu0 %v620
      %696 = vmatpush1.bf16.msra.mxu0 %v619
      %697 = vmatprep.subr.bf16.mxu0 %v623
      %698 = vmatpush1.bf16.msra.mxu0 %v622
      %699 = vmatprep.subr.bf16.mxu0 %v626
      %700 = vmatpush1.bf16.msra.mxu0 %v625
      %701 = vmatprep.subr.bf16.mxu0 %v629
      %702 = vmatpush1.bf16.msra.mxu0 %v628
      %703 = vmatprep.subr.bf16.mxu0 %v632
      %704 = vmatpush1.bf16.msra.mxu0 %v631
      %705 = vmatprep.subr.bf16.mxu0 0
      %706 = vmatpush1.bf16.msra.mxu0 0
      %707 = vmatprep.subr.bf16.mxu0 0
      %708 = vmatpush1.bf16.msra.mxu0 0
      %709 = vmatprep.subr.bf16.mxu0 0
      %710 = vmatpush1.bf16.msra.mxu0 0
      %711 = vmatprep.subr.bf16.mxu0 0
      %712 = vmatpush1.bf16.msra.mxu0 0
      %713 = vmatprep.subr.bf16.mxu0 0
      %714 = vmatpush1.bf16.msra.mxu0 0
      %715 = vmatprep.subr.bf16.mxu0 0
      %716 = vmatpush1.bf16.msra.mxu0 0
      %717 = vmatprep.subr.bf16.mxu0 0
      %718 = vmatpush1.bf16.msra.mxu0 0
      %719 = vmatprep.mubr.bf16.mxu0 %v682
      %720 = vmatmul.mubr.bf16.gmra.mrb[0].mxu0 %v674
      %v721 = vpop.f32.mrb[0].mxu0
      %v722 = vadd.f32 %v645, %v721
      %v723 = vpop.f32.mrb[0].mxu0
      %v724 = vadd.f32 %v645, %v723
      %v725 = vpop.f32.mrb[0].mxu0
      %v726 = vadd.f32 %v650, %v725
      %v727 = vpop.f32.mrb[0].mxu0
      %v728 = vadd.f32 %v650, %v727
      %729 = vmatprep.mubr.bf16.mxu0 %v685
      %730 = vmatmul.mubr.bf16.gmra.mrb[0].mxu0 %v676
      %v731 = vpop.f32.mrb[0].mxu0
      %v732 = vadd.f32 %v655, %v731
      %v733 = vpop.f32.mrb[0].mxu0
      %v734 = vadd.f32 %v655, %v733
      %v735 = vpop.f32.mrb[0].mxu0
      %v736 = vadd.f32 %v660, %v735
      %v737 = vpop.f32.mrb[0].mxu0
      %v738 = vadd.f32 %v660, %v737
      %739 = vdwg.mxu0
      %740 = vmatprep.subr.bf16.mxu0 0
      %741 = vmatpush1.bf16.msra.mxu0 %v609
      %742 = vmatprep.subr.bf16.mxu0 0
      %743 = vmatpush1.bf16.msra.mxu0 %v612
      %744 = vmatprep.subr.bf16.mxu0 0
      %745 = vmatpush1.bf16.msra.mxu0 %v615
      %746 = vmatprep.subr.bf16.mxu0 0
      %747 = vmatpush1.bf16.msra.mxu0 %v618
      %748 = vmatprep.subr.bf16.mxu0 0
      %749 = vmatpush1.bf16.msra.mxu0 %v621
      %750 = vmatprep.subr.bf16.mxu0 0
      %751 = vmatpush1.bf16.msra.mxu0 %v624
      %752 = vmatprep.subr.bf16.mxu0 0
      %753 = vmatpush1.bf16.msra.mxu0 %v627
      %754 = vmatprep.subr.bf16.mxu0 0
      %755 = vmatpush1.bf16.msra.mxu0 %v630
      %756 = vmatprep.subr.bf16.mxu0 0
      %757 = vmatpush1.bf16.msra.mxu0 %v633
      %758 = vmatprep.subr.bf16.mxu0 0
      %759 = vmatpush1.bf16.msra.mxu0 0
      %760 = vmatprep.subr.bf16.mxu0 0
      %761 = vmatpush1.bf16.msra.mxu0 0
      %762 = vmatprep.subr.bf16.mxu0 0
      %763 = vmatpush1.bf16.msra.mxu0 0
      %764 = vmatprep.subr.bf16.mxu0 0
      %765 = vmatpush1.bf16.msra.mxu0 0
      %766 = vmatprep.subr.bf16.mxu0 0
      %767 = vmatpush1.bf16.msra.mxu0 0
      %768 = vmatprep.subr.bf16.mxu0 0
      %769 = vmatpush1.bf16.msra.mxu0 0
      %770 = vmatprep.subr.bf16.mxu0 0
      %771 = vmatpush1.bf16.msra.mxu0 0
      %772 = vmatprep.mubr.bf16.mxu0 %v682
      %773 = vmatmul.mubr.bf16.gmra.mrb[0].mxu0 %v674
      %v774 = vpop.f32.mrb[0].mxu0
      %v775 = vadd.f32 %v645, %v774
      %v776 = vpop.f32.mrb[0].mxu0
      %v777 = vpop.f32.mrb[0].mxu0
      %v778 = vadd.f32 %v650, %v777
      %v779 = vpop.f32.mrb[0].mxu0
      %780 = vmatprep.mubr.bf16.mxu0 %v685
      %781 = vmatmul.mubr.bf16.gmra.mrb[0].mxu0 %v676
      %v782 = vpop.f32.mrb[0].mxu0
      %v783 = vadd.f32 %v655, %v782
      %v784 = vpop.f32.mrb[0].mxu0
      %v785 = vpop.f32.mrb[0].mxu0
      %v786 = vadd.f32 %v660, %v785
      %v787 = vpop.f32.mrb[0].mxu0
      %788 = vdwg.mxu0
      %v789 = vld [vmem:[#allocation4] sm:$0xff]
      %v790 = vld [vmem:[#allocation4 + $0x8] sm:$0xff]
      %v791 = vld [vmem:[#allocation4 + $0x10] sm:$0xff]
      %v792 = vmul.f32 %v722, 0.5
      %v793 = vmul.f32 %v724, 0.5
      %v794 = vmul.f32 %v775, 0.5
      %v795 = vtanh.pop %v792
      %v796 = vtanh.pop %v793
      %v797 = vtanh.pop %v794
      %v798 = vmul.f32 %v795, 0.5
      %v799 = vmul.f32 %v796, 0.5
      %v800 = vmul.f32 %v797, 0.5
      %v801 = vadd.f32 %v798, 0.5
      %v802 = vadd.f32 %v799, 0.5
      %v803 = vadd.f32 %v800, 0.5
      %v804 = vmul.f32 %v726, 0.5
      %v805 = vmul.f32 %v728, 0.5
      %v806 = vmul.f32 %v778, 0.5
      %v807 = vtanh.pop %v804
      %v808 = vtanh.pop %v805
      %v809 = vtanh.pop %v806
      %v810 = vmul.f32 %v807, 0.5
      %v811 = vmul.f32 %v808, 0.5
      %v812 = vmul.f32 %v809, 0.5
      %v813 = vadd.f32 %v810, 0.5
      %v814 = vadd.f32 %v811, 0.5
      %v815 = vadd.f32 %v812, 0.5
      %v816 = vmul.f32 %v813, %v789
      %v817 = vmul.f32 %v814, %v790
      %v818 = vmul.f32 %v815, %v791
      %v819 = vtanh.pop %v732
      %v820 = vtanh.pop %v734
      %v821 = vtanh.pop %v783
      %v822 = vmul.f32 %v801, %v819
      %v823 = vmul.f32 %v802, %v820
      %v824 = vmul.f32 %v803, %v821
      %v825 = vadd.f32 %v816, %v822
      %v826 = vadd.f32 %v817, %v823
      %v827 = vadd.f32 %v818, %v824
      %v829 = vlaneseq
      %v830 = vshrl.u32 %v829, 7
      %v831 = vsub.s32 0, %v830
      %v832 = vrot.slane %v552, %v831
      %v833 = vlaneseq
      %v834 = vshrl.u32 %v833, 7
      %v835 = vsub.s32 1, %v834
      %v836 = vrot.slane %v552, %v835
      %v837 = vlaneseq
      %v838 = vshrl.u32 %v837, 7
      %v839 = vsub.s32 2, %v838
      %v840 = vrot.slane %v552, %v839
      %v844 = vmul.f32 %v825, %v832
      %v845 = vmul.f32 %v826, %v836
      %v846 = vmul.f32 %v827, %v840
      %v847 = vmul.f32 %v736, 0.5
      %v848 = vmul.f32 %v738, 0.5
      %v849 = vmul.f32 %v786, 0.5
      %v850 = vtanh.pop %v847
      %v851 = vtanh.pop %v848
      %v852 = vtanh.pop %v849
      %v853 = vmul.f32 %v850, 0.5
      %v854 = vmul.f32 %v851, 0.5
      %v855 = vmul.f32 %v852, 0.5
      %v856 = vadd.f32 %v853, 0.5
      %v857 = vadd.f32 %v854, 0.5
      %v858 = vadd.f32 %v855, 0.5
      %v859 = vtanh.pop %v844
      %v860 = vtanh.pop %v845
      %v861 = vtanh.pop %v846
      %v862 = vmul.f32 %v856, %v859
      %v863 = vmul.f32 %v857, %v860
      %v864 = vmul.f32 %v858, %v861
      %v865 = vmul.f32 %v862, %v832
      %v866 = vmul.f32 %v863, %v836
      %v867 = vmul.f32 %v864, %v840
      %868 = vst [vmem:[#allocation4] sm:$0xff] %v844
      %869 = vst [vmem:[#allocation4 + $0x8] sm:$0xff] %v845
      %870 = vst [vmem:[#allocation4 + $0x10] sm:$0xff] %v846
      %872 = vrot.lane.b32.xlu0 %v867, 19
      %v873 = vpop.permute.xlu0 %872
      %877 = vrot.lane.b32.xlu0 %v865, 19
      %v878 = vpop.permute.xlu0 %877
      %879 = vrot.lane.b32.xlu0 %v866, 19
      %v880 = vpop.permute.xlu0 %879
      %v881 = vsel %vm419, %v878, %v880
      %v882 = vsel %vm419, %v880, %v873
      %v886 = vsel %vm419, %v873, %v878
      %887 = vst [vmem:[#allocation2 + $0x18] sm:$0xff] %v886
      %888 = vst [vmem:[#allocation2 + $0x20] sm:$0xff] %v881
      %889 = vst [vmem:[#allocation2 + $0x28] sm:$0xff] %v882
      %890 = vst [vmem:[#allocation3] sm:$0xff] %v886
      %891 = vst [vmem:[#allocation3 + $0x8] sm:$0xff] %v881
      %892 = vst [vmem:[#allocation3 + $0x10] sm:$0xff] %v882
      %893 = vrot.lane.b32.xlu0 %v867, 18
      %v894 = vpop.permute.xlu0 %893
      %896 = vrot.lane.b32.xlu0 %v865, 18
      %v897 = vpop.permute.xlu0 %896
      %898 = vrot.lane.b32.xlu0 %v866, 18
      %v899 = vpop.permute.xlu0 %898
      %v900 = vsel %vm436, %v897, %v899
      %v901 = vsel %vm436, %v899, %v894
      %v905 = vsel %vm436, %v894, %v897
      %906 = vst [vmem:[#allocation2 + $0x48] sm:$0xff] %v905
      %907 = vst [vmem:[#allocation2 + $0x50] sm:$0xff] %v900
      %908 = vst [vmem:[#allocation2 + $0x58] sm:$0xff] %v901
      %909 = vst [vmem:[#allocation3 + $0x30] sm:$0xff] %v905
      %910 = vst [vmem:[#allocation3 + $0x38] sm:$0xff] %v900
      %911 = vst [vmem:[#allocation3 + $0x40] sm:$0xff] %v901
      %912 = vrot.lane.b32.xlu0 %v867, 17
      %v913 = vpop.permute.xlu0 %912
      %915 = vrot.lane.b32.xlu0 %v865, 17
      %v916 = vpop.permute.xlu0 %915
      %917 = vrot.lane.b32.xlu0 %v866, 17
      %v918 = vpop.permute.xlu0 %917
      %v919 = vsel %vm453, %v916, %v918
      %v920 = vsel %vm453, %v918, %v913
      %v924 = vsel %vm453, %v913, %v916
      %925 = vst [vmem:[#allocation2 + $0x78] sm:$0xff] %v924
      %926 = vst [vmem:[#allocation2 + $0x80] sm:$0xff] %v919
      %927 = vst [vmem:[#allocation2 + $0x88] sm:$0xff] %v920
      %928 = vst [vmem:[#allocation3 + $0x60] sm:$0xff] %v924
      %929 = vst [vmem:[#allocation3 + $0x68] sm:$0xff] %v919
      %930 = vst [vmem:[#allocation3 + $0x70] sm:$0xff] %v920
      %931 = vrot.lane.b32.xlu0 %v867, 1
      %v932 = vpop.permute.xlu0 %931
      %934 = vrot.lane.b32.xlu0 %v865, 1
      %v935 = vpop.permute.xlu0 %934
      %936 = vrot.lane.b32.xlu0 %v866, 1
      %v937 = vpop.permute.xlu0 %936
      %v938 = vsel %vm470, %v935, %v937
      %v939 = vsel %vm470, %v937, %v932
      %v943 = vsel %vm470, %v932, %v935
      %944 = vst [vmem:[#allocation2 + $0xa8] sm:$0xff] %v943
      %945 = vst [vmem:[#allocation2 + $0xb0] sm:$0xff] %v938
      %946 = vst [vmem:[#allocation2 + $0xb8] sm:$0xff] %v939
      %947 = vst [vmem:[#allocation3 + $0x90] sm:$0xff] %v943
      %948 = vst [vmem:[#allocation3 + $0x98] sm:$0xff] %v938
      %949 = vst [vmem:[#allocation3 + $0xa0] sm:$0xff] %v939
      %950 = vst [vmem:[#allocation2 + $0xd8] sm:$0xff] %v865
      %951 = vst [vmem:[#allocation2 + $0xe0] sm:$0xff] %v866
      %952 = vst [vmem:[#allocation2 + $0xe8] sm:$0xff] %v867
      %953 = vst [vmem:[#allocation3 + $0xc0] sm:$0xff] %v865
      %954 = vst [vmem:[#allocation3 + $0xc8] sm:$0xff] %v866
      %955 = vst [vmem:[#allocation3 + $0xd0] sm:$0xff] %v867
      %956 = vrot.lane.b32.xlu0 %v865, 127
      %v957 = vpop.permute.xlu0 %956
      %958 = vrot.lane.b32.xlu0 %v866, 127
      %v959 = vpop.permute.xlu0 %958
      %960 = vrot.lane.b32.xlu0 %v867, 127
      %v961 = vpop.permute.xlu0 %960
      %v962 = vsel %vm490, %v957, %v959
      %v963 = vsel %vm490, %v959, %v961
      %v968 = vsel %vm490, %v961, %v957
      %969 = vst [vmem:[#allocation2 + $0x108] sm:$0xff] %v962
      %970 = vst [vmem:[#allocation2 + $0x110] sm:$0xff] %v963
      %971 = vst [vmem:[#allocation2 + $0x118] sm:$0xff] %v968
      %972 = vst [vmem:[#allocation3 + $0xf0] sm:$0xff] %v962
      %973 = vst [vmem:[#allocation3 + $0xf8] sm:$0xff] %v963
      %974 = vst [vmem:[#allocation3 + $0x100] sm:$0xff] %v968
      %975 = vrot.lane.b32.xlu0 %v865, 111
      %v976 = vpop.permute.xlu0 %975
      %977 = vrot.lane.b32.xlu0 %v866, 111
      %v978 = vpop.permute.xlu0 %977
      %979 = vrot.lane.b32.xlu0 %v867, 111
      %v980 = vpop.permute.xlu0 %979
      %v981 = vsel %vm507, %v976, %v978
      %v982 = vsel %vm507, %v978, %v980
      %v987 = vsel %vm507, %v980, %v976
      %988 = vst [vmem:[#allocation2 + $0x138] sm:$0xff] %v981
      %989 = vst [vmem:[#allocation2 + $0x140] sm:$0xff] %v982
      %990 = vst [vmem:[#allocation2 + $0x148] sm:$0xff] %v987
      %991 = vst [vmem:[#allocation3 + $0x120] sm:$0xff] %v981
      %992 = vst [vmem:[#allocation3 + $0x128] sm:$0xff] %v982
      %993 = vst [vmem:[#allocation3 + $0x130] sm:$0xff] %v987
      %994 = vrot.lane.b32.xlu0 %v865, 110
      %v995 = vpop.permute.xlu0 %994
      %996 = vrot.lane.b32.xlu0 %v866, 110
      %v997 = vpop.permute.xlu0 %996
      %998 = vrot.lane.b32.xlu0 %v867, 110
      %v999 = vpop.permute.xlu0 %998
      %v1000 = vsel %vm524, %v995, %v997
      %v1001 = vsel %vm524, %v997, %v999
      %v1006 = vsel %vm524, %v999, %v995
      %1007 = vst [vmem:[#allocation2 + $0x168] sm:$0xff] %v1000
      %1008 = vst [vmem:[#allocation2 + $0x170] sm:$0xff] %v1001
      %1009 = vst [vmem:[#allocation2 + $0x178] sm:$0xff] %v1006
      %1010 = vst [vmem:[#allocation3 + $0x150] sm:$0xff] %v1000
      %1011 = vst [vmem:[#allocation3 + $0x158] sm:$0xff] %v1001
      %1012 = vst [vmem:[#allocation3 + $0x160] sm:$0xff] %v1006
      %1013 = vrot.lane.b32.xlu0 %v865, 109
      %v1014 = vpop.permute.xlu0 %1013
      %1015 = vrot.lane.b32.xlu0 %v866, 109
      %v1016 = vpop.permute.xlu0 %1015
      %1017 = vrot.lane.b32.xlu0 %v867, 109
      %v1018 = vpop.permute.xlu0 %1017
      %v1019 = vsel %vm541, %v1014, %v1016
      %v1020 = vsel %vm541, %v1016, %v1018
      %v1025 = vsel %vm541, %v1018, %v1014
      %1026 = vst [vmem:[#allocation2 + $0x198] sm:$0xff] %v1019
      %1027 = vst [vmem:[#allocation2 + $0x1a0] sm:$0xff] %v1020
      %1028 = vst [vmem:[#allocation2 + $0x1a8] sm:$0xff] %v1025
      %1029 = vst [vmem:[#allocation3 + $0x180] sm:$0xff] %v1019
      %1030 = vst [vmem:[#allocation3 + $0x188] sm:$0xff] %v1020
      %1031 = vst [vmem:[#allocation3 + $0x190] sm:$0xff] %v1025
      %v1032 = vld [vmem:[#allocation3] sm:$0xff]
      %v1033 = vld [vmem:[#allocation3 + $0x8] sm:$0xff]
      %v1034 = vld [vmem:[#allocation3 + $0x10] sm:$0xff]
      %v1035 = vld [vmem:[#allocation3 + $0x18] sm:$0xff]
      %v1036 = vld [vmem:[#allocation3 + $0x20] sm:$0xff]
      %v1037 = vld [vmem:[#allocation3 + $0x28] sm:$0xff]
      %v1038 = vld [vmem:[#allocation3 + $0x30] sm:$0xff]
      %v1039 = vld [vmem:[#allocation3 + $0x38] sm:$0xff]
      %v1040 = vld [vmem:[#allocation3 + $0x40] sm:$0xff]
      %v1041 = vld [vmem:[#allocation3 + $0x48] sm:$0xff]
      %v1042 = vld [vmem:[#allocation3 + $0x50] sm:$0xff]
      %v1043 = vld [vmem:[#allocation3 + $0x58] sm:$0xff]
      %v1044 = vld [vmem:[#allocation3 + $0x60] sm:$0xff]
      %v1045 = vld [vmem:[#allocation3 + $0x68] sm:$0xff]
      %v1046 = vld [vmem:[#allocation3 + $0x70] sm:$0xff]
      %v1047 = vld [vmem:[#allocation3 + $0x78] sm:$0xff]
      %v1048 = vld [vmem:[#allocation3 + $0x80] sm:$0xff]
      %v1049 = vld [vmem:[#allocation3 + $0x88] sm:$0xff]
      %v1050 = vld [vmem:[#allocation3 + $0x90] sm:$0xff]
      %v1051 = vld [vmem:[#allocation3 + $0x98] sm:$0xff]
      %v1052 = vld [vmem:[#allocation3 + $0xa0] sm:$0xff]
      %v1053 = vld [vmem:[#allocation3 + $0xa8] sm:$0xff]
      %v1054 = vld [vmem:[#allocation3 + $0xb0] sm:$0xff]
      %v1055 = vld [vmem:[#allocation3 + $0xb8] sm:$0xff]
      %v1056 = vld [vmem:[#allocation3 + $0xc0] sm:$0xff]
      %v1057 = vld [vmem:[#allocation3 + $0xc8] sm:$0xff]
      %v1058 = vld [vmem:[#allocation3 + $0xd0] sm:$0xff]
      %v1059 = vld [vmem:[#allocation3 + $0xd8] sm:$0xff]
      %v1060 = vld [vmem:[#allocation3 + $0xe0] sm:$0xff]
      %v1061 = vld [vmem:[#allocation3 + $0xe8] sm:$0xff]
      %v1062 = vld [vmem:[#allocation3 + $0xf0] sm:$0xff]
      %v1063 = vld [vmem:[#allocation3 + $0xf8] sm:$0xff]
      %v1064 = vld [vmem:[#allocation3 + $0x100] sm:$0xff]
      %v1065 = vld [vmem:[#allocation3 + $0x108] sm:$0xff]
      %v1066 = vld [vmem:[#allocation3 + $0x110] sm:$0xff]
      %v1067 = vld [vmem:[#allocation3 + $0x118] sm:$0xff]
      %v1068 = vld [vmem:[#allocation3 + $0x120] sm:$0xff]
      %v1069 = vld [vmem:[#allocation3 + $0x128] sm:$0xff]
      %v1070 = vld [vmem:[#allocation3 + $0x130] sm:$0xff]
      %v1071 = vld [vmem:[#allocation3 + $0x138] sm:$0xff]
      %v1072 = vld [vmem:[#allocation3 + $0x140] sm:$0xff]
      %v1073 = vld [vmem:[#allocation3 + $0x148] sm:$0xff]
      %v1074 = vld [vmem:[#allocation3 + $0x150] sm:$0xff]
      %v1075 = vld [vmem:[#allocation3 + $0x158] sm:$0xff]
      %v1076 = vld [vmem:[#allocation3 + $0x160] sm:$0xff]
      %v1077 = vld [vmem:[#allocation3 + $0x168] sm:$0xff]
      %v1078 = vld [vmem:[#allocation3 + $0x170] sm:$0xff]
      %v1079 = vld [vmem:[#allocation3 + $0x178] sm:$0xff]
      %v1080 = vld [vmem:[#allocation3 + $0x180] sm:$0xff]
      %v1081 = vld [vmem:[#allocation3 + $0x188] sm:$0xff]
      %v1082 = vld [vmem:[#allocation3 + $0x190] sm:$0xff]
      %v1083 = vld [vmem:[#allocation3 + $0x198] sm:$0xff]
      %v1084 = vld [vmem:[#allocation3 + $0x1a0] sm:$0xff]
      %v1085 = vld [vmem:[#allocation3 + $0x1a8] sm:$0xff]
      %v1086 = vpack.c.bf16 %v1035, %v1032
      %v1087 = vpack.c.bf16 %v1036, %v1033
      %v1088 = vpack.c.bf16 %v1037, %v1034
      %v1089 = vpack.c.bf16 %v1041, %v1038
      %v1090 = vpack.c.bf16 %v1042, %v1039
      %v1091 = vpack.c.bf16 %v1043, %v1040
      %v1092 = vpack.c.bf16 %v1047, %v1044
      %v1093 = vpack.c.bf16 %v1048, %v1045
      %v1094 = vpack.c.bf16 %v1049, %v1046
      %v1095 = vpack.c.bf16 %v1053, %v1050
      %v1096 = vpack.c.bf16 %v1054, %v1051
      %v1097 = vpack.c.bf16 %v1055, %v1052
      %v1098 = vpack.c.bf16 %v1059, %v1056
      %v1099 = vpack.c.bf16 %v1060, %v1057
      %v1100 = vpack.c.bf16 %v1061, %v1058
      %v1101 = vpack.c.bf16 %v1065, %v1062
      %v1102 = vpack.c.bf16 %v1066, %v1063
      %v1103 = vpack.c.bf16 %v1067, %v1064
      %v1104 = vpack.c.bf16 %v1071, %v1068
      %v1105 = vpack.c.bf16 %v1072, %v1069
      %v1106 = vpack.c.bf16 %v1073, %v1070
      %v1107 = vpack.c.bf16 %v1077, %v1074
      %v1108 = vpack.c.bf16 %v1078, %v1075
      %v1109 = vpack.c.bf16 %v1079, %v1076
      %v1110 = vpack.c.bf16 %v1083, %v1080
      %v1111 = vpack.c.bf16 %v1084, %v1081
      %v1112 = vpack.c.bf16 %v1085, %v1082
      %v1113 = vld [vmem:[%s3] sm:$0xff]
      %v1114 = vld [vmem:[%s3 + $0x8] sm:$0xff]
      %v1115 = vld [vmem:[%s3 + $0x10] sm:$0xff]
      %v1116 = vld [vmem:[%s3 + $0x18] sm:$0xff]
      %v1117 = vld [vmem:[%s5] sm:$0xff]
      %v1118 = vld [vmem:[%s5 + $0x8] sm:$0xff]
      %v1119 = vld [vmem:[%s5 + $0x10] sm:$0xff]
      %v1120 = vld [vmem:[%s5 + $0x18] sm:$0xff]
      %1122 = vset.pattern.permute.xlu0 0
      %1123 = vperm.xlu0 %1122, %v1117
      %v1124 = vpop.permute.xlu0 %1123
      %1127 = vset.pattern.permute.xlu0 0
      %1128 = vperm.xlu0 %1127, %v1118
      %v1129 = vpop.permute.xlu0 %1128
      %1132 = vset.pattern.permute.xlu0 0
      %1133 = vperm.xlu0 %1132, %v1119
      %v1134 = vpop.permute.xlu0 %1133
      %1137 = vset.pattern.permute.xlu0 0
      %1138 = vperm.xlu0 %1137, %v1120
      %v1139 = vpop.permute.xlu0 %1138
      %v1145 = vunpack.c.l.b16 %v1113
      %v1146 = vunpack.c.h.b16 %v1113
      %v1147 = vunpack.c.l.b16 %v1114
      %v1148 = vunpack.c.h.b16 %v1114
      %v1149 = vunpack.c.l.b16 %v1115
      %v1150 = vunpack.c.h.b16 %v1115
      %v1151 = vunpack.c.l.b16 %v1116
      %v1152 = vunpack.c.h.b16 %v1116
      %v1153 = vpack.c.b16 %v1147, %v1145
      %v1154 = vpack.c.b16 %v1148, %v1146
      %v1155 = vpack.c.b16 %v1151, %v1149
      %v1156 = vpack.c.b16 %v1152, %v1150
      %v1160 = vsel %vm680, %v1154, 0
      %v1163 = vsel %vm680, %v1156, 0
      %1165 = vmatprep.subr.bf16.mxu0 %v1087
      %1166 = vmatpush1.bf16.msra.mxu0 %v1086
      %1167 = vmatprep.subr.bf16.mxu0 %v1090
      %1168 = vmatpush1.bf16.msra.mxu0 %v1089
      %1169 = vmatprep.subr.bf16.mxu0 %v1093
      %1170 = vmatpush1.bf16.msra.mxu0 %v1092
      %1171 = vmatprep.subr.bf16.mxu0 %v1096
      %1172 = vmatpush1.bf16.msra.mxu0 %v1095
      %1173 = vmatprep.subr.bf16.mxu0 %v1099
      %1174 = vmatpush1.bf16.msra.mxu0 %v1098
      %1175 = vmatprep.subr.bf16.mxu0 %v1102
      %1176 = vmatpush1.bf16.msra.mxu0 %v1101
      %1177 = vmatprep.subr.bf16.mxu0 %v1105
      %1178 = vmatpush1.bf16.msra.mxu0 %v1104
      %1179 = vmatprep.subr.bf16.mxu0 %v1108
      %1180 = vmatpush1.bf16.msra.mxu0 %v1107
      %1181 = vmatprep.subr.bf16.mxu0 %v1111
      %1182 = vmatpush1.bf16.msra.mxu0 %v1110
      %1183 = vmatprep.subr.bf16.mxu0 0
      %1184 = vmatpush1.bf16.msra.mxu0 0
      %1185 = vmatprep.subr.bf16.mxu0 0
      %1186 = vmatpush1.bf16.msra.mxu0 0
      %1187 = vmatprep.subr.bf16.mxu0 0
      %1188 = vmatpush1.bf16.msra.mxu0 0
      %1189 = vmatprep.subr.bf16.mxu0 0
      %1190 = vmatpush1.bf16.msra.mxu0 0
      %1191 = vmatprep.subr.bf16.mxu0 0
      %1192 = vmatpush1.bf16.msra.mxu0 0
      %1193 = vmatprep.subr.bf16.mxu0 0
      %1194 = vmatpush1.bf16.msra.mxu0 0
      %1195 = vmatprep.subr.bf16.mxu0 0
      %1196 = vmatpush1.bf16.msra.mxu0 0
      %1197 = vmatprep.mubr.bf16.mxu0 %v1160
      %1198 = vmatmul.mubr.bf16.gmra.mrb[0].mxu0 %v1153
      %v1199 = vpop.f32.mrb[0].mxu0
      %v1200 = vadd.f32 %v1124, %v1199
      %v1201 = vpop.f32.mrb[0].mxu0
      %v1202 = vadd.f32 %v1124, %v1201
      %v1203 = vpop.f32.mrb[0].mxu0
      %v1204 = vadd.f32 %v1129, %v1203
      %v1205 = vpop.f32.mrb[0].mxu0
      %v1206 = vadd.f32 %v1129, %v1205
      %1207 = vmatprep.mubr.bf16.mxu0 %v1163
      %1208 = vmatmul.mubr.bf16.gmra.mrb[0].mxu0 %v1155
      %v1209 = vpop.f32.mrb[0].mxu0
      %v1210 = vadd.f32 %v1134, %v1209
      %v1211 = vpop.f32.mrb[0].mxu0
      %v1212 = vadd.f32 %v1134, %v1211
      %v1213 = vpop.f32.mrb[0].mxu0
      %v1214 = vadd.f32 %v1139, %v1213
      %v1215 = vpop.f32.mrb[0].mxu0
      %v1216 = vadd.f32 %v1139, %v1215
      %1217 = vdwg.mxu0
      %1218 = vmatprep.subr.bf16.mxu0 0
      %1219 = vmatpush1.bf16.msra.mxu0 %v1088
      %1220 = vmatprep.subr.bf16.mxu0 0
      %1221 = vmatpush1.bf16.msra.mxu0 %v1091
      %1222 = vmatprep.subr.bf16.mxu0 0
      %1223 = vmatpush1.bf16.msra.mxu0 %v1094
      %1224 = vmatprep.subr.bf16.mxu0 0
      %1225 = vmatpush1.bf16.msra.mxu0 %v1097
      %1226 = vmatprep.subr.bf16.mxu0 0
      %1227 = vmatpush1.bf16.msra.mxu0 %v1100
      %1228 = vmatprep.subr.bf16.mxu0 0
      %1229 = vmatpush1.bf16.msra.mxu0 %v1103
      %1230 = vmatprep.subr.bf16.mxu0 0
      %1231 = vmatpush1.bf16.msra.mxu0 %v1106
      %1232 = vmatprep.subr.bf16.mxu0 0
      %1233 = vmatpush1.bf16.msra.mxu0 %v1109
      %1234 = vmatprep.subr.bf16.mxu0 0
      %1235 = vmatpush1.bf16.msra.mxu0 %v1112
      %1236 = vmatprep.subr.bf16.mxu0 0
      %1237 = vmatpush1.bf16.msra.mxu0 0
      %1238 = vmatprep.subr.bf16.mxu0 0
      %1239 = vmatpush1.bf16.msra.mxu0 0
      %1240 = vmatprep.subr.bf16.mxu0 0
      %1241 = vmatpush1.bf16.msra.mxu0 0
      %1242 = vmatprep.subr.bf16.mxu0 0
      %1243 = vmatpush1.bf16.msra.mxu0 0
      %1244 = vmatprep.subr.bf16.mxu0 0
      %1245 = vmatpush1.bf16.msra.mxu0 0
      %1246 = vmatprep.subr.bf16.mxu0 0
      %1247 = vmatpush1.bf16.msra.mxu0 0
      %1248 = vmatprep.subr.bf16.mxu0 0
      %1249 = vmatpush1.bf16.msra.mxu0 0
      %1250 = vmatprep.mubr.bf16.mxu0 %v1160
      %1251 = vmatmul.mubr.bf16.gmra.mrb[0].mxu0 %v1153
      %v1252 = vpop.f32.mrb[0].mxu0
      %v1253 = vadd.f32 %v1124, %v1252
      %v1254 = vpop.f32.mrb[0].mxu0
      %v1255 = vpop.f32.mrb[0].mxu0
      %v1256 = vadd.f32 %v1129, %v1255
      %v1257 = vpop.f32.mrb[0].mxu0
      %1258 = vmatprep.mubr.bf16.mxu0 %v1163
      %1259 = vmatmul.mubr.bf16.gmra.mrb[0].mxu0 %v1155
      %v1260 = vpop.f32.mrb[0].mxu0
      %v1261 = vadd.f32 %v1134, %v1260
      %v1262 = vpop.f32.mrb[0].mxu0
      %v1263 = vpop.f32.mrb[0].mxu0
      %v1264 = vadd.f32 %v1139, %v1263
      %v1265 = vpop.f32.mrb[0].mxu0
      %1266 = vdwg.mxu0
      %v1267 = vld [vmem:[#allocation5] sm:$0xff]
      %v1268 = vld [vmem:[#allocation5 + $0x8] sm:$0xff]
      %v1269 = vld [vmem:[#allocation5 + $0x10] sm:$0xff]
      %v1270 = vmul.f32 %v1200, 0.5
      %v1271 = vmul.f32 %v1202, 0.5
      %v1272 = vmul.f32 %v1253, 0.5
      %v1273 = vtanh.pop %v1270
      %v1274 = vtanh.pop %v1271
      %v1275 = vtanh.pop %v1272
      %v1276 = vmul.f32 %v1273, 0.5
      %v1277 = vmul.f32 %v1274, 0.5
      %v1278 = vmul.f32 %v1275, 0.5
      %v1279 = vadd.f32 %v1276, 0.5
      %v1280 = vadd.f32 %v1277, 0.5
      %v1281 = vadd.f32 %v1278, 0.5
      %v1282 = vmul.f32 %v1204, 0.5
      %v1283 = vmul.f32 %v1206, 0.5
      %v1284 = vmul.f32 %v1256, 0.5
      %v1285 = vtanh.pop %v1282
      %v1286 = vtanh.pop %v1283
      %v1287 = vtanh.pop %v1284
      %v1288 = vmul.f32 %v1285, 0.5
      %v1289 = vmul.f32 %v1286, 0.5
      %v1290 = vmul.f32 %v1287, 0.5
      %v1291 = vadd.f32 %v1288, 0.5
      %v1292 = vadd.f32 %v1289, 0.5
      %v1293 = vadd.f32 %v1290, 0.5
      %v1294 = vmul.f32 %v1291, %v1267
      %v1295 = vmul.f32 %v1292, %v1268
      %v1296 = vmul.f32 %v1293, %v1269
      %v1297 = vtanh.pop %v1210
      %v1298 = vtanh.pop %v1212
      %v1299 = vtanh.pop %v1261
      %v1300 = vmul.f32 %v1279, %v1297
      %v1301 = vmul.f32 %v1280, %v1298
      %v1302 = vmul.f32 %v1281, %v1299
      %v1303 = vadd.f32 %v1294, %v1300
      %v1304 = vadd.f32 %v1295, %v1301
      %v1305 = vadd.f32 %v1296, %v1302
      %v1306 = vmul.f32 %v1303, %v832
      %v1307 = vmul.f32 %v1304, %v836
      %v1308 = vmul.f32 %v1305, %v840
      %v1309 = vmul.f32 %v1214, 0.5
      %v1310 = vmul.f32 %v1216, 0.5
      %v1311 = vmul.f32 %v1264, 0.5
      %v1312 = vtanh.pop %v1309
      %v1313 = vtanh.pop %v1310
      %v1314 = vtanh.pop %v1311
      %v1315 = vmul.f32 %v1312, 0.5
      %v1316 = vmul.f32 %v1313, 0.5
      %v1317 = vmul.f32 %v1314, 0.5
      %v1318 = vadd.f32 %v1315, 0.5
      %v1319 = vadd.f32 %v1316, 0.5
      %v1320 = vadd.f32 %v1317, 0.5
      %v1321 = vtanh.pop %v1306
      %v1322 = vtanh.pop %v1307
      %v1323 = vtanh.pop %v1308
      %v1324 = vmul.f32 %v1318, %v1321
      %v1325 = vmul.f32 %v1319, %v1322
      %v1326 = vmul.f32 %v1320, %v1323
      %v1327 = vmul.f32 %v1324, %v832
      %v1328 = vmul.f32 %v1325, %v836
      %v1329 = vmul.f32 %v1326, %v840
      %1330 = vst [vmem:[#allocation5] sm:$0xff] %v1306
      %1331 = vst [vmem:[#allocation5 + $0x8] sm:$0xff] %v1307
      %1332 = vst [vmem:[#allocation5 + $0x10] sm:$0xff] %v1308
      %1334 = vrot.lane.b32.xlu0 %v1329, 19
      %v1335 = vpop.permute.xlu0 %1334
      %1339 = vrot.lane.b32.xlu0 %v1327, 19
      %v1340 = vpop.permute.xlu0 %1339
      %1341 = vrot.lane.b32.xlu0 %v1328, 19
      %v1342 = vpop.permute.xlu0 %1341
      %v1343 = vsel %vm419, %v1340, %v1342
      %v1344 = vsel %vm419, %v1342, %v1335
      %v1348 = vsel %vm419, %v1335, %v1340
      %1349 = vst [vmem:[#allocation3 + $0x18] sm:$0xff] %v1348
      %1350 = vst [vmem:[#allocation3 + $0x20] sm:$0xff] %v1343
      %1351 = vst [vmem:[#allocation3 + $0x28] sm:$0xff] %v1344
      %1352 = vrot.lane.b32.xlu0 %v1329, 18
      %v1353 = vpop.permute.xlu0 %1352
      %1355 = vrot.lane.b32.xlu0 %v1327, 18
      %v1356 = vpop.permute.xlu0 %1355
      %1357 = vrot.lane.b32.xlu0 %v1328, 18
      %v1358 = vpop.permute.xlu0 %1357
      %v1359 = vsel %vm436, %v1356, %v1358
      %v1360 = vsel %vm436, %v1358, %v1353
      %v1364 = vsel %vm436, %v1353, %v1356
      %1365 = vst [vmem:[#allocation3 + $0x48] sm:$0xff] %v1364
      %1366 = vst [vmem:[#allocation3 + $0x50] sm:$0xff] %v1359
      %1367 = vst [vmem:[#allocation3 + $0x58] sm:$0xff] %v1360
      %1368 = vrot.lane.b32.xlu0 %v1329, 17
      %v1369 = vpop.permute.xlu0 %1368
      %1371 = vrot.lane.b32.xlu0 %v1327, 17
      %v1372 = vpop.permute.xlu0 %1371
      %1373 = vrot.lane.b32.xlu0 %v1328, 17
      %v1374 = vpop.permute.xlu0 %1373
      %v1375 = vsel %vm453, %v1372, %v1374
      %v1376 = vsel %vm453, %v1374, %v1369
      %v1380 = vsel %vm453, %v1369, %v1372
      %1381 = vst [vmem:[#allocation3 + $0x78] sm:$0xff] %v1380
      %1382 = vst [vmem:[#allocation3 + $0x80] sm:$0xff] %v1375
      %1383 = vst [vmem:[#allocation3 + $0x88] sm:$0xff] %v1376
      %1384 = vrot.lane.b32.xlu0 %v1329, 1
      %v1385 = vpop.permute.xlu0 %1384
      %1387 = vrot.lane.b32.xlu0 %v1327, 1
      %v1388 = vpop.permute.xlu0 %1387
      %1389 = vrot.lane.b32.xlu0 %v1328, 1
      %v1390 = vpop.permute.xlu0 %1389
      %v1391 = vsel %vm470, %v1388, %v1390
      %v1392 = vsel %vm470, %v1390, %v1385
      %v1396 = vsel %vm470, %v1385, %v1388
      %1397 = vst [vmem:[#allocation3 + $0xa8] sm:$0xff] %v1396
      %1398 = vst [vmem:[#allocation3 + $0xb0] sm:$0xff] %v1391
      %1399 = vst [vmem:[#allocation3 + $0xb8] sm:$0xff] %v1392
      %1400 = vst [vmem:[#allocation3 + $0xd8] sm:$0xff] %v1327
      %1401 = vst [vmem:[#allocation3 + $0xe0] sm:$0xff] %v1328
      %1402 = vst [vmem:[#allocation3 + $0xe8] sm:$0xff] %v1329
      %1403 = vrot.lane.b32.xlu0 %v1327, 127
      %v1404 = vpop.permute.xlu0 %1403
      %1405 = vrot.lane.b32.xlu0 %v1328, 127
      %v1406 = vpop.permute.xlu0 %1405
      %1407 = vrot.lane.b32.xlu0 %v1329, 127
      %v1408 = vpop.permute.xlu0 %1407
      %v1409 = vsel %vm490, %v1404, %v1406
      %v1410 = vsel %vm490, %v1406, %v1408
      %v1415 = vsel %vm490, %v1408, %v1404
      %1416 = vst [vmem:[#allocation3 + $0x108] sm:$0xff] %v1409
      %1417 = vst [vmem:[#allocation3 + $0x110] sm:$0xff] %v1410
      %1418 = vst [vmem:[#allocation3 + $0x118] sm:$0xff] %v1415
      %1419 = vrot.lane.b32.xlu0 %v1327, 111
      %v1420 = vpop.permute.xlu0 %1419
      %1421 = vrot.lane.b32.xlu0 %v1328, 111
      %v1422 = vpop.permute.xlu0 %1421
      %1423 = vrot.lane.b32.xlu0 %v1329, 111
      %v1424 = vpop.permute.xlu0 %1423
      %v1425 = vsel %vm507, %v1420, %v1422
      %v1426 = vsel %vm507, %v1422, %v1424
      %v1431 = vsel %vm507, %v1424, %v1420
      %1432 = vst [vmem:[#allocation3 + $0x138] sm:$0xff] %v1425
      %1433 = vst [vmem:[#allocation3 + $0x140] sm:$0xff] %v1426
      %1434 = vst [vmem:[#allocation3 + $0x148] sm:$0xff] %v1431
      %1435 = vrot.lane.b32.xlu0 %v1327, 110
      %v1436 = vpop.permute.xlu0 %1435
      %1437 = vrot.lane.b32.xlu0 %v1328, 110
      %v1438 = vpop.permute.xlu0 %1437
      %1439 = vrot.lane.b32.xlu0 %v1329, 110
      %v1440 = vpop.permute.xlu0 %1439
      %v1441 = vsel %vm524, %v1436, %v1438
      %v1442 = vsel %vm524, %v1438, %v1440
      %v1447 = vsel %vm524, %v1440, %v1436
      %1448 = vst [vmem:[#allocation3 + $0x168] sm:$0xff] %v1441
      %1449 = vst [vmem:[#allocation3 + $0x170] sm:$0xff] %v1442
      %1450 = vst [vmem:[#allocation3 + $0x178] sm:$0xff] %v1447
      %1451 = vrot.lane.b32.xlu0 %v1327, 109
      %v1452 = vpop.permute.xlu0 %1451
      %1453 = vrot.lane.b32.xlu0 %v1328, 109
      %v1454 = vpop.permute.xlu0 %1453
      %1455 = vrot.lane.b32.xlu0 %v1329, 109
      %v1456 = vpop.permute.xlu0 %1455
      %v1457 = vsel %vm541, %v1452, %v1454
      %v1458 = vsel %vm541, %v1454, %v1456
      %v1463 = vsel %vm541, %v1456, %v1452
      %1464 = vst [vmem:[#allocation3 + $0x198] sm:$0xff] %v1457
      %1465 = vst [vmem:[#allocation3 + $0x1a0] sm:$0xff] %v1458
      %1466 = vst [vmem:[#allocation3 + $0x1a8] sm:$0xff] %v1463
      %1467 = vst [vmem:[%s286] sm:$0xff] %v1327
      %1468 = vst [vmem:[%s286 + $0x8] sm:$0xff] %v1328
      %1469 = vst [vmem:[%s286 + $0x10] sm:$0xff] %v1329
      %v1470 = vld [vmem:[#allocation2] sm:$0xff]
      %v1471 = vld [vmem:[#allocation2 + $0x8] sm:$0xff]
      %v1472 = vld [vmem:[#allocation2 + $0x10] sm:$0xff]
      %v1473 = vld [vmem:[#allocation2 + $0x18] sm:$0xff]
      %v1474 = vld [vmem:[#allocation2 + $0x20] sm:$0xff]
      %v1475 = vld [vmem:[#allocation2 + $0x28] sm:$0xff]
      %v1476 = vld [vmem:[#allocation2 + $0x30] sm:$0xff]
      %v1477 = vld [vmem:[#allocation2 + $0x38] sm:$0xff]
      %v1478 = vld [vmem:[#allocation2 + $0x40] sm:$0xff]
      %v1479 = vld [vmem:[#allocation2 + $0x48] sm:$0xff]
      %v1480 = vld [vmem:[#allocation2 + $0x50] sm:$0xff]
      %v1481 = vld [vmem:[#allocation2 + $0x58] sm:$0xff]
      %v1482 = vld [vmem:[#allocation2 + $0x60] sm:$0xff]
      %v1483 = vld [vmem:[#allocation2 + $0x68] sm:$0xff]
      %v1484 = vld [vmem:[#allocation2 + $0x70] sm:$0xff]
      %v1485 = vld [vmem:[#allocation2 + $0x78] sm:$0xff]
      %v1486 = vld [vmem:[#allocation2 + $0x80] sm:$0xff]
      %v1487 = vld [vmem:[#allocation2 + $0x88] sm:$0xff]
      %v1488 = vld [vmem:[#allocation2 + $0x90] sm:$0xff]
      %v1489 = vld [vmem:[#allocation2 + $0x98] sm:$0xff]
      %v1490 = vld [vmem:[#allocation2 + $0xa0] sm:$0xff]
      %v1491 = vld [vmem:[#allocation2 + $0xa8] sm:$0xff]
      %v1492 = vld [vmem:[#allocation2 + $0xb0] sm:$0xff]
      %v1493 = vld [vmem:[#allocation2 + $0xb8] sm:$0xff]
      %v1494 = vld [vmem:[#allocation2 + $0xc0] sm:$0xff]
      %v1495 = vld [vmem:[#allocation2 + $0xc8] sm:$0xff]
      %v1496 = vld [vmem:[#allocation2 + $0xd0] sm:$0xff]
      %v1497 = vld [vmem:[#allocation2 + $0xd8] sm:$0xff]
      %v1498 = vld [vmem:[#allocation2 + $0xe0] sm:$0xff]
      %v1499 = vld [vmem:[#allocation2 + $0xe8] sm:$0xff]
      %v1500 = vld [vmem:[#allocation2 + $0xf0] sm:$0xff]
      %v1501 = vld [vmem:[#allocation2 + $0xf8] sm:$0xff]
      %v1502 = vld [vmem:[#allocation2 + $0x100] sm:$0xff]
      %v1503 = vld [vmem:[#allocation2 + $0x108] sm:$0xff]
      %v1504 = vld [vmem:[#allocation2 + $0x110] sm:$0xff]
      %v1505 = vld [vmem:[#allocation2 + $0x118] sm:$0xff]
      %v1506 = vld [vmem:[#allocation2 + $0x120] sm:$0xff]
      %v1507 = vld [vmem:[#allocation2 + $0x128] sm:$0xff]
      %v1508 = vld [vmem:[#allocation2 + $0x130] sm:$0xff]
      %v1509 = vld [vmem:[#allocation2 + $0x138] sm:$0xff]
      %v1510 = vld [vmem:[#allocation2 + $0x140] sm:$0xff]
      %v1511 = vld [vmem:[#allocation2 + $0x148] sm:$0xff]
      %v1512 = vld [vmem:[#allocation2 + $0x150] sm:$0xff]
      %v1513 = vld [vmem:[#allocation2 + $0x158] sm:$0xff]
      %v1514 = vld [vmem:[#allocation2 + $0x160] sm:$0xff]
      %v1515 = vld [vmem:[#allocation2 + $0x168] sm:$0xff]
      %v1516 = vld [vmem:[#allocation2 + $0x170] sm:$0xff]
      %v1517 = vld [vmem:[#allocation2 + $0x178] sm:$0xff]
      %v1518 = vld [vmem:[#allocation2 + $0x180] sm:$0xff]
      %v1519 = vld [vmem:[#allocation2 + $0x188] sm:$0xff]
      %v1520 = vld [vmem:[#allocation2 + $0x190] sm:$0xff]
      %v1521 = vld [vmem:[#allocation2 + $0x198] sm:$0xff]
      %v1522 = vld [vmem:[#allocation2 + $0x1a0] sm:$0xff]
      %v1523 = vld [vmem:[#allocation2 + $0x1a8] sm:$0xff]
      %v1524 = vpack.c.bf16 %v1473, %v1470
      %v1525 = vpack.c.bf16 %v1474, %v1471
      %v1526 = vpack.c.bf16 %v1475, %v1472
      %v1527 = vpack.c.bf16 %v1479, %v1476
      %v1528 = vpack.c.bf16 %v1480, %v1477
      %v1529 = vpack.c.bf16 %v1481, %v1478
      %v1530 = vpack.c.bf16 %v1485, %v1482
      %v1531 = vpack.c.bf16 %v1486, %v1483
      %v1532 = vpack.c.bf16 %v1487, %v1484
      %v1533 = vpack.c.bf16 %v1491, %v1488
      %v1534 = vpack.c.bf16 %v1492, %v1489
      %v1535 = vpack.c.bf16 %v1493, %v1490
      %v1536 = vpack.c.bf16 %v1497, %v1494
      %v1537 = vpack.c.bf16 %v1498, %v1495
      %v1538 = vpack.c.bf16 %v1499, %v1496
      %v1539 = vpack.c.bf16 %v1503, %v1500
      %v1540 = vpack.c.bf16 %v1504, %v1501
      %v1541 = vpack.c.bf16 %v1505, %v1502
      %v1542 = vpack.c.bf16 %v1509, %v1506
      %v1543 = vpack.c.bf16 %v1510, %v1507
      %v1544 = vpack.c.bf16 %v1511, %v1508
      %v1545 = vpack.c.bf16 %v1515, %v1512
      %v1546 = vpack.c.bf16 %v1516, %v1513
      %v1547 = vpack.c.bf16 %v1517, %v1514
      %v1548 = vpack.c.bf16 %v1521, %v1518
      %v1549 = vpack.c.bf16 %v1522, %v1519
      %v1550 = vpack.c.bf16 %v1523, %v1520
      %v1551 = vld [vmem:[%s2] sm:$0xff]
      %v1552 = vld [vmem:[%s2 + $0x8] sm:$0xff]
      %v1553 = vld [vmem:[%s2 + $0x10] sm:$0xff]
      %v1554 = vld [vmem:[%s2 + $0x18] sm:$0xff]
      %v1555 = vld [vmem:[%s4] sm:$0xff]
      %v1556 = vld [vmem:[%s4 + $0x8] sm:$0xff]
      %v1557 = vld [vmem:[%s4 + $0x10] sm:$0xff]
      %v1558 = vld [vmem:[%s4 + $0x18] sm:$0xff]
      %1560 = vset.pattern.permute.xlu0 0
      %1561 = vperm.xlu0 %1560, %v1555
      %v1562 = vpop.permute.xlu0 %1561
      %1565 = vset.pattern.permute.xlu0 0
      %1566 = vperm.xlu0 %1565, %v1556
      %v1567 = vpop.permute.xlu0 %1566
      %1570 = vset.pattern.permute.xlu0 0
      %1571 = vperm.xlu0 %1570, %v1557
      %v1572 = vpop.permute.xlu0 %1571
      %1575 = vset.pattern.permute.xlu0 0
      %1576 = vperm.xlu0 %1575, %v1558
      %v1577 = vpop.permute.xlu0 %1576
      %v1583 = vunpack.c.l.b16 %v1551
      %v1584 = vunpack.c.h.b16 %v1551
      %v1585 = vunpack.c.l.b16 %v1552
      %v1586 = vunpack.c.h.b16 %v1552
      %v1587 = vunpack.c.l.b16 %v1553
      %v1588 = vunpack.c.h.b16 %v1553
      %v1589 = vunpack.c.l.b16 %v1554
      %v1590 = vunpack.c.h.b16 %v1554
      %v1591 = vpack.c.b16 %v1585, %v1583
      %v1592 = vpack.c.b16 %v1586, %v1584
      %v1593 = vpack.c.b16 %v1589, %v1587
      %v1594 = vpack.c.b16 %v1590, %v1588
      %v1598 = vsel %vm680, %v1592, 0
      %v1601 = vsel %vm680, %v1594, 0
      %1603 = vmatprep.subr.bf16.mxu0 %v1525
      %1604 = vmatpush1.bf16.msra.mxu0 %v1524
      %1605 = vmatprep.subr.bf16.mxu0 %v1528
      %1606 = vmatpush1.bf16.msra.mxu0 %v1527
      %1607 = vmatprep.subr.bf16.mxu0 %v1531
      %1608 = vmatpush1.bf16.msra.mxu0 %v1530
      %1609 = vmatprep.subr.bf16.mxu0 %v1534
      %1610 = vmatpush1.bf16.msra.mxu0 %v1533
      %1611 = vmatprep.subr.bf16.mxu0 %v1537
      %1612 = vmatpush1.bf16.msra.mxu0 %v1536
      %1613 = vmatprep.subr.bf16.mxu0 %v1540
      %1614 = vmatpush1.bf16.msra.mxu0 %v1539
      %1615 = vmatprep.subr.bf16.mxu0 %v1543
      %1616 = vmatpush1.bf16.msra.mxu0 %v1542
      %1617 = vmatprep.subr.bf16.mxu0 %v1546
      %1618 = vmatpush1.bf16.msra.mxu0 %v1545
      %1619 = vmatprep.subr.bf16.mxu0 %v1549
      %1620 = vmatpush1.bf16.msra.mxu0 %v1548
      %1621 = vmatprep.subr.bf16.mxu0 0
      %1622 = vmatpush1.bf16.msra.mxu0 0
      %1623 = vmatprep.subr.bf16.mxu0 0
      %1624 = vmatpush1.bf16.msra.mxu0 0
      %1625 = vmatprep.subr.bf16.mxu0 0
      %1626 = vmatpush1.bf16.msra.mxu0 0
      %1627 = vmatprep.subr.bf16.mxu0 0
      %1628 = vmatpush1.bf16.msra.mxu0 0
      %1629 = vmatprep.subr.bf16.mxu0 0
      %1630 = vmatpush1.bf16.msra.mxu0 0
      %1631 = vmatprep.subr.bf16.mxu0 0
      %1632 = vmatpush1.bf16.msra.mxu0 0
      %1633 = vmatprep.subr.bf16.mxu0 0
      %1634 = vmatpush1.bf16.msra.mxu0 0
      %1635 = vmatprep.mubr.bf16.mxu0 %v1598
      %1636 = vmatmul.mubr.bf16.gmra.mrb[0].mxu0 %v1591
      %v1637 = vpop.f32.mrb[0].mxu0
      %v1638 = vadd.f32 %v1562, %v1637
      %v1639 = vpop.f32.mrb[0].mxu0
      %v1640 = vadd.f32 %v1562, %v1639
      %v1641 = vpop.f32.mrb[0].mxu0
      %v1642 = vadd.f32 %v1567, %v1641
      %v1643 = vpop.f32.mrb[0].mxu0
      %v1644 = vadd.f32 %v1567, %v1643
      %1645 = vmatprep.mubr.bf16.mxu0 %v1601
      %1646 = vmatmul.mubr.bf16.gmra.mrb[0].mxu0 %v1593
      %v1647 = vpop.f32.mrb[0].mxu0
      %v1648 = vadd.f32 %v1572, %v1647
      %v1649 = vpop.f32.mrb[0].mxu0
      %v1650 = vadd.f32 %v1572, %v1649
      %v1651 = vpop.f32.mrb[0].mxu0
      %v1652 = vadd.f32 %v1577, %v1651
      %v1653 = vpop.f32.mrb[0].mxu0
      %v1654 = vadd.f32 %v1577, %v1653
      %1655 = vdwg.mxu0
      %1656 = vmatprep.subr.bf16.mxu0 0
      %1657 = vmatpush1.bf16.msra.mxu0 %v1526
      %1658 = vmatprep.subr.bf16.mxu0 0
      %1659 = vmatpush1.bf16.msra.mxu0 %v1529
      %1660 = vmatprep.subr.bf16.mxu0 0
      %1661 = vmatpush1.bf16.msra.mxu0 %v1532
      %1662 = vmatprep.subr.bf16.mxu0 0
      %1663 = vmatpush1.bf16.msra.mxu0 %v1535
      %1664 = vmatprep.subr.bf16.mxu0 0
      %1665 = vmatpush1.bf16.msra.mxu0 %v1538
      %1666 = vmatprep.subr.bf16.mxu0 0
      %1667 = vmatpush1.bf16.msra.mxu0 %v1541
      %1668 = vmatprep.subr.bf16.mxu0 0
      %1669 = vmatpush1.bf16.msra.mxu0 %v1544
      %1670 = vmatprep.subr.bf16.mxu0 0
      %1671 = vmatpush1.bf16.msra.mxu0 %v1547
      %1672 = vmatprep.subr.bf16.mxu0 0
      %1673 = vmatpush1.bf16.msra.mxu0 %v1550
      %1674 = vmatprep.subr.bf16.mxu0 0
      %1675 = vmatpush1.bf16.msra.mxu0 0
      %1676 = vmatprep.subr.bf16.mxu0 0
      %1677 = vmatpush1.bf16.msra.mxu0 0
      %1678 = vmatprep.subr.bf16.mxu0 0
      %1679 = vmatpush1.bf16.msra.mxu0 0
      %1680 = vmatprep.subr.bf16.mxu0 0
      %1681 = vmatpush1.bf16.msra.mxu0 0
      %1682 = vmatprep.subr.bf16.mxu0 0
      %1683 = vmatpush1.bf16.msra.mxu0 0
      %1684 = vmatprep.subr.bf16.mxu0 0
      %1685 = vmatpush1.bf16.msra.mxu0 0
      %1686 = vmatprep.subr.bf16.mxu0 0
      %1687 = vmatpush1.bf16.msra.mxu0 0
      %1688 = vmatprep.mubr.bf16.mxu0 %v1598
      %1689 = vmatmul.mubr.bf16.gmra.mrb[0].mxu0 %v1591
      %v1690 = vpop.f32.mrb[0].mxu0
      %v1691 = vadd.f32 %v1562, %v1690
      %v1692 = vpop.f32.mrb[0].mxu0
      %v1693 = vpop.f32.mrb[0].mxu0
      %v1694 = vadd.f32 %v1567, %v1693
      %v1695 = vpop.f32.mrb[0].mxu0
      %1696 = vmatprep.mubr.bf16.mxu0 %v1601
      %1697 = vmatmul.mubr.bf16.gmra.mrb[0].mxu0 %v1593
      %v1698 = vpop.f32.mrb[0].mxu0
      %v1699 = vadd.f32 %v1572, %v1698
      %v1700 = vpop.f32.mrb[0].mxu0
      %v1701 = vpop.f32.mrb[0].mxu0
      %v1702 = vadd.f32 %v1577, %v1701
      %v1703 = vpop.f32.mrb[0].mxu0
      %1704 = vdwg.mxu0
      %v1705 = vld [vmem:[#allocation4] sm:$0xff]
      %v1706 = vld [vmem:[#allocation4 + $0x8] sm:$0xff]
      %v1707 = vld [vmem:[#allocation4 + $0x10] sm:$0xff]
      %v1708 = vmul.f32 %v1638, 0.5
      %v1709 = vmul.f32 %v1640, 0.5
      %v1710 = vmul.f32 %v1691, 0.5
      %v1711 = vtanh.pop %v1708
      %v1712 = vtanh.pop %v1709
      %v1713 = vtanh.pop %v1710
      %v1714 = vmul.f32 %v1711, 0.5
      %v1715 = vmul.f32 %v1712, 0.5
      %v1716 = vmul.f32 %v1713, 0.5
      %v1717 = vadd.f32 %v1714, 0.5
      %v1718 = vadd.f32 %v1715, 0.5
      %v1719 = vadd.f32 %v1716, 0.5
      %v1720 = vmul.f32 %v1642, 0.5
      %v1721 = vmul.f32 %v1644, 0.5
      %v1722 = vmul.f32 %v1694, 0.5
      %v1723 = vtanh.pop %v1720
      %v1724 = vtanh.pop %v1721
      %v1725 = vtanh.pop %v1722
      %v1726 = vmul.f32 %v1723, 0.5
      %v1727 = vmul.f32 %v1724, 0.5
      %v1728 = vmul.f32 %v1725, 0.5
      %v1729 = vadd.f32 %v1726, 0.5
      %v1730 = vadd.f32 %v1727, 0.5
      %v1731 = vadd.f32 %v1728, 0.5
      %v1732 = vmul.f32 %v1729, %v1705
      %v1733 = vmul.f32 %v1730, %v1706
      %v1734 = vmul.f32 %v1731, %v1707
      %v1735 = vtanh.pop %v1648
      %v1736 = vtanh.pop %v1650
      %v1737 = vtanh.pop %v1699
      %v1738 = vmul.f32 %v1717, %v1735
      %v1739 = vmul.f32 %v1718, %v1736
      %v1740 = vmul.f32 %v1719, %v1737
      %v1741 = vadd.f32 %v1732, %v1738
      %v1742 = vadd.f32 %v1733, %v1739
      %v1743 = vadd.f32 %v1734, %v1740
      %v1744 = vmul.f32 %v1741, %v832
      %v1745 = vmul.f32 %v1742, %v836
      %v1746 = vmul.f32 %v1743, %v840
      %v1747 = vmul.f32 %v1652, 0.5
      %v1748 = vmul.f32 %v1654, 0.5
      %v1749 = vmul.f32 %v1702, 0.5
      %v1750 = vtanh.pop %v1747
      %v1751 = vtanh.pop %v1748
      %v1752 = vtanh.pop %v1749
      %v1753 = vmul.f32 %v1750, 0.5
      %v1754 = vmul.f32 %v1751, 0.5
      %v1755 = vmul.f32 %v1752, 0.5
      %v1756 = vadd.f32 %v1753, 0.5
      %v1757 = vadd.f32 %v1754, 0.5
      %v1758 = vadd.f32 %v1755, 0.5
      %v1759 = vtanh.pop %v1744
      %v1760 = vtanh.pop %v1745
      %v1761 = vtanh.pop %v1746
      %v1762 = vmul.f32 %v1756, %v1759
      %v1763 = vmul.f32 %v1757, %v1760
      %v1764 = vmul.f32 %v1758, %v1761
      %v1765 = vmul.f32 %v1762, %v832
      %v1766 = vmul.f32 %v1763, %v836
      %v1767 = vmul.f32 %v1764, %v840
      %1768 = vst [vmem:[#allocation4] sm:$0xff] %v1744
      %1769 = vst [vmem:[#allocation4 + $0x8] sm:$0xff] %v1745
      %1770 = vst [vmem:[#allocation4 + $0x10] sm:$0xff] %v1746
      %1772 = vrot.lane.b32.xlu0 %v1767, 19
      %v1773 = vpop.permute.xlu0 %1772
      %1777 = vrot.lane.b32.xlu0 %v1765, 19
      %v1778 = vpop.permute.xlu0 %1777
      %1779 = vrot.lane.b32.xlu0 %v1766, 19
      %v1780 = vpop.permute.xlu0 %1779
      %v1781 = vsel %vm419, %v1778, %v1780
      %v1782 = vsel %vm419, %v1780, %v1773
      %v1786 = vsel %vm419, %v1773, %v1778
      %1787 = vst [vmem:[#allocation3] sm:$0xff] %v1786
      %1788 = vst [vmem:[#allocation3 + $0x8] sm:$0xff] %v1781
      %1789 = vst [vmem:[#allocation3 + $0x10] sm:$0xff] %v1782
      %1790 = vrot.lane.b32.xlu0 %v1767, 18
      %v1791 = vpop.permute.xlu0 %1790
      %1793 = vrot.lane.b32.xlu0 %v1765, 18
      %v1794 = vpop.permute.xlu0 %1793
      %1795 = vrot.lane.b32.xlu0 %v1766, 18
      %v1796 = vpop.permute.xlu0 %1795
      %v1797 = vsel %vm436, %v1794, %v1796
      %v1798 = vsel %vm436, %v1796, %v1791
      %v1802 = vsel %vm436, %v1791, %v1794
      %1803 = vst [vmem:[#allocation3 + $0x30] sm:$0xff] %v1802
      %1804 = vst [vmem:[#allocation3 + $0x38] sm:$0xff] %v1797
      %1805 = vst [vmem:[#allocation3 + $0x40] sm:$0xff] %v1798
      %1806 = vrot.lane.b32.xlu0 %v1767, 17
      %v1807 = vpop.permute.xlu0 %1806
      %1809 = vrot.lane.b32.xlu0 %v1765, 17
      %v1810 = vpop.permute.xlu0 %1809
      %1811 = vrot.lane.b32.xlu0 %v1766, 17
      %v1812 = vpop.permute.xlu0 %1811
      %v1813 = vsel %vm453, %v1810, %v1812
      %v1814 = vsel %vm453, %v1812, %v1807
      %v1818 = vsel %vm453, %v1807, %v1810
      %1819 = vst [vmem:[#allocation3 + $0x60] sm:$0xff] %v1818
      %1820 = vst [vmem:[#allocation3 + $0x68] sm:$0xff] %v1813
      %1821 = vst [vmem:[#allocation3 + $0x70] sm:$0xff] %v1814
      %1822 = vrot.lane.b32.xlu0 %v1767, 1
      %v1823 = vpop.permute.xlu0 %1822
      %1825 = vrot.lane.b32.xlu0 %v1765, 1
      %v1826 = vpop.permute.xlu0 %1825
      %1827 = vrot.lane.b32.xlu0 %v1766, 1
      %v1828 = vpop.permute.xlu0 %1827
      %v1829 = vsel %vm470, %v1826, %v1828
      %v1830 = vsel %vm470, %v1828, %v1823
      %v1834 = vsel %vm470, %v1823, %v1826
      %1835 = vst [vmem:[#allocation3 + $0x90] sm:$0xff] %v1834
      %1836 = vst [vmem:[#allocation3 + $0x98] sm:$0xff] %v1829
      %1837 = vst [vmem:[#allocation3 + $0xa0] sm:$0xff] %v1830
      %1838 = vst [vmem:[#allocation3 + $0xc0] sm:$0xff] %v1765
      %1839 = vst [vmem:[#allocation3 + $0xc8] sm:$0xff] %v1766
      %1840 = vst [vmem:[#allocation3 + $0xd0] sm:$0xff] %v1767
      %1841 = vrot.lane.b32.xlu0 %v1765, 127
      %v1842 = vpop.permute.xlu0 %1841
      %1843 = vrot.lane.b32.xlu0 %v1766, 127
      %v1844 = vpop.permute.xlu0 %1843
      %1845 = vrot.lane.b32.xlu0 %v1767, 127
      %v1846 = vpop.permute.xlu0 %1845
      %v1847 = vsel %vm490, %v1842, %v1844
      %v1848 = vsel %vm490, %v1844, %v1846
      %v1853 = vsel %vm490, %v1846, %v1842
      %1854 = vst [vmem:[#allocation3 + $0xf0] sm:$0xff] %v1847
      %1855 = vst [vmem:[#allocation3 + $0xf8] sm:$0xff] %v1848
      %1856 = vst [vmem:[#allocation3 + $0x100] sm:$0xff] %v1853
      %1857 = vrot.lane.b32.xlu0 %v1765, 111
      %v1858 = vpop.permute.xlu0 %1857
      %1859 = vrot.lane.b32.xlu0 %v1766, 111
      %v1860 = vpop.permute.xlu0 %1859
      %1861 = vrot.lane.b32.xlu0 %v1767, 111
      %v1862 = vpop.permute.xlu0 %1861
      %v1863 = vsel %vm507, %v1858, %v1860
      %v1864 = vsel %vm507, %v1860, %v1862
      %v1869 = vsel %vm507, %v1862, %v1858
      %1870 = vst [vmem:[#allocation3 + $0x120] sm:$0xff] %v1863
      %1871 = vst [vmem:[#allocation3 + $0x128] sm:$0xff] %v1864
      %1872 = vst [vmem:[#allocation3 + $0x130] sm:$0xff] %v1869
      %1873 = vrot.lane.b32.xlu0 %v1765, 110
      %v1874 = vpop.permute.xlu0 %1873
      %1875 = vrot.lane.b32.xlu0 %v1766, 110
      %v1876 = vpop.permute.xlu0 %1875
      %1877 = vrot.lane.b32.xlu0 %v1767, 110
      %v1878 = vpop.permute.xlu0 %1877
      %v1879 = vsel %vm524, %v1874, %v1876
      %v1880 = vsel %vm524, %v1876, %v1878
      %v1885 = vsel %vm524, %v1878, %v1874
      %1886 = vst [vmem:[#allocation3 + $0x150] sm:$0xff] %v1879
      %1887 = vst [vmem:[#allocation3 + $0x158] sm:$0xff] %v1880
      %1888 = vst [vmem:[#allocation3 + $0x160] sm:$0xff] %v1885
      %1889 = vrot.lane.b32.xlu0 %v1765, 109
      %v1890 = vpop.permute.xlu0 %1889
      %1891 = vrot.lane.b32.xlu0 %v1766, 109
      %v1892 = vpop.permute.xlu0 %1891
      %1893 = vrot.lane.b32.xlu0 %v1767, 109
      %v1894 = vpop.permute.xlu0 %1893
      %v1895 = vsel %vm541, %v1890, %v1892
      %v1896 = vsel %vm541, %v1892, %v1894
      %v1901 = vsel %vm541, %v1894, %v1890
      %1902 = vst [vmem:[#allocation3 + $0x180] sm:$0xff] %v1895
      %1903 = vst [vmem:[#allocation3 + $0x188] sm:$0xff] %v1896
      %1904 = vst [vmem:[#allocation3 + $0x190] sm:$0xff] %v1901
      %v1905 = vld [vmem:[#allocation3] sm:$0xff]
      %v1906 = vld [vmem:[#allocation3 + $0x8] sm:$0xff]
      %v1907 = vld [vmem:[#allocation3 + $0x10] sm:$0xff]
      %v1908 = vld [vmem:[#allocation3 + $0x18] sm:$0xff]
      %v1909 = vld [vmem:[#allocation3 + $0x20] sm:$0xff]
      %v1910 = vld [vmem:[#allocation3 + $0x28] sm:$0xff]
      %v1911 = vld [vmem:[#allocation3 + $0x30] sm:$0xff]
      %v1912 = vld [vmem:[#allocation3 + $0x38] sm:$0xff]
      %v1913 = vld [vmem:[#allocation3 + $0x40] sm:$0xff]
      %v1914 = vld [vmem:[#allocation3 + $0x48] sm:$0xff]
      %v1915 = vld [vmem:[#allocation3 + $0x50] sm:$0xff]
      %v1916 = vld [vmem:[#allocation3 + $0x58] sm:$0xff]
      %v1917 = vld [vmem:[#allocation3 + $0x60] sm:$0xff]
      %v1918 = vld [vmem:[#allocation3 + $0x68] sm:$0xff]
      %v1919 = vld [vmem:[#allocation3 + $0x70] sm:$0xff]
      %v1920 = vld [vmem:[#allocation3 + $0x78] sm:$0xff]
      %v1921 = vld [vmem:[#allocation3 + $0x80] sm:$0xff]
      %v1922 = vld [vmem:[#allocation3 + $0x88] sm:$0xff]
      %v1923 = vld [vmem:[#allocation3 + $0x90] sm:$0xff]
      %v1924 = vld [vmem:[#allocation3 + $0x98] sm:$0xff]
      %v1925 = vld [vmem:[#allocation3 + $0xa0] sm:$0xff]
      %v1926 = vld [vmem:[#allocation3 + $0xa8] sm:$0xff]
      %v1927 = vld [vmem:[#allocation3 + $0xb0] sm:$0xff]
      %v1928 = vld [vmem:[#allocation3 + $0xb8] sm:$0xff]
      %v1929 = vld [vmem:[#allocation3 + $0xc0] sm:$0xff]
      %v1930 = vld [vmem:[#allocation3 + $0xc8] sm:$0xff]
      %v1931 = vld [vmem:[#allocation3 + $0xd0] sm:$0xff]
      %v1932 = vld [vmem:[#allocation3 + $0xd8] sm:$0xff]
      %v1933 = vld [vmem:[#allocation3 + $0xe0] sm:$0xff]
      %v1934 = vld [vmem:[#allocation3 + $0xe8] sm:$0xff]
      %v1935 = vld [vmem:[#allocation3 + $0xf0] sm:$0xff]
      %v1936 = vld [vmem:[#allocation3 + $0xf8] sm:$0xff]
      %v1937 = vld [vmem:[#allocation3 + $0x100] sm:$0xff]
      %v1938 = vld [vmem:[#allocation3 + $0x108] sm:$0xff]
      %v1939 = vld [vmem:[#allocation3 + $0x110] sm:$0xff]
      %v1940 = vld [vmem:[#allocation3 + $0x118] sm:$0xff]
      %v1941 = vld [vmem:[#allocation3 + $0x120] sm:$0xff]
      %v1942 = vld [vmem:[#allocation3 + $0x128] sm:$0xff]
      %v1943 = vld [vmem:[#allocation3 + $0x130] sm:$0xff]
      %v1944 = vld [vmem:[#allocation3 + $0x138] sm:$0xff]
      %v1945 = vld [vmem:[#allocation3 + $0x140] sm:$0xff]
      %v1946 = vld [vmem:[#allocation3 + $0x148] sm:$0xff]
      %v1947 = vld [vmem:[#allocation3 + $0x150] sm:$0xff]
      %v1948 = vld [vmem:[#allocation3 + $0x158] sm:$0xff]
      %v1949 = vld [vmem:[#allocation3 + $0x160] sm:$0xff]
      %v1950 = vld [vmem:[#allocation3 + $0x168] sm:$0xff]
      %v1951 = vld [vmem:[#allocation3 + $0x170] sm:$0xff]
      %v1952 = vld [vmem:[#allocation3 + $0x178] sm:$0xff]
      %v1953 = vld [vmem:[#allocation3 + $0x180] sm:$0xff]
      %v1954 = vld [vmem:[#allocation3 + $0x188] sm:$0xff]
      %v1955 = vld [vmem:[#allocation3 + $0x190] sm:$0xff]
      %v1956 = vld [vmem:[#allocation3 + $0x198] sm:$0xff]
      %v1957 = vld [vmem:[#allocation3 + $0x1a0] sm:$0xff]
      %v1958 = vld [vmem:[#allocation3 + $0x1a8] sm:$0xff]
      %v1959 = vpack.c.bf16 %v1908, %v1905
      %v1960 = vpack.c.bf16 %v1909, %v1906
      %v1961 = vpack.c.bf16 %v1910, %v1907
      %v1962 = vpack.c.bf16 %v1914, %v1911
      %v1963 = vpack.c.bf16 %v1915, %v1912
      %v1964 = vpack.c.bf16 %v1916, %v1913
      %v1965 = vpack.c.bf16 %v1920, %v1917
      %v1966 = vpack.c.bf16 %v1921, %v1918
      %v1967 = vpack.c.bf16 %v1922, %v1919
      %v1968 = vpack.c.bf16 %v1926, %v1923
      %v1969 = vpack.c.bf16 %v1927, %v1924
      %v1970 = vpack.c.bf16 %v1928, %v1925
      %v1971 = vpack.c.bf16 %v1932, %v1929
      %v1972 = vpack.c.bf16 %v1933, %v1930
      %v1973 = vpack.c.bf16 %v1934, %v1931
      %v1974 = vpack.c.bf16 %v1938, %v1935
      %v1975 = vpack.c.bf16 %v1939, %v1936
      %v1976 = vpack.c.bf16 %v1940, %v1937
      %v1977 = vpack.c.bf16 %v1944, %v1941
      %v1978 = vpack.c.bf16 %v1945, %v1942
      %v1979 = vpack.c.bf16 %v1946, %v1943
      %v1980 = vpack.c.bf16 %v1950, %v1947
      %v1981 = vpack.c.bf16 %v1951, %v1948
      %v1982 = vpack.c.bf16 %v1952, %v1949
      %v1983 = vpack.c.bf16 %v1956, %v1953
      %v1984 = vpack.c.bf16 %v1957, %v1954
      %v1985 = vpack.c.bf16 %v1958, %v1955
      %v1986 = vld [vmem:[%s3] sm:$0xff]
      %v1987 = vld [vmem:[%s3 + $0x8] sm:$0xff]
      %v1988 = vld [vmem:[%s3 + $0x10] sm:$0xff]
      %v1989 = vld [vmem:[%s3 + $0x18] sm:$0xff]
      %v1990 = vld [vmem:[%s5] sm:$0xff]
      %v1991 = vld [vmem:[%s5 + $0x8] sm:$0xff]
      %v1992 = vld [vmem:[%s5 + $0x10] sm:$0xff]
      %v1993 = vld [vmem:[%s5 + $0x18] sm:$0xff]
      %1995 = vset.pattern.permute.xlu0 0
      %1996 = vperm.xlu0 %1995, %v1990
      %v1997 = vpop.permute.xlu0 %1996
      %2000 = vset.pattern.permute.xlu0 0
      %2001 = vperm.xlu0 %2000, %v1991
      %v2002 = vpop.permute.xlu0 %2001
      %2005 = vset.pattern.permute.xlu0 0
      %2006 = vperm.xlu0 %2005, %v1992
      %v2007 = vpop.permute.xlu0 %2006
      %2010 = vset.pattern.permute.xlu0 0
      %2011 = vperm.xlu0 %2010, %v1993
      %v2012 = vpop.permute.xlu0 %2011
      %v2018 = vunpack.c.l.b16 %v1986
      %v2019 = vunpack.c.h.b16 %v1986
      %v2020 = vunpack.c.l.b16 %v1987
      %v2021 = vunpack.c.h.b16 %v1987
      %v2022 = vunpack.c.l.b16 %v1988
      %v2023 = vunpack.c.h.b16 %v1988
      %v2024 = vunpack.c.l.b16 %v1989
      %v2025 = vunpack.c.h.b16 %v1989
      %v2026 = vpack.c.b16 %v2020, %v2018
      %v2027 = vpack.c.b16 %v2021, %v2019
      %v2028 = vpack.c.b16 %v2024, %v2022
      %v2029 = vpack.c.b16 %v2025, %v2023
      %v2033 = vsel %vm680, %v2027, 0
      %v2036 = vsel %vm680, %v2029, 0
      %2038 = vmatprep.subr.bf16.mxu0 %v1960
      %2039 = vmatpush1.bf16.msra.mxu0 %v1959
      %2040 = vmatprep.subr.bf16.mxu0 %v1963
      %2041 = vmatpush1.bf16.msra.mxu0 %v1962
      %2042 = vmatprep.subr.bf16.mxu0 %v1966
      %2043 = vmatpush1.bf16.msra.mxu0 %v1965
      %2044 = vmatprep.subr.bf16.mxu0 %v1969
      %2045 = vmatpush1.bf16.msra.mxu0 %v1968
      %2046 = vmatprep.subr.bf16.mxu0 %v1972
      %2047 = vmatpush1.bf16.msra.mxu0 %v1971
      %2048 = vmatprep.subr.bf16.mxu0 %v1975
      %2049 = vmatpush1.bf16.msra.mxu0 %v1974
      %2050 = vmatprep.subr.bf16.mxu0 %v1978
      %2051 = vmatpush1.bf16.msra.mxu0 %v1977
      %2052 = vmatprep.subr.bf16.mxu0 %v1981
      %2053 = vmatpush1.bf16.msra.mxu0 %v1980
      %2054 = vmatprep.subr.bf16.mxu0 %v1984
      %2055 = vmatpush1.bf16.msra.mxu0 %v1983
      %2056 = vmatprep.subr.bf16.mxu0 0
      %2057 = vmatpush1.bf16.msra.mxu0 0
      %2058 = vmatprep.subr.bf16.mxu0 0
      %2059 = vmatpush1.bf16.msra.mxu0 0
      %2060 = vmatprep.subr.bf16.mxu0 0
      %2061 = vmatpush1.bf16.msra.mxu0 0
      %2062 = vmatprep.subr.bf16.mxu0 0
      %2063 = vmatpush1.bf16.msra.mxu0 0
      %2064 = vmatprep.subr.bf16.mxu0 0
      %2065 = vmatpush1.bf16.msra.mxu0 0
      %2066 = vmatprep.subr.bf16.mxu0 0
      %2067 = vmatpush1.bf16.msra.mxu0 0
      %2068 = vmatprep.subr.bf16.mxu0 0
      %2069 = vmatpush1.bf16.msra.mxu0 0
      %2070 = vmatprep.mubr.bf16.mxu0 %v2033
      %2071 = vmatmul.mubr.bf16.gmra.mrb[0].mxu0 %v2026
      %v2072 = vpop.f32.mrb[0].mxu0
      %v2073 = vadd.f32 %v1997, %v2072
      %v2074 = vpop.f32.mrb[0].mxu0
      %v2075 = vadd.f32 %v1997, %v2074
      %v2076 = vpop.f32.mrb[0].mxu0
      %v2077 = vadd.f32 %v2002, %v2076
      %v2078 = vpop.f32.mrb[0].mxu0
      %v2079 = vadd.f32 %v2002, %v2078
      %2080 = vmatprep.mubr.bf16.mxu0 %v2036
      %2081 = vmatmul.mubr.bf16.gmra.mrb[0].mxu0 %v2028
      %v2082 = vpop.f32.mrb[0].mxu0
      %v2083 = vadd.f32 %v2007, %v2082
      %v2084 = vpop.f32.mrb[0].mxu0
      %v2085 = vadd.f32 %v2007, %v2084
      %v2086 = vpop.f32.mrb[0].mxu0
      %v2087 = vadd.f32 %v2012, %v2086
      %v2088 = vpop.f32.mrb[0].mxu0
      %v2089 = vadd.f32 %v2012, %v2088
      %2090 = vdwg.mxu0
      %2091 = vmatprep.subr.bf16.mxu0 0
      %2092 = vmatpush1.bf16.msra.mxu0 %v1961
      %2093 = vmatprep.subr.bf16.mxu0 0
      %2094 = vmatpush1.bf16.msra.mxu0 %v1964
      %2095 = vmatprep.subr.bf16.mxu0 0
      %2096 = vmatpush1.bf16.msra.mxu0 %v1967
      %2097 = vmatprep.subr.bf16.mxu0 0
      %2098 = vmatpush1.bf16.msra.mxu0 %v1970
      %2099 = vmatprep.subr.bf16.mxu0 0
      %2100 = vmatpush1.bf16.msra.mxu0 %v1973
      %2101 = vmatprep.subr.bf16.mxu0 0
      %2102 = vmatpush1.bf16.msra.mxu0 %v1976
      %2103 = vmatprep.subr.bf16.mxu0 0
      %2104 = vmatpush1.bf16.msra.mxu0 %v1979
      %2105 = vmatprep.subr.bf16.mxu0 0
      %2106 = vmatpush1.bf16.msra.mxu0 %v1982
      %2107 = vmatprep.subr.bf16.mxu0 0
      %2108 = vmatpush1.bf16.msra.mxu0 %v1985
      %2109 = vmatprep.subr.bf16.mxu0 0
      %2110 = vmatpush1.bf16.msra.mxu0 0
      %2111 = vmatprep.subr.bf16.mxu0 0
      %2112 = vmatpush1.bf16.msra.mxu0 0
      %2113 = vmatprep.subr.bf16.mxu0 0
      %2114 = vmatpush1.bf16.msra.mxu0 0
      %2115 = vmatprep.subr.bf16.mxu0 0
      %2116 = vmatpush1.bf16.msra.mxu0 0
      %2117 = vmatprep.subr.bf16.mxu0 0
      %2118 = vmatpush1.bf16.msra.mxu0 0
      %2119 = vmatprep.subr.bf16.mxu0 0
      %2120 = vmatpush1.bf16.msra.mxu0 0
      %2121 = vmatprep.subr.bf16.mxu0 0
      %2122 = vmatpush1.bf16.msra.mxu0 0
      %2123 = vmatprep.mubr.bf16.mxu0 %v2033
      %2124 = vmatmul.mubr.bf16.gmra.mrb[0].mxu0 %v2026
      %v2125 = vpop.f32.mrb[0].mxu0
      %v2126 = vadd.f32 %v1997, %v2125
      %v2127 = vpop.f32.mrb[0].mxu0
      %v2128 = vpop.f32.mrb[0].mxu0
      %v2129 = vadd.f32 %v2002, %v2128
      %v2130 = vpop.f32.mrb[0].mxu0
      %2131 = vmatprep.mubr.bf16.mxu0 %v2036
      %2132 = vmatmul.mubr.bf16.gmra.mrb[0].mxu0 %v2028
      %v2133 = vpop.f32.mrb[0].mxu0
      %v2134 = vadd.f32 %v2007, %v2133
      %v2135 = vpop.f32.mrb[0].mxu0
      %v2136 = vpop.f32.mrb[0].mxu0
      %v2137 = vadd.f32 %v2012, %v2136
      %v2138 = vpop.f32.mrb[0].mxu0
      %2139 = vdwg.mxu0
      %v2140 = vld [vmem:[#allocation5] sm:$0xff]
      %v2141 = vld [vmem:[#allocation5 + $0x8] sm:$0xff]
      %v2142 = vld [vmem:[#allocation5 + $0x10] sm:$0xff]
      %v2143 = vmul.f32 %v2073, 0.5
      %v2144 = vmul.f32 %v2075, 0.5
      %v2145 = vmul.f32 %v2126, 0.5
      %v2146 = vtanh.pop %v2143
      %v2147 = vtanh.pop %v2144
      %v2148 = vtanh.pop %v2145
      %v2149 = vmul.f32 %v2146, 0.5
      %v2150 = vmul.f32 %v2147, 0.5
      %v2151 = vmul.f32 %v2148, 0.5
      %v2152 = vadd.f32 %v2149, 0.5
      %v2153 = vadd.f32 %v2150, 0.5
      %v2154 = vadd.f32 %v2151, 0.5
      %v2155 = vmul.f32 %v2077, 0.5
      %v2156 = vmul.f32 %v2079, 0.5
      %v2157 = vmul.f32 %v2129, 0.5
      %v2158 = vtanh.pop %v2155
      %v2159 = vtanh.pop %v2156
      %v2160 = vtanh.pop %v2157
      %v2161 = vmul.f32 %v2158, 0.5
      %v2162 = vmul.f32 %v2159, 0.5
      %v2163 = vmul.f32 %v2160, 0.5
      %v2164 = vadd.f32 %v2161, 0.5
      %v2165 = vadd.f32 %v2162, 0.5
      %v2166 = vadd.f32 %v2163, 0.5
      %v2167 = vmul.f32 %v2164, %v2140
      %v2168 = vmul.f32 %v2165, %v2141
      %v2169 = vmul.f32 %v2166, %v2142
      %v2170 = vtanh.pop %v2083
      %v2171 = vtanh.pop %v2085
      %v2172 = vtanh.pop %v2134
      %v2173 = vmul.f32 %v2152, %v2170
      %v2174 = vmul.f32 %v2153, %v2171
      %v2175 = vmul.f32 %v2154, %v2172
      %v2176 = vadd.f32 %v2167, %v2173
      %v2177 = vadd.f32 %v2168, %v2174
      %v2178 = vadd.f32 %v2169, %v2175
      %v2179 = vmul.f32 %v2176, %v832
      %v2180 = vmul.f32 %v2177, %v836
      %v2181 = vmul.f32 %v2178, %v840
      %v2182 = vmul.f32 %v2087, 0.5
      %v2183 = vmul.f32 %v2089, 0.5
      %v2184 = vmul.f32 %v2137, 0.5
      %v2185 = vtanh.pop %v2182
      %v2186 = vtanh.pop %v2183
      %v2187 = vtanh.pop %v2184
      %v2188 = vmul.f32 %v2185, 0.5
      %v2189 = vmul.f32 %v2186, 0.5
      %v2190 = vmul.f32 %v2187, 0.5
      %v2191 = vadd.f32 %v2188, 0.5
      %v2192 = vadd.f32 %v2189, 0.5
      %v2193 = vadd.f32 %v2190, 0.5
      %v2194 = vtanh.pop %v2179
      %v2195 = vtanh.pop %v2180
      %v2196 = vtanh.pop %v2181
      %v2197 = vmul.f32 %v2191, %v2194
      %v2198 = vmul.f32 %v2192, %v2195
      %v2199 = vmul.f32 %v2193, %v2196
      %v2200 = vmul.f32 %v2197, %v832
      %v2201 = vmul.f32 %v2198, %v836
      %v2202 = vmul.f32 %v2199, %v840
      %2203 = vst [vmem:[#allocation5] sm:$0xff] %v2179
      %2204 = vst [vmem:[#allocation5 + $0x8] sm:$0xff] %v2180
      %2205 = vst [vmem:[#allocation5 + $0x10] sm:$0xff] %v2181
      %s2206 = scalar_lea.vmem %s286, 24
      %2207 = vst [vmem:[%s2206] sm:$0xff] %v2200
      %2208 = vst [vmem:[%s2206 + $0x8] sm:$0xff] %v2201
      %2209 = vst [vmem:[%s2206 + $0x10] sm:$0xff] %v2202
      %2210 = vst [vmem:[%s291] sm:$0xff] %v2179
      %2211 = vst [vmem:[%s291 + $0x8] sm:$0xff] %v2180
      %2212 = vst [vmem:[%s291 + $0x10] sm:$0xff] %v2181
      %p2213 = scmp.lt.s32.totalorder %s19, 1
      %s2214 = scalar_select %p2213, %s19, 1
      %s2215 = smul.addr %s2214, 6
      %s2216 = smul.addr %s2215, 8
      %s2217 = scalar_lea.vmem %s6, %s2216
      %p2218 = scmp.lt.s32.totalorder %s19, 1
      %s2219 = scalar_select %p2218, %s19, 1
      %s2220 = smul.addr %s2219, 3
      %s2221 = smul.addr %s2220, 8
      %s2222 = scalar_lea.vmem %s7, %s2221
      // Predicated region
      $region45: #{_conv_lstm_forward_impl.1} parent=43 // pred_check
        %p2223 = pneg %p168
      $region46: #{_conv_lstm_forward_impl.1} parent=43 // pred_check_branch
        %2225 = sbr.rel (%p2223) target = $region48
      $region47: #{_conv_lstm_forward_impl.1} parent=43 // pred_region
        _
      $region48: #{_conv_lstm_forward_impl.1} parent=43 // pred_fallthru
        _
      // Predicated region
      $region49: #{_conv_lstm_forward_impl.1} parent=43 // pred_check
        %p2226 = pneg %p194
      $region50: #{_conv_lstm_forward_impl.1} parent=43 // pred_check_branch
        %2228 = sbr.rel (%p2226) target = $region52
      $region51: #{_conv_lstm_forward_impl.1} parent=43 // pred_region
        _
      $region52: #{_conv_lstm_forward_impl.1} parent=43 // pred_fallthru
        _
    $region44: #{_conv_lstm_forward_impl.1} parent=5 // pred_fallthru
      _
    %p2229 = scmp.le.s32.totalorder 2, %s14
    // Predicated region
    $region53: #{_conv_lstm_forward_impl.1} parent=5 // pred_check
      %p2230 = pneg %p2229
    $region54: #{_conv_lstm_forward_impl.1} parent=5 // pred_check_branch
      %2232 = sbr.rel (%p2230) target = $region56
    $region55: #{_conv_lstm_forward_impl.1} parent=5 // pred_region
      %s2233 = ssub.s32 %s14, 2
      // Predicated region
      $region57: #{_conv_lstm_forward_impl.1} parent=55 // pred_check
        %p2234 = pneg %p174
      $region58: #{_conv_lstm_forward_impl.1} parent=55 // pred_check_branch
        %2236 = sbr.rel (%p2234) target = $region60
      $region59: #{_conv_lstm_forward_impl.1} parent=55 // pred_region
        %p2237 = scmp.lt.s32.totalorder %s20, 1
        %s2238 = scalar_select %p2237, %s20, 1
        %s2239 = smul.addr %s2238, 6
        %s2240 = smul.addr %s2239, 8
        %s2241 = scalar_lea.vmem %s6, %s2240
      $region60: #{_conv_lstm_forward_impl.1} parent=55 // pred_fallthru
        _
      // Predicated region
      $region61: #{_conv_lstm_forward_impl.1} parent=55 // pred_check
        %p2242 = pneg %p200
      $region62: #{_conv_lstm_forward_impl.1} parent=55 // pred_check_branch
        %2244 = sbr.rel (%p2242) target = $region64
      $region63: #{_conv_lstm_forward_impl.1} parent=55 // pred_region
        %p2245 = scmp.lt.s32.totalorder %s20, 1
        %s2246 = scalar_select %p2245, %s20, 1
        %s2247 = smul.addr %s2246, 3
        %s2248 = smul.addr %s2247, 8
        %s2249 = scalar_lea.vmem %s7, %s2248
      $region64: #{_conv_lstm_forward_impl.1} parent=55 // pred_fallthru
        _
    $region56: #{_conv_lstm_forward_impl.1} parent=5 // pred_fallthru
      _
  $region6: #{_conv_lstm_forward_impl.1} parent=0 // loop_footer
    %s18 = sadd.s32 1, %s14
  $region7: #{_conv_lstm_forward_impl.1} parent=0 // loop_footer_branch
    %13 = sbr.rel target = $region3
  $region8: #{_conv_lstm_forward_impl.1} parent=0 // loop_exit
    _

</llo_original>
